<compile_context>
chip_gen: v7x
topology: tpu7x:2x2x1
jax: 0.10.0
libtpu: 0.0.40
codegen_flags: <defaults>
</compile_context>

<pallas_src>
import functools

import jax
import jax.numpy as jnp
from jax.experimental import pallas as pl
from jax.experimental.pallas import tpu as pltpu


def _bottleneck_kernel(H, W, Cin, Cmid, Cout,
                       x_ref, w1_ref, b1_ref,
                       w2_ref, b2_ref,
                       w3_ref, b3_ref,
                       out_ref, pad_ref):
    f32 = jnp.float32
    bf16 = jnp.bfloat16

    # ---- conv1 (1x1) + folded BN1 + ReLU : channel matmul on the MXU ----
    x1 = x_ref[...].reshape(H * W, Cin)                     # bf16 activations
    h1 = jnp.dot(x1, w1_ref[...], preferred_element_type=f32)
    h1 = jnp.maximum(h1 + b1_ref[...], 0.0)

    # ---- conv2 (3x3, pad=1, stride=1) + folded BN2 + ReLU ----
    # Write the zero halo border and the interior (each element once/step).
    zrow = jnp.zeros((1, W + 2, Cmid), bf16)
    zcol = jnp.zeros((H, 1, Cmid), bf16)
    pad_ref[0:1, :, :] = zrow
    pad_ref[H + 1:H + 2, :, :] = zrow
    pad_ref[1:1 + H, 0:1, :] = zcol
    pad_ref[1:1 + H, W + 1:W + 2, :] = zcol
    pad_ref[1:1 + H, 1:1 + W, :] = h1.reshape(H, W, Cmid).astype(bf16)

    # 9 per-tap bf16 matmuls accumulated in f32 (no im2col concatenate,
    # no 9*Cmid-wide intermediate).  Weight rows are (dy, dx, cin) ordered.
    acc = None
    for dy in range(3):
        for dx in range(3):
            t = dy * 3 + dx
            patch = pad_ref[dy:dy + H, dx:dx + W, :].reshape(H * W, Cmid)
            part = jnp.dot(patch, w2_ref[t * Cmid:(t + 1) * Cmid, :],
                           preferred_element_type=f32)
            acc = part if acc is None else acc + part
    h2 = jnp.maximum(acc + b2_ref[...], 0.0)

    # ---- conv3 (1x1) + folded BN3 + residual add + ReLU ----
    h3 = jnp.dot(h2.astype(bf16), w3_ref[...], preferred_element_type=f32)
    h3 = h3 + b3_ref[...]
    res = x_ref[...].astype(f32)                            # re-read; Cout == Cin
    out = jnp.maximum(h3.reshape(1, H, W, Cout) + res, 0.0)
    out_ref[...] = out.astype(out_ref.dtype)


def bottleneck_forward(x_nhwc, params):
    """x_nhwc: (N, H, W, Cin) in bf16. Returns (N, H, W, Cout) in bf16."""
    w1, b1, w2col, b2, w3, b3 = params
    N, H, W, Cin = x_nhwc.shape
    Cmid = w1.shape[1]
    Cout = w3.shape[1]
    assert Cout == Cin, "residual add requires inplanes == planes * 4"

    kernel = functools.partial(_bottleneck_kernel, H, W, Cin, Cmid, Cout)

    def full_spec(shape):
        zeros = (0,) * len(shape)
        return pl.BlockSpec(shape, lambda n, z=zeros: z)

    return pl.pallas_call(
        kernel,
        out_shape=jax.ShapeDtypeStruct((N, H, W, Cout), jnp.bfloat16),
        grid_spec=pltpu.PrefetchScalarGridSpec(
            num_scalar_prefetch=0,
            grid=(N,),
            in_specs=[
                pl.BlockSpec((1, H, W, Cin), lambda n: (n, 0, 0, 0)),
                full_spec(w1.shape), full_spec(b1.shape),
                full_spec(w2col.shape), full_spec(b2.shape),
                full_spec(w3.shape), full_spec(b3.shape),
            ],
            out_specs=pl.BlockSpec((1, H, W, Cout), lambda n: (n, 0, 0, 0)),
            scratch_shapes=[pltpu.VMEM((H + 2, W + 2, Cmid), jnp.bfloat16)],
        ),
        compiler_params=pltpu.CompilerParams(
            dimension_semantics=("parallel",)),
    )(x_nhwc, w1, b1, w2col, b2, w3, b3)


def make_params(key, inplanes, planes):
    """Synthetic weights. BN (inference mode) is folded into the convs:
       w_folded[..., c_out] = w[..., c_out] * gamma/sqrt(var+eps),
       bias = beta - mean * scale.  Folded weights are stored in bf16 (MXU
       operands); biases stay f32.  w2 is reshaped matmul-ready (9*Cmid, Cmid)
       with (dy, dx, cin) row ordering (HWIO flatten)."""
    Cout = planes * 4
    eps = 1e-5
    ks = jax.random.split(key, 6)

    def bn(k, c):
        kg, kb, km, kv = jax.random.split(k, 4)
        gamma = 1.0 + 0.1 * jax.random.normal(kg, (c,), jnp.float32)
        beta = 0.1 * jax.random.normal(kb, (c,), jnp.float32)
        mean = 0.1 * jax.random.normal(km, (c,), jnp.float32)
        var = 1.0 + 0.1 * jnp.abs(jax.random.normal(kv, (c,), jnp.float32))
        scale = gamma * jax.lax.rsqrt(var + eps)
        bias = beta - mean * scale
        return scale, bias

    w1 = 0.1 * jax.random.normal(ks[0], (inplanes, planes), jnp.float32)
    w2 = 0.1 * jax.random.normal(ks[1], (3, 3, planes, planes), jnp.float32)  # HWIO
    w3 = 0.1 * jax.random.normal(ks[2], (planes, Cout), jnp.float32)
    s1, b1 = bn(ks[3], planes)
    s2, b2 = bn(ks[4], planes)
    s3, b3 = bn(ks[5], Cout)

    w1f = (w1 * s1[None, :]).astype(jnp.bfloat16)
    w2f = (w2 * s2[None, None, None, :]).astype(jnp.bfloat16)
    w3f = (w3 * s3[None, :]).astype(jnp.bfloat16)
    w2col = w2f.reshape(9 * planes, planes)

    kernel_params = (w1f, b1.reshape(1, planes),
                     w2col, b2.reshape(1, planes),
                     w3f, b3.reshape(1, Cout))
    ref_params = (w1f, b1, w2f, b2, w3f, b3)
    return kernel_params, ref_params


def reference_forward(x_nhwc_bf16, ref_params):
    """Pure-JAX reference using the same folded bf16 weights / f32 accumulation
       (inference-mode BN), for correctness check.  Residual add in f32."""
    w1f, b1, w2f, b2, w3f, b3 = ref_params
    f32, bf16 = jnp.float32, jnp.bfloat16
    x = x_nhwc_bf16
    h = jnp.einsum('nhwc,cd->nhwd', x, w1f, preferred_element_type=f32)
    h = jnp.maximum(h + b1, 0.0)
    h = jax.lax.conv_general_dilated(
        h.astype(bf16), w2f, window_strides=(1, 1), padding='SAME',
        dimension_numbers=('NHWC', 'HWIO', 'NHWC'),
        preferred_element_type=f32)
    h = jnp.maximum(h + b2, 0.0)
    h = jnp.einsum('nhwc,cd->nhwd', h.astype(bf16), w3f,
                   preferred_element_type=f32)
    h = h + b3
    return jnp.maximum(h + x.astype(f32), 0.0)


if __name__ == "__main__":
    # Small but layout-realistic bottleneck (ResNet conv2_x-style channels):
    # inplanes = 4 * planes, stride=1, downsample=None.  N=4 so the batch grid
    # gives the auto-pipeline >= 4 steps per core.
    N, inplanes, planes, Hs, Ws = 4, 256, 64, 16, 16
    key = jax.random.PRNGKey(0)
    kx, kp = jax.random.split(key)

    x_nchw = jax.random.normal(kx, (N, inplanes, Hs, Ws), jnp.float32)
    # NCHW -> NHWC, bf16 activation I/O (kernel is HBM-bound; halves traffic).
    x_nhwc = jnp.transpose(x_nchw, (0, 2, 3, 1)).astype(jnp.bfloat16)
    kernel_params, ref_params = make_params(kp, inplanes, planes)

    out = bottleneck_forward(x_nhwc, kernel_params)
    out = jax.block_until_ready(out)

    ref = reference_forward(x_nhwc, ref_params)
    assert out.shape == (N, Hs, Ws, planes * 4)
    assert out.dtype == jnp.bfloat16
    max_err = float(jnp.max(jnp.abs(out.astype(jnp.float32) - ref)))
    # Tolerance widened vs the f32-output version: output is bf16 (inference).
    assert jnp.allclose(out.astype(jnp.float32), ref, rtol=3e-2, atol=3e-2), (
        f"mismatch vs reference, max abs err = {max_err}")
    print("KERNEL_OK")
</pallas_src>

<mosaic_0001>
module attributes {stable_mosaic.version = 11 : i64} {
  func.func @_bottleneck_kernel(%arg0: i32, %arg1: memref<1x16x16x256xbf16, #tpu.memory_space<vmem>>, %arg2: memref<256x64xbf16, #tpu.memory_space<vmem>>, %arg3: memref<1x64xf32, #tpu.memory_space<vmem>>, %arg4: memref<576x64xbf16, #tpu.memory_space<vmem>>, %arg5: memref<1x64xf32, #tpu.memory_space<vmem>>, %arg6: memref<64x256xbf16, #tpu.memory_space<vmem>>, %arg7: memref<1x256xf32, #tpu.memory_space<vmem>>, %arg8: memref<1x16x16x256xbf16, #tpu.memory_space<vmem>>, %arg9: memref<18x18x64xbf16, #tpu.memory_space<vmem>>) attributes {dimension_semantics = [#tpu.dimension_semantics<parallel>], iteration_bounds = array<i64: 4>, scalar_prefetch = 0 : i64, scratch_operands = 1 : i64, tpu.core_type = #tpu.core_type<tc>, window_params = [{transform_indices = @transform_0, window_bounds = array<i64: 1, 16, 16, 256>}, {pipeline_mode = #tpu.pipeline_mode<synchronous>, transform_indices = @transform_1, window_bounds = array<i64: 256, 64>}, {pipeline_mode = #tpu.pipeline_mode<synchronous>, transform_indices = @transform_2, window_bounds = array<i64: 1, 64>}, {pipeline_mode = #tpu.pipeline_mode<synchronous>, transform_indices = @transform_3, window_bounds = array<i64: 576, 64>}, {pipeline_mode = #tpu.pipeline_mode<synchronous>, transform_indices = @transform_4, window_bounds = array<i64: 1, 64>}, {pipeline_mode = #tpu.pipeline_mode<synchronous>, transform_indices = @transform_5, window_bounds = array<i64: 64, 256>}, {pipeline_mode = #tpu.pipeline_mode<synchronous>, transform_indices = @transform_6, window_bounds = array<i64: 1, 256>}, {transform_indices = @transform_7, window_bounds = array<i64: 1, 16, 16, 256>}]} {
    %c0 = arith.constant 0 : index
    %c0_0 = arith.constant 0 : index
    %c0_1 = arith.constant 0 : index
    %c0_2 = arith.constant 0 : index
    %0 = vector.load %arg1[%c0, %c0_0, %c0_1, %c0_2] : memref<1x16x16x256xbf16, #tpu.memory_space<vmem>>, vector<1x16x16x256xbf16>
    %1 = vector.shape_cast %0 : vector<1x16x16x256xbf16> to vector<256x256xbf16>
    %c0_3 = arith.constant 0 : index
    %c0_4 = arith.constant 0 : index
    %2 = vector.load %arg2[%c0_3, %c0_4] : memref<256x64xbf16, #tpu.memory_space<vmem>>, vector<256x64xbf16>
    %cst = arith.constant dense<0.000000e+00> : vector<256x64xf32>
    %3 = tpu.matmul %1, %2, %cst {dimension_numbers = #tpu.dot_dimension_numbers<[1], [0], [0], [1], [0, 0, 1, 1], [], []>} : vector<256x256xbf16>, vector<256x64xbf16>, vector<256x64xf32> -> vector<256x64xf32>
    %c0_5 = arith.constant 0 : index
    %c0_6 = arith.constant 0 : index
    %4 = vector.load %arg3[%c0_5, %c0_6] : memref<1x64xf32, #tpu.memory_space<vmem>>, vector<1x64xf32>
    %5 = vector.broadcast %4 : vector<1x64xf32> to vector<256x64xf32>
    %6 = arith.addf %3, %5 : vector<256x64xf32>
    %cst_7 = arith.constant 0.000000e+00 : f32
    %7 = vector.broadcast %cst_7 : f32 to vector<256x64xf32>
    %8 = arith.maximumf %6, %7 : vector<256x64xf32>
    %cst_8 = arith.constant 0.000000e+00 : bf16
    %9 = vector.broadcast %cst_8 : bf16 to vector<1x18x64xbf16>
    %cst_9 = arith.constant 0.000000e+00 : bf16
    %10 = vector.broadcast %cst_9 : bf16 to vector<16x1x64xbf16>
    %c0_10 = arith.constant 0 : index
    %c0_11 = arith.constant 0 : index
    %c0_12 = arith.constant 0 : index
    %11 = vector.load %arg9[%c0_10, %c0_11, %c0_12] : memref<18x18x64xbf16, #tpu.memory_space<vmem>>, vector<1x18x64xbf16>
    tpu.vector_store %arg9[%c0_10, %c0_11, %c0_12], %9 {strides = array<i32>} : memref<18x18x64xbf16, #tpu.memory_space<vmem>>, vector<1x18x64xbf16>,
    %c17 = arith.constant 17 : index
    %c0_13 = arith.constant 0 : index
    %c0_14 = arith.constant 0 : index
    %12 = vector.load %arg9[%c17, %c0_13, %c0_14] : memref<18x18x64xbf16, #tpu.memory_space<vmem>>, vector<1x18x64xbf16>
    tpu.vector_store %arg9[%c17, %c0_13, %c0_14], %9 {strides = array<i32>} : memref<18x18x64xbf16, #tpu.memory_space<vmem>>, vector<1x18x64xbf16>,
    %c1 = arith.constant 1 : index
    %c0_15 = arith.constant 0 : index
    %c0_16 = arith.constant 0 : index
    %13 = vector.load %arg9[%c1, %c0_15, %c0_16] : memref<18x18x64xbf16, #tpu.memory_space<vmem>>, vector<16x1x64xbf16>
    tpu.vector_store %arg9[%c1, %c0_15, %c0_16], %10 {strides = array<i32>} : memref<18x18x64xbf16, #tpu.memory_space<vmem>>, vector<16x1x64xbf16>,
    %c1_17 = arith.constant 1 : index
    %c17_18 = arith.constant 17 : index
    %c0_19 = arith.constant 0 : index
    %14 = vector.load %arg9[%c1_17, %c17_18, %c0_19] : memref<18x18x64xbf16, #tpu.memory_space<vmem>>, vector<16x1x64xbf16>
    tpu.vector_store %arg9[%c1_17, %c17_18, %c0_19], %10 {strides = array<i32>} : memref<18x18x64xbf16, #tpu.memory_space<vmem>>, vector<16x1x64xbf16>,
    %15 = vector.shape_cast %8 : vector<256x64xf32> to vector<16x16x64xf32>
    %16 = arith.truncf %15 : vector<16x16x64xf32> to vector<16x16x64xbf16>
    %c1_20 = arith.constant 1 : index
    %c1_21 = arith.constant 1 : index
    %c0_22 = arith.constant 0 : index
    %17 = vector.load %arg9[%c1_20, %c1_21, %c0_22] : memref<18x18x64xbf16, #tpu.memory_space<vmem>>, vector<16x16x64xbf16>
    tpu.vector_store %arg9[%c1_20, %c1_21, %c0_22], %16 {strides = array<i32>} : memref<18x18x64xbf16, #tpu.memory_space<vmem>>, vector<16x16x64xbf16>,
    %c0_23 = arith.constant 0 : index
    %c0_24 = arith.constant 0 : index
    %c0_25 = arith.constant 0 : index
    %18 = vector.load %arg9[%c0_23, %c0_24, %c0_25] : memref<18x18x64xbf16, #tpu.memory_space<vmem>>, vector<16x16x64xbf16>
    %19 = vector.shape_cast %18 : vector<16x16x64xbf16> to vector<256x64xbf16>
    %c0_26 = arith.constant 0 : index
    %c0_27 = arith.constant 0 : index
    %20 = vector.load %arg4[%c0_26, %c0_27] : memref<576x64xbf16, #tpu.memory_space<vmem>>, vector<64x64xbf16>
    %cst_28 = arith.constant dense<0.000000e+00> : vector<256x64xf32>
    %21 = tpu.matmul %19, %20, %cst_28 {dimension_numbers = #tpu.dot_dimension_numbers<[1], [0], [0], [1], [0, 0, 1, 1], [], []>} : vector<256x64xbf16>, vector<64x64xbf16>, vector<256x64xf32> -> vector<256x64xf32>
    %c0_29 = arith.constant 0 : index
    %c1_30 = arith.constant 1 : index
    %c0_31 = arith.constant 0 : index
    %22 = vector.load %arg9[%c0_29, %c1_30, %c0_31] : memref<18x18x64xbf16, #tpu.memory_space<vmem>>, vector<16x16x64xbf16>
    %23 = vector.shape_cast %22 : vector<16x16x64xbf16> to vector<256x64xbf16>
    %c64 = arith.constant 64 : index
    %c0_32 = arith.constant 0 : index
    %24 = vector.load %arg4[%c64, %c0_32] : memref<576x64xbf16, #tpu.memory_space<vmem>>, vector<64x64xbf16>
    %cst_33 = arith.constant dense<0.000000e+00> : vector<256x64xf32>
    %25 = tpu.matmul %23, %24, %cst_33 {dimension_numbers = #tpu.dot_dimension_numbers<[1], [0], [0], [1], [0, 0, 1, 1], [], []>} : vector<256x64xbf16>, vector<64x64xbf16>, vector<256x64xf32> -> vector<256x64xf32>
    %26 = arith.addf %21, %25 : vector<256x64xf32>
    %c0_34 = arith.constant 0 : index
    %c2 = arith.constant 2 : index
    %c0_35 = arith.constant 0 : index
    %27 = vector.load %arg9[%c0_34, %c2, %c0_35] : memref<18x18x64xbf16, #tpu.memory_space<vmem>>, vector<16x16x64xbf16>
    %28 = vector.shape_cast %27 : vector<16x16x64xbf16> to vector<256x64xbf16>
    %c128 = arith.constant 128 : index
    %c0_36 = arith.constant 0 : index
    %29 = vector.load %arg4[%c128, %c0_36] : memref<576x64xbf16, #tpu.memory_space<vmem>>, vector<64x64xbf16>
    %cst_37 = arith.constant dense<0.000000e+00> : vector<256x64xf32>
    %30 = tpu.matmul %28, %29, %cst_37 {dimension_numbers = #tpu.dot_dimension_numbers<[1], [0], [0], [1], [0, 0, 1, 1], [], []>} : vector<256x64xbf16>, vector<64x64xbf16>, vector<256x64xf32> -> vector<256x64xf32>
    %31 = arith.addf %26, %30 : vector<256x64xf32>
    %c1_38 = arith.constant 1 : index
    %c0_39 = arith.constant 0 : index
    %c0_40 = arith.constant 0 : index
    %32 = vector.load %arg9[%c1_38, %c0_39, %c0_40] : memref<18x18x64xbf16, #tpu.memory_space<vmem>>, vector<16x16x64xbf16>
    %33 = vector.shape_cast %32 : vector<16x16x64xbf16> to vector<256x64xbf16>
    %c192 = arith.constant 192 : index
    %c0_41 = arith.constant 0 : index
    %34 = vector.load %arg4[%c192, %c0_41] : memref<576x64xbf16, #tpu.memory_space<vmem>>, vector<64x64xbf16>
    %cst_42 = arith.constant dense<0.000000e+00> : vector<256x64xf32>
    %35 = tpu.matmul %33, %34, %cst_42 {dimension_numbers = #tpu.dot_dimension_numbers<[1], [0], [0], [1], [0, 0, 1, 1], [], []>} : vector<256x64xbf16>, vector<64x64xbf16>, vector<256x64xf32> -> vector<256x64xf32>
    %36 = arith.addf %31, %35 : vector<256x64xf32>
    %c1_43 = arith.constant 1 : index
    %c1_44 = arith.constant 1 : index
    %c0_45 = arith.constant 0 : index
    %37 = vector.load %arg9[%c1_43, %c1_44, %c0_45] : memref<18x18x64xbf16, #tpu.memory_space<vmem>>, vector<16x16x64xbf16>
    %38 = vector.shape_cast %37 : vector<16x16x64xbf16> to vector<256x64xbf16>
    %c256 = arith.constant 256 : index
    %c0_46 = arith.constant 0 : index
    %39 = vector.load %arg4[%c256, %c0_46] : memref<576x64xbf16, #tpu.memory_space<vmem>>, vector<64x64xbf16>
    %cst_47 = arith.constant dense<0.000000e+00> : vector<256x64xf32>
    %40 = tpu.matmul %38, %39, %cst_47 {dimension_numbers = #tpu.dot_dimension_numbers<[1], [0], [0], [1], [0, 0, 1, 1], [], []>} : vector<256x64xbf16>, vector<64x64xbf16>, vector<256x64xf32> -> vector<256x64xf32>
    %41 = arith.addf %36, %40 : vector<256x64xf32>
    %c1_48 = arith.constant 1 : index
    %c2_49 = arith.constant 2 : index
    %c0_50 = arith.constant 0 : index
    %42 = vector.load %arg9[%c1_48, %c2_49, %c0_50] : memref<18x18x64xbf16, #tpu.memory_space<vmem>>, vector<16x16x64xbf16>
    %43 = vector.shape_cast %42 : vector<16x16x64xbf16> to vector<256x64xbf16>
    %c320 = arith.constant 320 : index
    %c0_51 = arith.constant 0 : index
    %44 = vector.load %arg4[%c320, %c0_51] : memref<576x64xbf16, #tpu.memory_space<vmem>>, vector<64x64xbf16>
    %cst_52 = arith.constant dense<0.000000e+00> : vector<256x64xf32>
    %45 = tpu.matmul %43, %44, %cst_52 {dimension_numbers = #tpu.dot_dimension_numbers<[1], [0], [0], [1], [0, 0, 1, 1], [], []>} : vector<256x64xbf16>, vector<64x64xbf16>, vector<256x64xf32> -> vector<256x64xf32>
    %46 = arith.addf %41, %45 : vector<256x64xf32>
    %c2_53 = arith.constant 2 : index
    %c0_54 = arith.constant 0 : index
    %c0_55 = arith.constant 0 : index
    %47 = vector.load %arg9[%c2_53, %c0_54, %c0_55] : memref<18x18x64xbf16, #tpu.memory_space<vmem>>, vector<16x16x64xbf16>
    %48 = vector.shape_cast %47 : vector<16x16x64xbf16> to vector<256x64xbf16>
    %c384 = arith.constant 384 : index
    %c0_56 = arith.constant 0 : index
    %49 = vector.load %arg4[%c384, %c0_56] : memref<576x64xbf16, #tpu.memory_space<vmem>>, vector<64x64xbf16>
    %cst_57 = arith.constant dense<0.000000e+00> : vector<256x64xf32>
    %50 = tpu.matmul %48, %49, %cst_57 {dimension_numbers = #tpu.dot_dimension_numbers<[1], [0], [0], [1], [0, 0, 1, 1], [], []>} : vector<256x64xbf16>, vector<64x64xbf16>, vector<256x64xf32> -> vector<256x64xf32>
    %51 = arith.addf %46, %50 : vector<256x64xf32>
    %c2_58 = arith.constant 2 : index
    %c1_59 = arith.constant 1 : index
    %c0_60 = arith.constant 0 : index
    %52 = vector.load %arg9[%c2_58, %c1_59, %c0_60] : memref<18x18x64xbf16, #tpu.memory_space<vmem>>, vector<16x16x64xbf16>
    %53 = vector.shape_cast %52 : vector<16x16x64xbf16> to vector<256x64xbf16>
    %c448 = arith.constant 448 : index
    %c0_61 = arith.constant 0 : index
    %54 = vector.load %arg4[%c448, %c0_61] : memref<576x64xbf16, #tpu.memory_space<vmem>>, vector<64x64xbf16>
    %cst_62 = arith.constant dense<0.000000e+00> : vector<256x64xf32>
    %55 = tpu.matmul %53, %54, %cst_62 {dimension_numbers = #tpu.dot_dimension_numbers<[1], [0], [0], [1], [0, 0, 1, 1], [], []>} : vector<256x64xbf16>, vector<64x64xbf16>, vector<256x64xf32> -> vector<256x64xf32>
    %56 = arith.addf %51, %55 : vector<256x64xf32>
    %c2_63 = arith.constant 2 : index
    %c2_64 = arith.constant 2 : index
    %c0_65 = arith.constant 0 : index
    %57 = vector.load %arg9[%c2_63, %c2_64, %c0_65] : memref<18x18x64xbf16, #tpu.memory_space<vmem>>, vector<16x16x64xbf16>
    %58 = vector.shape_cast %57 : vector<16x16x64xbf16> to vector<256x64xbf16>
    %c512 = arith.constant 512 : index
    %c0_66 = arith.constant 0 : index
    %59 = vector.load %arg4[%c512, %c0_66] : memref<576x64xbf16, #tpu.memory_space<vmem>>, vector<64x64xbf16>
    %cst_67 = arith.constant dense<0.000000e+00> : vector<256x64xf32>
    %60 = tpu.matmul %58, %59, %cst_67 {dimension_numbers = #tpu.dot_dimension_numbers<[1], [0], [0], [1], [0, 0, 1, 1], [], []>} : vector<256x64xbf16>, vector<64x64xbf16>, vector<256x64xf32> -> vector<256x64xf32>
    %61 = arith.addf %56, %60 : vector<256x64xf32>
    %c0_68 = arith.constant 0 : index
    %c0_69 = arith.constant 0 : index
    %62 = vector.load %arg5[%c0_68, %c0_69] : memref<1x64xf32, #tpu.memory_space<vmem>>, vector<1x64xf32>
    %63 = vector.broadcast %62 : vector<1x64xf32> to vector<256x64xf32>
    %64 = arith.addf %61, %63 : vector<256x64xf32>
    %cst_70 = arith.constant 0.000000e+00 : f32
    %65 = vector.broadcast %cst_70 : f32 to vector<256x64xf32>
    %66 = arith.maximumf %64, %65 : vector<256x64xf32>
    %67 = arith.truncf %66 : vector<256x64xf32> to vector<256x64xbf16>
    %c0_71 = arith.constant 0 : index
    %c0_72 = arith.constant 0 : index
    %68 = vector.load %arg6[%c0_71, %c0_72] : memref<64x256xbf16, #tpu.memory_space<vmem>>, vector<64x256xbf16>
    %cst_73 = arith.constant dense<0.000000e+00> : vector<256x256xf32>
    %69 = tpu.matmul %67, %68, %cst_73 {dimension_numbers = #tpu.dot_dimension_numbers<[1], [0], [0], [1], [0, 0, 1, 1], [], []>} : vector<256x64xbf16>, vector<64x256xbf16>, vector<256x256xf32> -> vector<256x256xf32>
    %c0_74 = arith.constant 0 : index
    %c0_75 = arith.constant 0 : index
    %70 = vector.load %arg7[%c0_74, %c0_75] : memref<1x256xf32, #tpu.memory_space<vmem>>, vector<1x256xf32>
    %71 = vector.broadcast %70 : vector<1x256xf32> to vector<256x256xf32>
    %72 = arith.addf %69, %71 : vector<256x256xf32>
    %c0_76 = arith.constant 0 : index
    %c0_77 = arith.constant 0 : index
    %c0_78 = arith.constant 0 : index
    %c0_79 = arith.constant 0 : index
    %73 = vector.load %arg1[%c0_76, %c0_77, %c0_78, %c0_79] : memref<1x16x16x256xbf16, #tpu.memory_space<vmem>>, vector<1x16x16x256xbf16>
    %74 = arith.extf %73 : vector<1x16x16x256xbf16> to vector<1x16x16x256xf32>
    %75 = vector.shape_cast %72 : vector<256x256xf32> to vector<1x16x16x256xf32>
    %76 = arith.addf %75, %74 : vector<1x16x16x256xf32>
    %cst_80 = arith.constant 0.000000e+00 : f32
    %77 = vector.broadcast %cst_80 : f32 to vector<1x16x16x256xf32>
    %78 = arith.maximumf %76, %77 : vector<1x16x16x256xf32>
    %79 = arith.truncf %78 : vector<1x16x16x256xf32> to vector<1x16x16x256xbf16>
    %c0_81 = arith.constant 0 : index
    %c0_82 = arith.constant 0 : index
    %c0_83 = arith.constant 0 : index
    %c0_84 = arith.constant 0 : index
    %80 = vector.load %arg8[%c0_81, %c0_82, %c0_83, %c0_84] : memref<1x16x16x256xbf16, #tpu.memory_space<vmem>>, vector<1x16x16x256xbf16>
    tpu.vector_store %arg8[%c0_81, %c0_82, %c0_83, %c0_84], %79 {strides = array<i32>} : memref<1x16x16x256xbf16, #tpu.memory_space<vmem>>, vector<1x16x16x256xbf16>,
    return
  }
  func.func @transform_0(%arg0: i32) -> (i32, i32, i32, i32) {
    %c0_i32 = arith.constant 0 : i32
    %c0_i32_0 = arith.constant 0 : i32
    %c0_i32_1 = arith.constant 0 : i32
    %c0_i32_2 = arith.constant 0 : i32
    return %arg0, %c0_i32, %c0_i32_0, %c0_i32_1 : i32, i32, i32, i32
  }
  func.func @transform_1(%arg0: i32) -> (i32, i32) {
    %c0_i32 = arith.constant 0 : i32
    %c0_i32_0 = arith.constant 0 : i32
    %c0_i32_1 = arith.constant 0 : i32
    return %c0_i32, %c0_i32_0 : i32, i32
  }
  func.func @transform_2(%arg0: i32) -> (i32, i32) {
    %c0_i32 = arith.constant 0 : i32
    %c0_i32_0 = arith.constant 0 : i32
    %c0_i32_1 = arith.constant 0 : i32
    return %c0_i32, %c0_i32_0 : i32, i32
  }
  func.func @transform_3(%arg0: i32) -> (i32, i32) {
    %c0_i32 = arith.constant 0 : i32
    %c0_i32_0 = arith.constant 0 : i32
    %c0_i32_1 = arith.constant 0 : i32
    return %c0_i32, %c0_i32_0 : i32, i32
  }
  func.func @transform_4(%arg0: i32) -> (i32, i32) {
    %c0_i32 = arith.constant 0 : i32
    %c0_i32_0 = arith.constant 0 : i32
    %c0_i32_1 = arith.constant 0 : i32
    return %c0_i32, %c0_i32_0 : i32, i32
  }
  func.func @transform_5(%arg0: i32) -> (i32, i32) {
    %c0_i32 = arith.constant 0 : i32
    %c0_i32_0 = arith.constant 0 : i32
    %c0_i32_1 = arith.constant 0 : i32
    return %c0_i32, %c0_i32_0 : i32, i32
  }
  func.func @transform_6(%arg0: i32) -> (i32, i32) {
    %c0_i32 = arith.constant 0 : i32
    %c0_i32_0 = arith.constant 0 : i32
    %c0_i32_1 = arith.constant 0 : i32
    return %c0_i32, %c0_i32_0 : i32, i32
  }
  func.func @transform_7(%arg0: i32) -> (i32, i32, i32, i32) {
    %c0_i32 = arith.constant 0 : i32
    %c0_i32_0 = arith.constant 0 : i32
    %c0_i32_1 = arith.constant 0 : i32
    %c0_i32_2 = arith.constant 0 : i32
    return %arg0, %c0_i32, %c0_i32_0, %c0_i32_1 : i32, i32, i32, i32
  }
}

</mosaic_0001>

<llo_original>
// kernel: tpu_custom_call.1
$region0: #{tpu_custom_call.1}
  #allocation0 [shape = 'u32[]', space=smem, size = 0x4, offset = 0x4, fixed_abs, tag = 'smem constant byte address 0x4 - core index']
  #allocation1 [shape = 'u32[144,128]{1,0:T(1,128)}', space=vmem, size = 0x12000, scoped, tag = 'internal scratch']
  #allocation2 [shape = 'bf16[18,18,64]{2,1,0:T(8,128)(2,1)}', space=vmem, size = 0x1b000, scoped, tag = 'scratch operand']
  %s0 = inlined_call_operand.hbm [shape: bf16[4,16,16,256], index: 0, kind: input, shape index: {}]
  %s1 = inlined_call_operand.vmem [shape: bf16[256,64], index: 1, kind: input, shape index: {}]
  %s2 = inlined_call_operand.vmem [shape: f32[1,64], index: 2, kind: input, shape index: {}]
  %s3 = inlined_call_operand.vmem [shape: bf16[576,64], index: 3, kind: input, shape index: {}]
  %s4 = inlined_call_operand.vmem [shape: f32[1,64], index: 4, kind: input, shape index: {}]
  %s5 = inlined_call_operand.vmem [shape: bf16[64,256], index: 5, kind: input, shape index: {}]
  %s6 = inlined_call_operand.vmem [shape: f32[1,256], index: 6, kind: input, shape index: {}]
  %s7 = inlined_call_operand.hbm [shape: bf16[4,16,16,256], index: 7, kind: output, shape index: {}]
  %s8 = sld [smem:[#allocation0]]
  $region65: #{tpu_custom_call.1} parent=0
    _
  %s10 = ssub.s32 1, %s8
  %s11 = scalar_select 0, %s10, %s8
  $region1: #{tpu_custom_call.1} parent=0
    #allocation3 [shape = 'u8[262144]{0}', space=vmem, size = 0x40000, scoped, tag = 'input window, operand 0']
    #allocation4 [shape = 's32[2]{0}', space=sflag, size = 0x8, scoped, tag = 'scoped memory for tpu_custom_call.1']
    #allocation5 [shape = 's32[2]{0}', space=sflag, size = 0x8, scoped, tag = 'scoped memory for tpu_custom_call.1']
    #allocation6 [shape = 'u8[262144]{0}', space=vmem, size = 0x40000, scoped, tag = 'output window, operand 0']
    %12 = vsyncpa [#allocation4], 0
    %s13 = scalar_lea.sflag [#allocation4], 1
    %14 = vsyncpa %s13, 0
    %15 = vsyncpa [#allocation5], 0
    %s16 = scalar_lea.sflag [#allocation5], 1
    %17 = vsyncpa %s16, 0
    loop: start=0, step=1, limit=6
    $region2: #{tpu_custom_call.1} parent=1 // loop_pre_header
      _
    $region3: #{tpu_custom_call.1} parent=1 // loop_header
      %s19 = sphi 0, %s23
      %p20 = scmp.ge.s32.totalorder %s19, 6
      %s29 = sphi 0, %s31
      %s32 = sphi 0, %s29
      %s33 = sphi 0, %s32
      %s49 = sphi 0, %s33
      %s53 = sphi 0, %s53
      %s55 = sphi 0, %s53
      %s56 = sphi 0, %s55
      %s70 = sphi 0, %s56
      %s74 = sphi 0, %s74
      %s76 = sphi 0, %s74
      %s77 = sphi 0, %s76
      %s91 = sphi 0, %s77
      %s95 = sphi 0, %s95
      %s97 = sphi 0, %s95
      %s98 = sphi 0, %s97
      %s112 = sphi 0, %s98
      %s116 = sphi 0, %s116
      %s118 = sphi 0, %s116
      %s119 = sphi 0, %s118
      %s133 = sphi 0, %s119
      %s137 = sphi 0, %s137
      %s139 = sphi 0, %s137
      %s140 = sphi 0, %s139
      %s154 = sphi 0, %s140
      %s158 = sphi 0, %s158
      %s160 = sphi 0, %s158
      %s161 = sphi 0, %s160
      %s175 = sphi 0, %s161
      %s181 = sphi 0, %s183
      %s184 = sphi 0, %s181
      %s185 = sphi 0, %s184
      %s201 = sphi 0, %s185
    $region4: #{tpu_custom_call.1} parent=1 // loop_header_branch
      %22 = sbr.rel (%p20) target = $region8
    $region5: #{tpu_custom_call.1} parent=1 // loop_body
      %s24 = ssub.s32 %s19, 1
      %s25 = ssub.s32 %s19, 2
      %s26 = sadd.s32 %s19, 1
      %s27 = ssub.s32 %s19, %s26
      %p28 = scmp.eq.s32.totalorder %s27, 0
      %s30 = sadd.s32 %s29, 1
      %s31 = scalar_select %p28, %s29, %s30
      %p34 = pneg %p28
      %p35 = scmp.eq.s32.totalorder %s19, 3
      %p36 = por %p34, %p35
      %p37 = scmp.ne.s32.totalorder %s29, %s32
      %p38 = scmp.eq.s32.totalorder %s19, 0
      %p39 = por %p37, %p38
      %p40 = scmp.ne.s32.totalorder %s29, %s32
      %p41 = scmp.eq.s32.totalorder %s24, 3
      %p42 = por %p40, %p41
      %p43 = scmp.ne.s32.totalorder %s32, %s33
      %p44 = scmp.eq.s32.totalorder %s24, 0
      %p45 = por %p43, %p44
      %p46 = scmp.ne.s32.totalorder %s32, %s33
      %p47 = scmp.eq.s32.totalorder %s25, 3
      %p48 = por %p46, %p47
      %p50 = scmp.ne.s32.totalorder %s33, %s49
      %p51 = scmp.eq.s32.totalorder %s25, 0
      %p52 = por %p50, %p51
      %s54 = sadd.s32 %s53, 1
      %p57 = scmp.eq.s32.totalorder %s19, 3
      %p58 = scmp.ne.s32.totalorder %s53, %s55
      %p59 = scmp.eq.s32.totalorder %s19, 0
      %p60 = por %p58, %p59
      %p61 = scmp.ne.s32.totalorder %s53, %s55
      %p62 = scmp.eq.s32.totalorder %s24, 3
      %p63 = por %p61, %p62
      %p64 = scmp.ne.s32.totalorder %s55, %s56
      %p65 = scmp.eq.s32.totalorder %s24, 0
      %p66 = por %p64, %p65
      %p67 = scmp.ne.s32.totalorder %s55, %s56
      %p68 = scmp.eq.s32.totalorder %s25, 3
      %p69 = por %p67, %p68
      %p71 = scmp.ne.s32.totalorder %s56, %s70
      %p72 = scmp.eq.s32.totalorder %s25, 0
      %p73 = por %p71, %p72
      %s75 = sadd.s32 %s74, 1
      %p78 = scmp.eq.s32.totalorder %s19, 3
      %p79 = scmp.ne.s32.totalorder %s74, %s76
      %p80 = scmp.eq.s32.totalorder %s19, 0
      %p81 = por %p79, %p80
      %p82 = scmp.ne.s32.totalorder %s74, %s76
      %p83 = scmp.eq.s32.totalorder %s24, 3
      %p84 = por %p82, %p83
      %p85 = scmp.ne.s32.totalorder %s76, %s77
      %p86 = scmp.eq.s32.totalorder %s24, 0
      %p87 = por %p85, %p86
      %p88 = scmp.ne.s32.totalorder %s76, %s77
      %p89 = scmp.eq.s32.totalorder %s25, 3
      %p90 = por %p88, %p89
      %p92 = scmp.ne.s32.totalorder %s77, %s91
      %p93 = scmp.eq.s32.totalorder %s25, 0
      %p94 = por %p92, %p93
      %s96 = sadd.s32 %s95, 1
      %p99 = scmp.eq.s32.totalorder %s19, 3
      %p100 = scmp.ne.s32.totalorder %s95, %s97
      %p101 = scmp.eq.s32.totalorder %s19, 0
      %p102 = por %p100, %p101
      %p103 = scmp.ne.s32.totalorder %s95, %s97
      %p104 = scmp.eq.s32.totalorder %s24, 3
      %p105 = por %p103, %p104
      %p106 = scmp.ne.s32.totalorder %s97, %s98
      %p107 = scmp.eq.s32.totalorder %s24, 0
      %p108 = por %p106, %p107
      %p109 = scmp.ne.s32.totalorder %s97, %s98
      %p110 = scmp.eq.s32.totalorder %s25, 3
      %p111 = por %p109, %p110
      %p113 = scmp.ne.s32.totalorder %s98, %s112
      %p114 = scmp.eq.s32.totalorder %s25, 0
      %p115 = por %p113, %p114
      %s117 = sadd.s32 %s116, 1
      %p120 = scmp.eq.s32.totalorder %s19, 3
      %p121 = scmp.ne.s32.totalorder %s116, %s118
      %p122 = scmp.eq.s32.totalorder %s19, 0
      %p123 = por %p121, %p122
      %p124 = scmp.ne.s32.totalorder %s116, %s118
      %p125 = scmp.eq.s32.totalorder %s24, 3
      %p126 = por %p124, %p125
      %p127 = scmp.ne.s32.totalorder %s118, %s119
      %p128 = scmp.eq.s32.totalorder %s24, 0
      %p129 = por %p127, %p128
      %p130 = scmp.ne.s32.totalorder %s118, %s119
      %p131 = scmp.eq.s32.totalorder %s25, 3
      %p132 = por %p130, %p131
      %p134 = scmp.ne.s32.totalorder %s119, %s133
      %p135 = scmp.eq.s32.totalorder %s25, 0
      %p136 = por %p134, %p135
      %s138 = sadd.s32 %s137, 1
      %p141 = scmp.eq.s32.totalorder %s19, 3
      %p142 = scmp.ne.s32.totalorder %s137, %s139
      %p143 = scmp.eq.s32.totalorder %s19, 0
      %p144 = por %p142, %p143
      %p145 = scmp.ne.s32.totalorder %s137, %s139
      %p146 = scmp.eq.s32.totalorder %s24, 3
      %p147 = por %p145, %p146
      %p148 = scmp.ne.s32.totalorder %s139, %s140
      %p149 = scmp.eq.s32.totalorder %s24, 0
      %p150 = por %p148, %p149
      %p151 = scmp.ne.s32.totalorder %s139, %s140
      %p152 = scmp.eq.s32.totalorder %s25, 3
      %p153 = por %p151, %p152
      %p155 = scmp.ne.s32.totalorder %s140, %s154
      %p156 = scmp.eq.s32.totalorder %s25, 0
      %p157 = por %p155, %p156
      %s159 = sadd.s32 %s158, 1
      %p162 = scmp.eq.s32.totalorder %s19, 3
      %p163 = scmp.ne.s32.totalorder %s158, %s160
      %p164 = scmp.eq.s32.totalorder %s19, 0
      %p165 = por %p163, %p164
      %p166 = scmp.ne.s32.totalorder %s158, %s160
      %p167 = scmp.eq.s32.totalorder %s24, 3
      %p168 = por %p166, %p167
      %p169 = scmp.ne.s32.totalorder %s160, %s161
      %p170 = scmp.eq.s32.totalorder %s24, 0
      %p171 = por %p169, %p170
      %p172 = scmp.ne.s32.totalorder %s160, %s161
      %p173 = scmp.eq.s32.totalorder %s25, 3
      %p174 = por %p172, %p173
      %p176 = scmp.ne.s32.totalorder %s161, %s175
      %p177 = scmp.eq.s32.totalorder %s25, 0
      %p178 = por %p176, %p177
      %s179 = ssub.s32 %s19, %s26
      %p180 = scmp.eq.s32.totalorder %s179, 0
      %s182 = sadd.s32 %s181, 1
      %s183 = scalar_select %p180, %s181, %s182
      %p186 = pneg %p180
      %p187 = scmp.eq.s32.totalorder %s19, 3
      %p188 = por %p186, %p187
      %p189 = scmp.ne.s32.totalorder %s181, %s184
      %p190 = scmp.eq.s32.totalorder %s19, 0
      %p191 = por %p189, %p190
      %p192 = scmp.ne.s32.totalorder %s181, %s184
      %p193 = scmp.eq.s32.totalorder %s24, 3
      %p194 = por %p192, %p193
      %p195 = scmp.ne.s32.totalorder %s184, %s185
      %p196 = scmp.eq.s32.totalorder %s24, 0
      %p197 = por %p195, %p196
      %p198 = scmp.ne.s32.totalorder %s184, %s185
      %p199 = scmp.eq.s32.totalorder %s25, 3
      %p200 = por %p198, %p199
      %p202 = scmp.ne.s32.totalorder %s185, %s201
      %p203 = scmp.eq.s32.totalorder %s25, 0
      %p204 = por %p202, %p203
      %p205 = scmp.le.s32.totalorder 1, %s19
      %p206 = scmp.lt.s32.totalorder %s19, 5
      %p207 = pnand %p205, %p206
      %p208 = pneg %p207
      // Predicated region
      $region9: #{tpu_custom_call.1} parent=5 // pred_check
        _
      $region10: #{tpu_custom_call.1} parent=5 // pred_check_branch
        %210 = sbr.rel (%p207) target = $region12
      $region11: #{tpu_custom_call.1} parent=5 // pred_region
        %s211 = ssub.s32 %s19, 1
        // Predicated region
        $region13: #{tpu_custom_call.1} parent=11 // pred_check
          %p212 = pneg %p66
        $region14: #{tpu_custom_call.1} parent=11 // pred_check_branch
          %214 = sbr.rel (%p212) target = $region16
        $region15: #{tpu_custom_call.1} parent=11 // pred_region
          _
        $region16: #{tpu_custom_call.1} parent=11 // pred_fallthru
          _
        // Predicated region
        $region17: #{tpu_custom_call.1} parent=11 // pred_check
          %p215 = pneg %p87
        $region18: #{tpu_custom_call.1} parent=11 // pred_check_branch
          %217 = sbr.rel (%p215) target = $region20
        $region19: #{tpu_custom_call.1} parent=11 // pred_region
          _
        $region20: #{tpu_custom_call.1} parent=11 // pred_fallthru
          _
        // Predicated region
        $region21: #{tpu_custom_call.1} parent=11 // pred_check
          %p218 = pneg %p108
        $region22: #{tpu_custom_call.1} parent=11 // pred_check_branch
          %220 = sbr.rel (%p218) target = $region24
        $region23: #{tpu_custom_call.1} parent=11 // pred_region
          _
        $region24: #{tpu_custom_call.1} parent=11 // pred_fallthru
          _
        // Predicated region
        $region25: #{tpu_custom_call.1} parent=11 // pred_check
          %p221 = pneg %p129
        $region26: #{tpu_custom_call.1} parent=11 // pred_check_branch
          %223 = sbr.rel (%p221) target = $region28
        $region27: #{tpu_custom_call.1} parent=11 // pred_region
          _
        $region28: #{tpu_custom_call.1} parent=11 // pred_fallthru
          _
        // Predicated region
        $region29: #{tpu_custom_call.1} parent=11 // pred_check
          %p224 = pneg %p150
        $region30: #{tpu_custom_call.1} parent=11 // pred_check_branch
          %226 = sbr.rel (%p224) target = $region32
        $region31: #{tpu_custom_call.1} parent=11 // pred_region
          _
        $region32: #{tpu_custom_call.1} parent=11 // pred_fallthru
          _
        // Predicated region
        $region33: #{tpu_custom_call.1} parent=11 // pred_check
          %p227 = pneg %p171
        $region34: #{tpu_custom_call.1} parent=11 // pred_check_branch
          %229 = sbr.rel (%p227) target = $region36
        $region35: #{tpu_custom_call.1} parent=11 // pred_region
          _
        $region36: #{tpu_custom_call.1} parent=11 // pred_fallthru
          _
      $region12: #{tpu_custom_call.1} parent=5 // pred_fallthru
        _
      %p230 = scmp.lt.s32.totalorder %s19, 4
      // Predicated region
      $region37: #{tpu_custom_call.1} parent=5 // pred_check
        %p231 = pneg %p230
      $region38: #{tpu_custom_call.1} parent=5 // pred_check_branch
        %233 = sbr.rel (%p231) target = $region40
      $region39: #{tpu_custom_call.1} parent=5 // pred_region
        // Predicated region
        $region41: #{tpu_custom_call.1} parent=39 // pred_check
          %p234 = pneg %p39
        $region42: #{tpu_custom_call.1} parent=39 // pred_check_branch
          %236 = sbr.rel (%p234) target = $region44
        $region43: #{tpu_custom_call.1} parent=39 // pred_region
          %s237 = sand.u32 %s29, 1
          %s238 = scalar_lea.sflag [#allocation4], %s237
          %s239 = sand.u32 %s29, 1
          %s240 = smul.addr %s239, 256
          %s241 = scalar_lea.vmem [#allocation3], %s240
          %s243 = ssub.s32 4096, 4096
          %244 = vsyncadd %s238, %s243
          %s245 = smul.addr %s19, 64
          %s246 = smul.addr %s245, 64
          %s247 = scalar_lea.hbm %s0, %s246
          %s248 = sshll.u32 %s241, 4
          %s249 = int_to_ptr.vmem [resolvable:$true] %s248
          %254 = dma.hbm_to_vmem [thread:$0]  %s247, 4096, %s249, %s238, 128, 128, 8
        $region44: #{tpu_custom_call.1} parent=39 // pred_fallthru
          _
      $region40: #{tpu_custom_call.1} parent=5 // pred_fallthru
        _
      %p255 = scmp.le.s32.totalorder 1, %s19
      %p256 = scmp.lt.s32.totalorder %s19, 5
      %p257 = pnand %p255, %p256
      %p258 = pneg %p257
      // Predicated region
      $region45: #{tpu_custom_call.1} parent=5 // pred_check
        _
      $region46: #{tpu_custom_call.1} parent=5 // pred_check_branch
        %260 = sbr.rel (%p257) target = $region48
      $region47: #{tpu_custom_call.1} parent=5 // pred_region
        %s261 = ssub.s32 %s19, 1
        %s262 = sand.u32 %s32, 1
        %s263 = scalar_lea.sflag [#allocation4], %s262
        %s264 = sand.u32 %s32, 1
        %s265 = smul.addr %s264, 256
        %s266 = scalar_lea.vmem [#allocation3], %s265
        // Predicated region
        $region49: #{tpu_custom_call.1} parent=47 // pred_check
          %p267 = pneg %p45
        $region50: #{tpu_custom_call.1} parent=47 // pred_check_branch
          %269 = sbr.rel (%p267) target = $region52
        $region51: #{tpu_custom_call.1} parent=47 // pred_region
          %270 = dma.done %s263, 4096
        $region52: #{tpu_custom_call.1} parent=47 // pred_fallthru
          _
        %s271 = sand.u32 %s32, 1
        %s272 = scalar_lea.sflag [#allocation4], %s271
        %s273 = sand.u32 %s32, 1
        %s274 = smul.addr %s273, 256
        %s275 = scalar_lea.vmem [#allocation3], %s274
        %p276 = pneg %p45
        %p277 = pneg %p42
        %p278 = pneg %p66
        %p279 = pneg %p63
        %p280 = pneg %p87
        %p281 = pneg %p84
        %p282 = pneg %p108
        %p283 = pneg %p105
        %p284 = pneg %p129
        %p285 = pneg %p126
        %p286 = pneg %p150
        %p287 = pneg %p147
        %p288 = pneg %p171
        %p289 = pneg %p168
        %p290 = pneg %p197
        %p291 = pneg %p194
        %s292 = sand.u32 %s184, 1
        %s293 = scalar_lea.sflag [#allocation5], %s292
        %s294 = sand.u32 %s184, 1
        %s295 = smul.addr %s294, 256
        %s296 = scalar_lea.vmem [#allocation6], %s295
        %v298 = vld [vmem:[%s266] sm:$0xff]
        %v299 = vld [vmem:[%s266 + $0x8] sm:$0xff]
        %v300 = vld [vmem:[%s266 + $0x10] sm:$0xff]
        %v301 = vld [vmem:[%s266 + $0x18] sm:$0xff]
        %v302 = vld [vmem:[%s266 + $0x20] sm:$0xff]
        %v303 = vld [vmem:[%s266 + $0x28] sm:$0xff]
        %v304 = vld [vmem:[%s266 + $0x30] sm:$0xff]
        %v305 = vld [vmem:[%s266 + $0x38] sm:$0xff]
        %v306 = vld [vmem:[%s266 + $0x40] sm:$0xff]
        %v307 = vld [vmem:[%s266 + $0x48] sm:$0xff]
        %v308 = vld [vmem:[%s266 + $0x50] sm:$0xff]
        %v309 = vld [vmem:[%s266 + $0x58] sm:$0xff]
        %v310 = vld [vmem:[%s266 + $0x60] sm:$0xff]
        %v311 = vld [vmem:[%s266 + $0x68] sm:$0xff]
        %v312 = vld [vmem:[%s266 + $0x70] sm:$0xff]
        %v313 = vld [vmem:[%s266 + $0x78] sm:$0xff]
        %v314 = vld [vmem:[%s266 + $0x80] sm:$0xff]
        %v315 = vld [vmem:[%s266 + $0x88] sm:$0xff]
        %v316 = vld [vmem:[%s266 + $0x90] sm:$0xff]
        %v317 = vld [vmem:[%s266 + $0x98] sm:$0xff]
        %v318 = vld [vmem:[%s266 + $0xa0] sm:$0xff]
        %v319 = vld [vmem:[%s266 + $0xa8] sm:$0xff]
        %v320 = vld [vmem:[%s266 + $0xb0] sm:$0xff]
        %v321 = vld [vmem:[%s266 + $0xb8] sm:$0xff]
        %v322 = vld [vmem:[%s266 + $0xc0] sm:$0xff]
        %v323 = vld [vmem:[%s266 + $0xc8] sm:$0xff]
        %v324 = vld [vmem:[%s266 + $0xd0] sm:$0xff]
        %v325 = vld [vmem:[%s266 + $0xd8] sm:$0xff]
        %v326 = vld [vmem:[%s266 + $0xe0] sm:$0xff]
        %v327 = vld [vmem:[%s266 + $0xe8] sm:$0xff]
        %v328 = vld [vmem:[%s266 + $0xf0] sm:$0xff]
        %v329 = vld [vmem:[%s266 + $0xf8] sm:$0xff]
        %v330 = vld [vmem:[%s1] sm:$0xf]
        %v331 = vld [vmem:[%s1 + $0x4] sm:$0xf]
        %v332 = vld [vmem:[%s1 + $0x8] sm:$0xf]
        %v333 = vld [vmem:[%s1 + $0xc] sm:$0xf]
        %v334 = vld [vmem:[%s1 + $0x10] sm:$0xf]
        %v335 = vld [vmem:[%s1 + $0x14] sm:$0xf]
        %v336 = vld [vmem:[%s1 + $0x18] sm:$0xf]
        %v337 = vld [vmem:[%s1 + $0x1c] sm:$0xf]
        %v338 = vld [vmem:[%s1 + $0x20] sm:$0xf]
        %v339 = vld [vmem:[%s1 + $0x24] sm:$0xf]
        %v340 = vld [vmem:[%s1 + $0x28] sm:$0xf]
        %v341 = vld [vmem:[%s1 + $0x2c] sm:$0xf]
        %v342 = vld [vmem:[%s1 + $0x30] sm:$0xf]
        %v343 = vld [vmem:[%s1 + $0x34] sm:$0xf]
        %v344 = vld [vmem:[%s1 + $0x38] sm:$0xf]
        %v345 = vld [vmem:[%s1 + $0x3c] sm:$0xf]
        %v346 = vld [vmem:[%s1 + $0x40] sm:$0xf]
        %v347 = vld [vmem:[%s1 + $0x44] sm:$0xf]
        %v348 = vld [vmem:[%s1 + $0x48] sm:$0xf]
        %v349 = vld [vmem:[%s1 + $0x4c] sm:$0xf]
        %v350 = vld [vmem:[%s1 + $0x50] sm:$0xf]
        %v351 = vld [vmem:[%s1 + $0x54] sm:$0xf]
        %v352 = vld [vmem:[%s1 + $0x58] sm:$0xf]
        %v353 = vld [vmem:[%s1 + $0x5c] sm:$0xf]
        %v354 = vld [vmem:[%s1 + $0x60] sm:$0xf]
        %v355 = vld [vmem:[%s1 + $0x64] sm:$0xf]
        %v356 = vld [vmem:[%s1 + $0x68] sm:$0xf]
        %v357 = vld [vmem:[%s1 + $0x6c] sm:$0xf]
        %v358 = vld [vmem:[%s1 + $0x70] sm:$0xf]
        %v359 = vld [vmem:[%s1 + $0x74] sm:$0xf]
        %v360 = vld [vmem:[%s1 + $0x78] sm:$0xf]
        %v361 = vld [vmem:[%s1 + $0x7c] sm:$0xf]
        %v362 = vld [vmem:[%s2] sm:$0x1]
        %v364 = vlaneseq
        %v365 = vshrl.u32 %v364, 7
        %v366 = vsub.s32 0, %v365
        %v367 = vrot.slane %v362, %v366
        %v401 = vunpack.c.l.b16 %v298
        %v402 = vunpack.c.h.b16 %v298
        %v403 = vunpack.c.l.b16 %v299
        %v404 = vunpack.c.h.b16 %v299
        %v405 = vunpack.c.l.b16 %v300
        %v406 = vunpack.c.h.b16 %v300
        %v407 = vunpack.c.l.b16 %v301
        %v408 = vunpack.c.h.b16 %v301
        %v409 = vunpack.c.l.b16 %v302
        %v410 = vunpack.c.h.b16 %v302
        %v411 = vunpack.c.l.b16 %v303
        %v412 = vunpack.c.h.b16 %v303
        %v413 = vunpack.c.l.b16 %v304
        %v414 = vunpack.c.h.b16 %v304
        %v415 = vunpack.c.l.b16 %v305
        %v416 = vunpack.c.h.b16 %v305
        %v417 = vunpack.c.l.b16 %v306
        %v418 = vunpack.c.h.b16 %v306
        %v419 = vunpack.c.l.b16 %v307
        %v420 = vunpack.c.h.b16 %v307
        %v421 = vunpack.c.l.b16 %v308
        %v422 = vunpack.c.h.b16 %v308
        %v423 = vunpack.c.l.b16 %v309
        %v424 = vunpack.c.h.b16 %v309
        %v425 = vunpack.c.l.b16 %v310
        %v426 = vunpack.c.h.b16 %v310
        %v427 = vunpack.c.l.b16 %v311
        %v428 = vunpack.c.h.b16 %v311
        %v429 = vunpack.c.l.b16 %v312
        %v430 = vunpack.c.h.b16 %v312
        %v431 = vunpack.c.l.b16 %v313
        %v432 = vunpack.c.h.b16 %v313
        %v433 = vunpack.c.l.b16 %v314
        %v434 = vunpack.c.h.b16 %v314
        %v435 = vunpack.c.l.b16 %v315
        %v436 = vunpack.c.h.b16 %v315
        %v437 = vunpack.c.l.b16 %v316
        %v438 = vunpack.c.h.b16 %v316
        %v439 = vunpack.c.l.b16 %v317
        %v440 = vunpack.c.h.b16 %v317
        %v441 = vunpack.c.l.b16 %v318
        %v442 = vunpack.c.h.b16 %v318
        %v443 = vunpack.c.l.b16 %v319
        %v444 = vunpack.c.h.b16 %v319
        %v445 = vunpack.c.l.b16 %v320
        %v446 = vunpack.c.h.b16 %v320
        %v447 = vunpack.c.l.b16 %v321
        %v448 = vunpack.c.h.b16 %v321
        %v449 = vunpack.c.l.b16 %v322
        %v450 = vunpack.c.h.b16 %v322
        %v451 = vunpack.c.l.b16 %v323
        %v452 = vunpack.c.h.b16 %v323
        %v453 = vunpack.c.l.b16 %v324
        %v454 = vunpack.c.h.b16 %v324
        %v455 = vunpack.c.l.b16 %v325
        %v456 = vunpack.c.h.b16 %v325
        %v457 = vunpack.c.l.b16 %v326
        %v458 = vunpack.c.h.b16 %v326
        %v459 = vunpack.c.l.b16 %v327
        %v460 = vunpack.c.h.b16 %v327
        %v461 = vunpack.c.l.b16 %v328
        %v462 = vunpack.c.h.b16 %v328
        %v463 = vunpack.c.l.b16 %v329
        %v464 = vunpack.c.h.b16 %v329
        %v465 = vpack.c.b16 %v403, %v401
        %v466 = vpack.c.b16 %v404, %v402
        %v467 = vpack.c.b16 %v407, %v405
        %v468 = vpack.c.b16 %v408, %v406
        %v469 = vpack.c.b16 %v411, %v409
        %v470 = vpack.c.b16 %v412, %v410
        %v471 = vpack.c.b16 %v415, %v413
        %v472 = vpack.c.b16 %v416, %v414
        %v473 = vpack.c.b16 %v419, %v417
        %v474 = vpack.c.b16 %v420, %v418
        %v475 = vpack.c.b16 %v423, %v421
        %v476 = vpack.c.b16 %v424, %v422
        %v477 = vpack.c.b16 %v427, %v425
        %v478 = vpack.c.b16 %v428, %v426
        %v479 = vpack.c.b16 %v431, %v429
        %v480 = vpack.c.b16 %v432, %v430
        %v481 = vpack.c.b16 %v435, %v433
        %v482 = vpack.c.b16 %v436, %v434
        %v483 = vpack.c.b16 %v439, %v437
        %v484 = vpack.c.b16 %v440, %v438
        %v485 = vpack.c.b16 %v443, %v441
        %v486 = vpack.c.b16 %v444, %v442
        %v487 = vpack.c.b16 %v447, %v445
        %v488 = vpack.c.b16 %v448, %v446
        %v489 = vpack.c.b16 %v451, %v449
        %v490 = vpack.c.b16 %v452, %v450
        %v491 = vpack.c.b16 %v455, %v453
        %v492 = vpack.c.b16 %v456, %v454
        %v493 = vpack.c.b16 %v459, %v457
        %v494 = vpack.c.b16 %v460, %v458
        %v495 = vpack.c.b16 %v463, %v461
        %v496 = vpack.c.b16 %v464, %v462
        %v561 = vunpack.c.l.b16 %v330
        %v562 = vunpack.c.l.b16 %v331
        %v563 = vunpack.c.l.b16 %v332
        %v564 = vunpack.c.l.b16 %v333
        %v565 = vunpack.c.l.b16 %v334
        %v566 = vunpack.c.l.b16 %v335
        %v567 = vunpack.c.l.b16 %v336
        %v568 = vunpack.c.l.b16 %v337
        %v569 = vunpack.c.l.b16 %v338
        %v570 = vunpack.c.l.b16 %v339
        %v571 = vunpack.c.l.b16 %v340
        %v572 = vunpack.c.l.b16 %v341
        %v573 = vunpack.c.l.b16 %v342
        %v574 = vunpack.c.l.b16 %v343
        %v575 = vunpack.c.l.b16 %v344
        %v576 = vunpack.c.l.b16 %v345
        %v577 = vunpack.c.l.b16 %v346
        %v578 = vunpack.c.l.b16 %v347
        %v579 = vunpack.c.l.b16 %v348
        %v580 = vunpack.c.l.b16 %v349
        %v581 = vunpack.c.l.b16 %v350
        %v582 = vunpack.c.l.b16 %v351
        %v583 = vunpack.c.l.b16 %v352
        %v584 = vunpack.c.l.b16 %v353
        %v585 = vunpack.c.l.b16 %v354
        %v586 = vunpack.c.l.b16 %v355
        %v587 = vunpack.c.l.b16 %v356
        %v588 = vunpack.c.l.b16 %v357
        %v589 = vunpack.c.l.b16 %v358
        %v590 = vunpack.c.l.b16 %v359
        %v591 = vunpack.c.l.b16 %v360
        %v592 = vunpack.c.l.b16 %v361
        %v593 = vpack.c.b16 %v562, %v561
        %v594 = vpack.c.b16 %v564, %v563
        %v595 = vpack.c.b16 %v566, %v565
        %v596 = vpack.c.b16 %v568, %v567
        %v597 = vpack.c.b16 %v570, %v569
        %v598 = vpack.c.b16 %v572, %v571
        %v599 = vpack.c.b16 %v574, %v573
        %v600 = vpack.c.b16 %v576, %v575
        %v601 = vpack.c.b16 %v578, %v577
        %v602 = vpack.c.b16 %v580, %v579
        %v603 = vpack.c.b16 %v582, %v581
        %v604 = vpack.c.b16 %v584, %v583
        %v605 = vpack.c.b16 %v586, %v585
        %v606 = vpack.c.b16 %v588, %v587
        %v607 = vpack.c.b16 %v590, %v589
        %v608 = vpack.c.b16 %v592, %v591
        %625 = vmatprep.subr.bf16.mxu0 0
        %626 = vmatpush1.bf16.msra.mxu0 %v593
        %627 = vmatprep.subr.bf16.mxu0 0
        %628 = vmatpush1.bf16.msra.mxu0 %v594
        %629 = vmatprep.subr.bf16.mxu0 0
        %630 = vmatpush1.bf16.msra.mxu0 %v595
        %631 = vmatprep.subr.bf16.mxu0 0
        %632 = vmatpush1.bf16.msra.mxu0 %v596
        %633 = vmatprep.subr.bf16.mxu0 0
        %634 = vmatpush1.bf16.msra.mxu0 %v597
        %635 = vmatprep.subr.bf16.mxu0 0
        %636 = vmatpush1.bf16.msra.mxu0 %v598
        %637 = vmatprep.subr.bf16.mxu0 0
        %638 = vmatpush1.bf16.msra.mxu0 %v599
        %639 = vmatprep.subr.bf16.mxu0 0
        %640 = vmatpush1.bf16.msra.mxu0 %v600
        %641 = vmatprep.subr.bf16.mxu0 0
        %642 = vmatpush1.bf16.msra.mxu0 %v601
        %643 = vmatprep.subr.bf16.mxu0 0
        %644 = vmatpush1.bf16.msra.mxu0 %v602
        %645 = vmatprep.subr.bf16.mxu0 0
        %646 = vmatpush1.bf16.msra.mxu0 %v603
        %647 = vmatprep.subr.bf16.mxu0 0
        %648 = vmatpush1.bf16.msra.mxu0 %v604
        %649 = vmatprep.subr.bf16.mxu0 0
        %650 = vmatpush1.bf16.msra.mxu0 %v605
        %651 = vmatprep.subr.bf16.mxu0 0
        %652 = vmatpush1.bf16.msra.mxu0 %v606
        %653 = vmatprep.subr.bf16.mxu0 0
        %654 = vmatpush1.bf16.msra.mxu0 %v607
        %655 = vmatprep.subr.bf16.mxu0 0
        %656 = vmatpush1.bf16.msra.mxu0 %v608
        %657 = vmatprep.mubr.bf16.mxu0 %v466
        %658 = vmatmul.mubr.bf16.gmra.mrb[0].mxu0 %v465
        %v659 = vpop.f32.mrb[0].mxu0
        %v660 = vadd.f32 %v367, %v659
        %v661 = vpop.f32.mrb[0].mxu0
        %v662 = vpop.f32.mrb[0].mxu0
        %v663 = vadd.f32 %v367, %v662
        %v664 = vpop.f32.mrb[0].mxu0
        %665 = vmatprep.mubr.bf16.mxu0 %v468
        %666 = vmatmul.mubr.bf16.gmra.mrb[0].mxu0 %v467
        %v667 = vpop.f32.mrb[0].mxu0
        %v668 = vadd.f32 %v367, %v667
        %v669 = vpop.f32.mrb[0].mxu0
        %v670 = vpop.f32.mrb[0].mxu0
        %v671 = vadd.f32 %v367, %v670
        %v672 = vpop.f32.mrb[0].mxu0
        %673 = vmatprep.mubr.bf16.mxu0 %v470
        %674 = vmatmul.mubr.bf16.gmra.mrb[0].mxu0 %v469
        %v675 = vpop.f32.mrb[0].mxu0
        %v676 = vadd.f32 %v367, %v675
        %v677 = vpop.f32.mrb[0].mxu0
        %v678 = vpop.f32.mrb[0].mxu0
        %v679 = vadd.f32 %v367, %v678
        %v680 = vpop.f32.mrb[0].mxu0
        %681 = vmatprep.mubr.bf16.mxu0 %v472
        %682 = vmatmul.mubr.bf16.gmra.mrb[0].mxu0 %v471
        %v683 = vpop.f32.mrb[0].mxu0
        %v684 = vadd.f32 %v367, %v683
        %v685 = vpop.f32.mrb[0].mxu0
        %v686 = vpop.f32.mrb[0].mxu0
        %v687 = vadd.f32 %v367, %v686
        %v688 = vpop.f32.mrb[0].mxu0
        %689 = vmatprep.mubr.bf16.mxu0 %v474
        %690 = vmatmul.mubr.bf16.gmra.mrb[0].mxu0 %v473
        %v691 = vpop.f32.mrb[0].mxu0
        %v692 = vadd.f32 %v367, %v691
        %v693 = vpop.f32.mrb[0].mxu0
        %v694 = vpop.f32.mrb[0].mxu0
        %v695 = vadd.f32 %v367, %v694
        %v696 = vpop.f32.mrb[0].mxu0
        %697 = vmatprep.mubr.bf16.mxu0 %v476
        %698 = vmatmul.mubr.bf16.gmra.mrb[0].mxu0 %v475
        %v699 = vpop.f32.mrb[0].mxu0
        %v700 = vadd.f32 %v367, %v699
        %v701 = vpop.f32.mrb[0].mxu0
        %v702 = vpop.f32.mrb[0].mxu0
        %v703 = vadd.f32 %v367, %v702
        %v704 = vpop.f32.mrb[0].mxu0
        %705 = vmatprep.mubr.bf16.mxu0 %v478
        %706 = vmatmul.mubr.bf16.gmra.mrb[0].mxu0 %v477
        %v707 = vpop.f32.mrb[0].mxu0
        %v708 = vadd.f32 %v367, %v707
        %v709 = vpop.f32.mrb[0].mxu0
        %v710 = vpop.f32.mrb[0].mxu0
        %v711 = vadd.f32 %v367, %v710
        %v712 = vpop.f32.mrb[0].mxu0
        %713 = vmatprep.mubr.bf16.mxu0 %v480
        %714 = vmatmul.mubr.bf16.gmra.mrb[0].mxu0 %v479
        %v715 = vpop.f32.mrb[0].mxu0
        %v716 = vadd.f32 %v367, %v715
        %v717 = vpop.f32.mrb[0].mxu0
        %v718 = vpop.f32.mrb[0].mxu0
        %v719 = vadd.f32 %v367, %v718
        %v720 = vpop.f32.mrb[0].mxu0
        %721 = vmatprep.mubr.bf16.mxu0 %v482
        %722 = vmatmul.mubr.bf16.gmra.mrb[0].mxu0 %v481
        %v723 = vpop.f32.mrb[0].mxu0
        %v724 = vadd.f32 %v367, %v723
        %v725 = vpop.f32.mrb[0].mxu0
        %v726 = vpop.f32.mrb[0].mxu0
        %v727 = vadd.f32 %v367, %v726
        %v728 = vpop.f32.mrb[0].mxu0
        %729 = vmatprep.mubr.bf16.mxu0 %v484
        %730 = vmatmul.mubr.bf16.gmra.mrb[0].mxu0 %v483
        %v731 = vpop.f32.mrb[0].mxu0
        %v732 = vadd.f32 %v367, %v731
        %v733 = vpop.f32.mrb[0].mxu0
        %v734 = vpop.f32.mrb[0].mxu0
        %v735 = vadd.f32 %v367, %v734
        %v736 = vpop.f32.mrb[0].mxu0
        %737 = vmatprep.mubr.bf16.mxu0 %v486
        %738 = vmatmul.mubr.bf16.gmra.mrb[0].mxu0 %v485
        %v739 = vpop.f32.mrb[0].mxu0
        %v740 = vadd.f32 %v367, %v739
        %v741 = vpop.f32.mrb[0].mxu0
        %v742 = vpop.f32.mrb[0].mxu0
        %v743 = vadd.f32 %v367, %v742
        %v744 = vpop.f32.mrb[0].mxu0
        %745 = vmatprep.mubr.bf16.mxu0 %v488
        %746 = vmatmul.mubr.bf16.gmra.mrb[0].mxu0 %v487
        %v747 = vpop.f32.mrb[0].mxu0
        %v748 = vadd.f32 %v367, %v747
        %v749 = vpop.f32.mrb[0].mxu0
        %v750 = vpop.f32.mrb[0].mxu0
        %v751 = vadd.f32 %v367, %v750
        %v752 = vpop.f32.mrb[0].mxu0
        %753 = vmatprep.mubr.bf16.mxu0 %v490
        %754 = vmatmul.mubr.bf16.gmra.mrb[0].mxu0 %v489
        %v755 = vpop.f32.mrb[0].mxu0
        %v756 = vadd.f32 %v367, %v755
        %v757 = vpop.f32.mrb[0].mxu0
        %v758 = vpop.f32.mrb[0].mxu0
        %v759 = vadd.f32 %v367, %v758
        %v760 = vpop.f32.mrb[0].mxu0
        %761 = vmatprep.mubr.bf16.mxu0 %v492
        %762 = vmatmul.mubr.bf16.gmra.mrb[0].mxu0 %v491
        %v763 = vpop.f32.mrb[0].mxu0
        %v764 = vadd.f32 %v367, %v763
        %v765 = vpop.f32.mrb[0].mxu0
        %v766 = vpop.f32.mrb[0].mxu0
        %v767 = vadd.f32 %v367, %v766
        %v768 = vpop.f32.mrb[0].mxu0
        %769 = vmatprep.mubr.bf16.mxu0 %v494
        %770 = vmatmul.mubr.bf16.gmra.mrb[0].mxu0 %v493
        %v771 = vpop.f32.mrb[0].mxu0
        %v772 = vadd.f32 %v367, %v771
        %v773 = vpop.f32.mrb[0].mxu0
        %v774 = vpop.f32.mrb[0].mxu0
        %v775 = vadd.f32 %v367, %v774
        %v776 = vpop.f32.mrb[0].mxu0
        %777 = vmatprep.mubr.bf16.mxu0 %v496
        %778 = vmatmul.mubr.bf16.gmra.mrb[0].mxu0 %v495
        %v779 = vpop.f32.mrb[0].mxu0
        %v780 = vadd.f32 %v367, %v779
        %v781 = vpop.f32.mrb[0].mxu0
        %v782 = vpop.f32.mrb[0].mxu0
        %v783 = vadd.f32 %v367, %v782
        %v784 = vpop.f32.mrb[0].mxu0
        %785 = vdwg.mxu0
        %v786 = vmax.f32 %v660, 0.0
        %v787 = vmax.f32 %v663, 0.0
        %v788 = vmax.f32 %v668, 0.0
        %v789 = vmax.f32 %v671, 0.0
        %v790 = vmax.f32 %v676, 0.0
        %v791 = vmax.f32 %v679, 0.0
        %v792 = vmax.f32 %v684, 0.0
        %v793 = vmax.f32 %v687, 0.0
        %v794 = vmax.f32 %v692, 0.0
        %v795 = vmax.f32 %v695, 0.0
        %v796 = vmax.f32 %v700, 0.0
        %v797 = vmax.f32 %v703, 0.0
        %v798 = vmax.f32 %v708, 0.0
        %v799 = vmax.f32 %v711, 0.0
        %v800 = vmax.f32 %v716, 0.0
        %v801 = vmax.f32 %v719, 0.0
        %v802 = vmax.f32 %v724, 0.0
        %v803 = vmax.f32 %v727, 0.0
        %v804 = vmax.f32 %v732, 0.0
        %v805 = vmax.f32 %v735, 0.0
        %v806 = vmax.f32 %v740, 0.0
        %v807 = vmax.f32 %v743, 0.0
        %v808 = vmax.f32 %v748, 0.0
        %v809 = vmax.f32 %v751, 0.0
        %v810 = vmax.f32 %v756, 0.0
        %v811 = vmax.f32 %v759, 0.0
        %v812 = vmax.f32 %v764, 0.0
        %v813 = vmax.f32 %v767, 0.0
        %v814 = vmax.f32 %v772, 0.0
        %v815 = vmax.f32 %v775, 0.0
        %v816 = vmax.f32 %v780, 0.0
        %v817 = vmax.f32 %v783, 0.0
        %vm818 = vcmask 519168
        %819 = vst.msk [vmem:[#allocation2] sm:$0xf] %vm818, 0
        %820 = vst.msk [vmem:[#allocation2 + $0x4] sm:$0xf] %vm818, 0
        %vm821 = vcmask 516096
        %822 = vst.msk [vmem:[#allocation2 + $0x8] sm:$0x1] %vm821, 0
        %s823 = scalar_lea.vmem [#allocation2], 204
        %824 = vst.msk [vmem:[%s823] sm:$0xf] %vm818, 0
        %825 = vst.msk [vmem:[%s823 + $0x4] sm:$0xf] %vm818, 0
        %826 = vst.msk [vmem:[%s823 + $0x8] sm:$0x1] %vm821, 0
        %s827 = scalar_lea.vmem [#allocation2], 12
        %vm828 = vcmask 516096
        %vm829 = vsmask.f32 256
        %vm830 = vmand %vm828, %vm829
        %v831 = vld [vmem:[%s827] sm:$0x1]
        %v832 = vsel %vm830, 0, %v831
        %833 = vst [vmem:[%s827] sm:$0x1] %v832
        %v834 = vld [vmem:[%s827 + $0xc] sm:$0x1]
        %v835 = vsel %vm830, 0, %v834
        %836 = vst [vmem:[%s827 + $0xc] sm:$0x1] %v835
        %v837 = vld [vmem:[%s827 + $0x18] sm:$0x1]
        %v838 = vsel %vm830, 0, %v837
        %839 = vst [vmem:[%s827 + $0x18] sm:$0x1] %v838
        %v840 = vld [vmem:[%s827 + $0x24] sm:$0x1]
        %v841 = vsel %vm830, 0, %v840
        %842 = vst [vmem:[%s827 + $0x24] sm:$0x1] %v841
        %v843 = vld [vmem:[%s827 + $0x30] sm:$0x1]
        %v844 = vsel %vm830, 0, %v843
        %845 = vst [vmem:[%s827 + $0x30] sm:$0x1] %v844
        %v846 = vld [vmem:[%s827 + $0x3c] sm:$0x1]
        %v847 = vsel %vm830, 0, %v846
        %848 = vst [vmem:[%s827 + $0x3c] sm:$0x1] %v847
        %v849 = vld [vmem:[%s827 + $0x48] sm:$0x1]
        %v850 = vsel %vm830, 0, %v849
        %851 = vst [vmem:[%s827 + $0x48] sm:$0x1] %v850
        %v852 = vld [vmem:[%s827 + $0x54] sm:$0x1]
        %v853 = vsel %vm830, 0, %v852
        %854 = vst [vmem:[%s827 + $0x54] sm:$0x1] %v853
        %v855 = vld [vmem:[%s827 + $0x60] sm:$0x1]
        %v856 = vsel %vm830, 0, %v855
        %857 = vst [vmem:[%s827 + $0x60] sm:$0x1] %v856
        %v858 = vld [vmem:[%s827 + $0x6c] sm:$0x1]
        %v859 = vsel %vm830, 0, %v858
        %860 = vst [vmem:[%s827 + $0x6c] sm:$0x1] %v859
        %v861 = vld [vmem:[%s827 + $0x78] sm:$0x1]
        %v862 = vsel %vm830, 0, %v861
        %863 = vst [vmem:[%s827 + $0x78] sm:$0x1] %v862
        %v864 = vld [vmem:[%s827 + $0x84] sm:$0x1]
        %v865 = vsel %vm830, 0, %v864
        %866 = vst [vmem:[%s827 + $0x84] sm:$0x1] %v865
        %v867 = vld [vmem:[%s827 + $0x90] sm:$0x1]
        %v868 = vsel %vm830, 0, %v867
        %869 = vst [vmem:[%s827 + $0x90] sm:$0x1] %v868
        %v870 = vld [vmem:[%s827 + $0x9c] sm:$0x1]
        %v871 = vsel %vm830, 0, %v870
        %872 = vst [vmem:[%s827 + $0x9c] sm:$0x1] %v871
        %v873 = vld [vmem:[%s827 + $0xa8] sm:$0x1]
        %v874 = vsel %vm830, 0, %v873
        %875 = vst [vmem:[%s827 + $0xa8] sm:$0x1] %v874
        %v876 = vld [vmem:[%s827 + $0xb4] sm:$0x1]
        %v877 = vsel %vm830, 0, %v876
        %878 = vst [vmem:[%s827 + $0xb4] sm:$0x1] %v877
        %vm879 = vsmask.f32 7938
        %vm880 = vmand %vm828, %vm879
        %v881 = vld [vmem:[%s827 + $0x8] sm:$0x1]
        %v882 = vsel %vm880, 0, %v881
        %883 = vst [vmem:[%s827 + $0x8] sm:$0x1] %v882
        %v884 = vld [vmem:[%s827 + $0x14] sm:$0x1]
        %v885 = vsel %vm880, 0, %v884
        %886 = vst [vmem:[%s827 + $0x14] sm:$0x1] %v885
        %v887 = vld [vmem:[%s827 + $0x20] sm:$0x1]
        %v888 = vsel %vm880, 0, %v887
        %889 = vst [vmem:[%s827 + $0x20] sm:$0x1] %v888
        %v890 = vld [vmem:[%s827 + $0x2c] sm:$0x1]
        %v891 = vsel %vm880, 0, %v890
        %892 = vst [vmem:[%s827 + $0x2c] sm:$0x1] %v891
        %v893 = vld [vmem:[%s827 + $0x38] sm:$0x1]
        %v894 = vsel %vm880, 0, %v893
        %895 = vst [vmem:[%s827 + $0x38] sm:$0x1] %v894
        %v896 = vld [vmem:[%s827 + $0x44] sm:$0x1]
        %v897 = vsel %vm880, 0, %v896
        %898 = vst [vmem:[%s827 + $0x44] sm:$0x1] %v897
        %v899 = vld [vmem:[%s827 + $0x50] sm:$0x1]
        %v900 = vsel %vm880, 0, %v899
        %901 = vst [vmem:[%s827 + $0x50] sm:$0x1] %v900
        %v902 = vld [vmem:[%s827 + $0x5c] sm:$0x1]
        %v903 = vsel %vm880, 0, %v902
        %904 = vst [vmem:[%s827 + $0x5c] sm:$0x1] %v903
        %v905 = vld [vmem:[%s827 + $0x68] sm:$0x1]
        %v906 = vsel %vm880, 0, %v905
        %907 = vst [vmem:[%s827 + $0x68] sm:$0x1] %v906
        %v908 = vld [vmem:[%s827 + $0x74] sm:$0x1]
        %v909 = vsel %vm880, 0, %v908
        %910 = vst [vmem:[%s827 + $0x74] sm:$0x1] %v909
        %v911 = vld [vmem:[%s827 + $0x80] sm:$0x1]
        %v912 = vsel %vm880, 0, %v911
        %913 = vst [vmem:[%s827 + $0x80] sm:$0x1] %v912
        %v914 = vld [vmem:[%s827 + $0x8c] sm:$0x1]
        %v915 = vsel %vm880, 0, %v914
        %916 = vst [vmem:[%s827 + $0x8c] sm:$0x1] %v915
        %v917 = vld [vmem:[%s827 + $0x98] sm:$0x1]
        %v918 = vsel %vm880, 0, %v917
        %919 = vst [vmem:[%s827 + $0x98] sm:$0x1] %v918
        %v920 = vld [vmem:[%s827 + $0xa4] sm:$0x1]
        %v921 = vsel %vm880, 0, %v920
        %922 = vst [vmem:[%s827 + $0xa4] sm:$0x1] %v921
        %v923 = vld [vmem:[%s827 + $0xb0] sm:$0x1]
        %v924 = vsel %vm880, 0, %v923
        %925 = vst [vmem:[%s827 + $0xb0] sm:$0x1] %v924
        %v926 = vld [vmem:[%s827 + $0xbc] sm:$0x1]
        %v927 = vsel %vm880, 0, %v926
        %928 = vst [vmem:[%s827 + $0xbc] sm:$0x1] %v927
        %v929 = vpack.c.bf16 %v787, %v786
        %v930 = vpack.c.bf16 %v789, %v788
        %v931 = vpack.c.bf16 %v791, %v790
        %v932 = vpack.c.bf16 %v793, %v792
        %v933 = vpack.c.bf16 %v795, %v794
        %v934 = vpack.c.bf16 %v797, %v796
        %v935 = vpack.c.bf16 %v799, %v798
        %v936 = vpack.c.bf16 %v801, %v800
        %v937 = vpack.c.bf16 %v803, %v802
        %v938 = vpack.c.bf16 %v805, %v804
        %v939 = vpack.c.bf16 %v807, %v806
        %v940 = vpack.c.bf16 %v809, %v808
        %v941 = vpack.c.bf16 %v811, %v810
        %v942 = vpack.c.bf16 %v813, %v812
        %v943 = vpack.c.bf16 %v815, %v814
        %v944 = vpack.c.bf16 %v817, %v816
        %v961 = vunpack.c.l.b16 %v929
        %v962 = vunpack.c.h.b16 %v929
        %v963 = vunpack.c.l.b16 %v930
        %v964 = vunpack.c.h.b16 %v930
        %v965 = vunpack.c.l.b16 %v931
        %v966 = vunpack.c.h.b16 %v931
        %v967 = vunpack.c.l.b16 %v932
        %v968 = vunpack.c.h.b16 %v932
        %v969 = vunpack.c.l.b16 %v933
        %v970 = vunpack.c.h.b16 %v933
        %v971 = vunpack.c.l.b16 %v934
        %v972 = vunpack.c.h.b16 %v934
        %v973 = vunpack.c.l.b16 %v935
        %v974 = vunpack.c.h.b16 %v935
        %v975 = vunpack.c.l.b16 %v936
        %v976 = vunpack.c.h.b16 %v936
        %v977 = vunpack.c.l.b16 %v937
        %v978 = vunpack.c.h.b16 %v937
        %v979 = vunpack.c.l.b16 %v938
        %v980 = vunpack.c.h.b16 %v938
        %v981 = vunpack.c.l.b16 %v939
        %v982 = vunpack.c.h.b16 %v939
        %v983 = vunpack.c.l.b16 %v940
        %v984 = vunpack.c.h.b16 %v940
        %v985 = vunpack.c.l.b16 %v941
        %v986 = vunpack.c.h.b16 %v941
        %v987 = vunpack.c.l.b16 %v942
        %v988 = vunpack.c.h.b16 %v942
        %v989 = vunpack.c.l.b16 %v943
        %v990 = vunpack.c.h.b16 %v943
        %v991 = vunpack.c.l.b16 %v944
        %v992 = vunpack.c.h.b16 %v944
        %v993 = vpack.c.b16 %v961, %v961
        %v994 = vpack.c.b16 %v962, %v962
        %v995 = vpack.c.b16 %v963, %v963
        %v996 = vpack.c.b16 %v964, %v964
        %v997 = vpack.c.b16 %v965, %v965
        %v998 = vpack.c.b16 %v966, %v966
        %v999 = vpack.c.b16 %v967, %v967
        %v1000 = vpack.c.b16 %v968, %v968
        %v1001 = vpack.c.b16 %v969, %v969
        %v1002 = vpack.c.b16 %v970, %v970
        %v1003 = vpack.c.b16 %v971, %v971
        %v1004 = vpack.c.b16 %v972, %v972
        %v1005 = vpack.c.b16 %v973, %v973
        %v1006 = vpack.c.b16 %v974, %v974
        %v1007 = vpack.c.b16 %v975, %v975
        %v1008 = vpack.c.b16 %v976, %v976
        %v1009 = vpack.c.b16 %v977, %v977
        %v1010 = vpack.c.b16 %v978, %v978
        %v1011 = vpack.c.b16 %v979, %v979
        %v1012 = vpack.c.b16 %v980, %v980
        %v1013 = vpack.c.b16 %v981, %v981
        %v1014 = vpack.c.b16 %v982, %v982
        %v1015 = vpack.c.b16 %v983, %v983
        %v1016 = vpack.c.b16 %v984, %v984
        %v1017 = vpack.c.b16 %v985, %v985
        %v1018 = vpack.c.b16 %v986, %v986
        %v1019 = vpack.c.b16 %v987, %v987
        %v1020 = vpack.c.b16 %v988, %v988
        %v1021 = vpack.c.b16 %v989, %v989
        %v1022 = vpack.c.b16 %v990, %v990
        %v1023 = vpack.c.b16 %v991, %v991
        %v1024 = vpack.c.b16 %v992, %v992
        %vm1025 = vsmask.f32 4368
        %vm1026 = vmor %vm829, %vm1025
        %v1028 = vshrl.u32 %v993, 16
        %v1030 = vrot.slane %v1028, 7
        %v1031 = vshll.u32 %v993, 16
        %v1033 = vor.u32 %v1030, %v1031
        %v1034 = vrot.slane %v1030, 4
        %v1036 = vshrl.u32 %v994, 16
        %v1038 = vrot.slane %v1036, 7
        %v1039 = vshll.u32 %v994, 16
        %v1041 = vor.u32 %v1038, %v1039
        %v1042 = vsel %vm1026, %v1034, %v1041
        %v1043 = vrot.slane %v1038, 4
        %v1045 = vshrl.u32 %v995, 16
        %v1047 = vrot.slane %v1045, 7
        %v1048 = vshll.u32 %v995, 16
        %v1050 = vor.u32 %v1047, %v1048
        %v1051 = vrot.slane %v1047, 4
        %v1053 = vshrl.u32 %v996, 16
        %v1055 = vrot.slane %v1053, 7
        %v1056 = vshll.u32 %v996, 16
        %v1058 = vor.u32 %v1055, %v1056
        %v1059 = vsel %vm1026, %v1051, %v1058
        %v1060 = vrot.slane %v1055, 4
        %v1062 = vshrl.u32 %v997, 16
        %v1064 = vrot.slane %v1062, 7
        %v1065 = vshll.u32 %v997, 16
        %v1067 = vor.u32 %v1064, %v1065
        %v1068 = vrot.slane %v1064, 4
        %v1070 = vshrl.u32 %v998, 16
        %v1072 = vrot.slane %v1070, 7
        %v1073 = vshll.u32 %v998, 16
        %v1075 = vor.u32 %v1072, %v1073
        %v1076 = vsel %vm1026, %v1068, %v1075
        %v1077 = vrot.slane %v1072, 4
        %v1079 = vshrl.u32 %v999, 16
        %v1081 = vrot.slane %v1079, 7
        %v1082 = vshll.u32 %v999, 16
        %v1084 = vor.u32 %v1081, %v1082
        %v1085 = vrot.slane %v1081, 4
        %v1087 = vshrl.u32 %v1000, 16
        %v1089 = vrot.slane %v1087, 7
        %v1090 = vshll.u32 %v1000, 16
        %v1092 = vor.u32 %v1089, %v1090
        %v1093 = vsel %vm1026, %v1085, %v1092
        %v1094 = vrot.slane %v1089, 4
        %v1096 = vshrl.u32 %v1001, 16
        %v1098 = vrot.slane %v1096, 7
        %v1099 = vshll.u32 %v1001, 16
        %v1101 = vor.u32 %v1098, %v1099
        %v1102 = vrot.slane %v1098, 4
        %v1104 = vshrl.u32 %v1002, 16
        %v1106 = vrot.slane %v1104, 7
        %v1107 = vshll.u32 %v1002, 16
        %v1109 = vor.u32 %v1106, %v1107
        %v1110 = vsel %vm1026, %v1102, %v1109
        %v1111 = vrot.slane %v1106, 4
        %v1113 = vshrl.u32 %v1003, 16
        %v1115 = vrot.slane %v1113, 7
        %v1116 = vshll.u32 %v1003, 16
        %v1118 = vor.u32 %v1115, %v1116
        %v1119 = vrot.slane %v1115, 4
        %v1121 = vshrl.u32 %v1004, 16
        %v1123 = vrot.slane %v1121, 7
        %v1124 = vshll.u32 %v1004, 16
        %v1126 = vor.u32 %v1123, %v1124
        %v1127 = vsel %vm1026, %v1119, %v1126
        %v1128 = vrot.slane %v1123, 4
        %v1130 = vshrl.u32 %v1005, 16
        %v1132 = vrot.slane %v1130, 7
        %v1133 = vshll.u32 %v1005, 16
        %v1135 = vor.u32 %v1132, %v1133
        %v1136 = vrot.slane %v1132, 4
        %v1138 = vshrl.u32 %v1006, 16
        %v1140 = vrot.slane %v1138, 7
        %v1141 = vshll.u32 %v1006, 16
        %v1143 = vor.u32 %v1140, %v1141
        %v1144 = vsel %vm1026, %v1136, %v1143
        %v1145 = vrot.slane %v1140, 4
        %v1147 = vshrl.u32 %v1007, 16
        %v1149 = vrot.slane %v1147, 7
        %v1150 = vshll.u32 %v1007, 16
        %v1152 = vor.u32 %v1149, %v1150
        %v1153 = vrot.slane %v1149, 4
        %v1155 = vshrl.u32 %v1008, 16
        %v1157 = vrot.slane %v1155, 7
        %v1158 = vshll.u32 %v1008, 16
        %v1160 = vor.u32 %v1157, %v1158
        %v1161 = vsel %vm1026, %v1153, %v1160
        %v1162 = vrot.slane %v1157, 4
        %v1164 = vshrl.u32 %v1009, 16
        %v1166 = vrot.slane %v1164, 7
        %v1167 = vshll.u32 %v1009, 16
        %v1169 = vor.u32 %v1166, %v1167
        %v1170 = vrot.slane %v1166, 4
        %v1172 = vshrl.u32 %v1010, 16
        %v1174 = vrot.slane %v1172, 7
        %v1175 = vshll.u32 %v1010, 16
        %v1177 = vor.u32 %v1174, %v1175
        %v1178 = vsel %vm1026, %v1170, %v1177
        %v1179 = vrot.slane %v1174, 4
        %v1181 = vshrl.u32 %v1011, 16
        %v1183 = vrot.slane %v1181, 7
        %v1184 = vshll.u32 %v1011, 16
        %v1186 = vor.u32 %v1183, %v1184
        %v1187 = vrot.slane %v1183, 4
        %v1189 = vshrl.u32 %v1012, 16
        %v1191 = vrot.slane %v1189, 7
        %v1192 = vshll.u32 %v1012, 16
        %v1194 = vor.u32 %v1191, %v1192
        %v1195 = vsel %vm1026, %v1187, %v1194
        %v1196 = vrot.slane %v1191, 4
        %v1198 = vshrl.u32 %v1013, 16
        %v1200 = vrot.slane %v1198, 7
        %v1201 = vshll.u32 %v1013, 16
        %v1203 = vor.u32 %v1200, %v1201
        %v1204 = vrot.slane %v1200, 4
        %v1206 = vshrl.u32 %v1014, 16
        %v1208 = vrot.slane %v1206, 7
        %v1209 = vshll.u32 %v1014, 16
        %v1211 = vor.u32 %v1208, %v1209
        %v1212 = vsel %vm1026, %v1204, %v1211
        %v1213 = vrot.slane %v1208, 4
        %v1215 = vshrl.u32 %v1015, 16
        %v1217 = vrot.slane %v1215, 7
        %v1218 = vshll.u32 %v1015, 16
        %v1220 = vor.u32 %v1217, %v1218
        %v1221 = vrot.slane %v1217, 4
        %v1223 = vshrl.u32 %v1016, 16
        %v1225 = vrot.slane %v1223, 7
        %v1226 = vshll.u32 %v1016, 16
        %v1228 = vor.u32 %v1225, %v1226
        %v1229 = vsel %vm1026, %v1221, %v1228
        %v1230 = vrot.slane %v1225, 4
        %v1232 = vshrl.u32 %v1017, 16
        %v1234 = vrot.slane %v1232, 7
        %v1235 = vshll.u32 %v1017, 16
        %v1237 = vor.u32 %v1234, %v1235
        %v1238 = vrot.slane %v1234, 4
        %v1240 = vshrl.u32 %v1018, 16
        %v1242 = vrot.slane %v1240, 7
        %v1243 = vshll.u32 %v1018, 16
        %v1245 = vor.u32 %v1242, %v1243
        %v1246 = vsel %vm1026, %v1238, %v1245
        %v1247 = vrot.slane %v1242, 4
        %v1249 = vshrl.u32 %v1019, 16
        %v1251 = vrot.slane %v1249, 7
        %v1252 = vshll.u32 %v1019, 16
        %v1254 = vor.u32 %v1251, %v1252
        %v1255 = vrot.slane %v1251, 4
        %v1257 = vshrl.u32 %v1020, 16
        %v1259 = vrot.slane %v1257, 7
        %v1260 = vshll.u32 %v1020, 16
        %v1262 = vor.u32 %v1259, %v1260
        %v1263 = vsel %vm1026, %v1255, %v1262
        %v1264 = vrot.slane %v1259, 4
        %v1266 = vshrl.u32 %v1021, 16
        %v1268 = vrot.slane %v1266, 7
        %v1269 = vshll.u32 %v1021, 16
        %v1271 = vor.u32 %v1268, %v1269
        %v1272 = vrot.slane %v1268, 4
        %v1274 = vshrl.u32 %v1022, 16
        %v1276 = vrot.slane %v1274, 7
        %v1277 = vshll.u32 %v1022, 16
        %v1279 = vor.u32 %v1276, %v1277
        %v1280 = vsel %vm1026, %v1272, %v1279
        %v1281 = vrot.slane %v1276, 4
        %v1283 = vshrl.u32 %v1023, 16
        %v1285 = vrot.slane %v1283, 7
        %v1286 = vshll.u32 %v1023, 16
        %v1288 = vor.u32 %v1285, %v1286
        %v1289 = vrot.slane %v1285, 4
        %v1291 = vshrl.u32 %v1024, 16
        %v1293 = vrot.slane %v1291, 7
        %v1294 = vshll.u32 %v1024, 16
        %v1296 = vor.u32 %v1293, %v1294
        %v1297 = vsel %vm1026, %v1289, %v1296
        %v1298 = vrot.slane %v1293, 4
        %vm1347 = vcmask 519168
        %vm1348 = vmand %vm1347, %vm879
        %v1349 = vld [vmem:[%s827] sm:$0xf]
        %v1350 = vsel %vm1348, %v1033, %v1349
        %1351 = vst [vmem:[%s827] sm:$0xf] %v1350
        %1352 = vst.msk [vmem:[%s827 + $0x4] sm:$0xf] %vm818, %v1042
        %v1353 = vld [vmem:[%s827 + $0x8] sm:$0x1]
        %v1354 = vsel %vm830, %v1043, %v1353
        %1355 = vst [vmem:[%s827 + $0x8] sm:$0x1] %v1354
        %v1356 = vld [vmem:[%s827 + $0xc] sm:$0xf]
        %v1357 = vsel %vm1348, %v1050, %v1356
        %1358 = vst [vmem:[%s827 + $0xc] sm:$0xf] %v1357
        %1359 = vst.msk [vmem:[%s827 + $0x10] sm:$0xf] %vm818, %v1059
        %v1360 = vld [vmem:[%s827 + $0x14] sm:$0x1]
        %v1361 = vsel %vm830, %v1060, %v1360
        %1362 = vst [vmem:[%s827 + $0x14] sm:$0x1] %v1361
        %v1363 = vld [vmem:[%s827 + $0x18] sm:$0xf]
        %v1364 = vsel %vm1348, %v1067, %v1363
        %1365 = vst [vmem:[%s827 + $0x18] sm:$0xf] %v1364
        %1366 = vst.msk [vmem:[%s827 + $0x1c] sm:$0xf] %vm818, %v1076
        %v1367 = vld [vmem:[%s827 + $0x20] sm:$0x1]
        %v1368 = vsel %vm830, %v1077, %v1367
        %1369 = vst [vmem:[%s827 + $0x20] sm:$0x1] %v1368
        %v1370 = vld [vmem:[%s827 + $0x24] sm:$0xf]
        %v1371 = vsel %vm1348, %v1084, %v1370
        %1372 = vst [vmem:[%s827 + $0x24] sm:$0xf] %v1371
        %1373 = vst.msk [vmem:[%s827 + $0x28] sm:$0xf] %vm818, %v1093
        %v1374 = vld [vmem:[%s827 + $0x2c] sm:$0x1]
        %v1375 = vsel %vm830, %v1094, %v1374
        %1376 = vst [vmem:[%s827 + $0x2c] sm:$0x1] %v1375
        %v1377 = vld [vmem:[%s827 + $0x30] sm:$0xf]
        %v1378 = vsel %vm1348, %v1101, %v1377
        %1379 = vst [vmem:[%s827 + $0x30] sm:$0xf] %v1378
        %1380 = vst.msk [vmem:[%s827 + $0x34] sm:$0xf] %vm818, %v1110
        %v1381 = vld [vmem:[%s827 + $0x38] sm:$0x1]
        %v1382 = vsel %vm830, %v1111, %v1381
        %1383 = vst [vmem:[%s827 + $0x38] sm:$0x1] %v1382
        %v1384 = vld [vmem:[%s827 + $0x3c] sm:$0xf]
        %v1385 = vsel %vm1348, %v1118, %v1384
        %1386 = vst [vmem:[%s827 + $0x3c] sm:$0xf] %v1385
        %1387 = vst.msk [vmem:[%s827 + $0x40] sm:$0xf] %vm818, %v1127
        %v1388 = vld [vmem:[%s827 + $0x44] sm:$0x1]
        %v1389 = vsel %vm830, %v1128, %v1388
        %1390 = vst [vmem:[%s827 + $0x44] sm:$0x1] %v1389
        %v1391 = vld [vmem:[%s827 + $0x48] sm:$0xf]
        %v1392 = vsel %vm1348, %v1135, %v1391
        %1393 = vst [vmem:[%s827 + $0x48] sm:$0xf] %v1392
        %1394 = vst.msk [vmem:[%s827 + $0x4c] sm:$0xf] %vm818, %v1144
        %v1395 = vld [vmem:[%s827 + $0x50] sm:$0x1]
        %v1396 = vsel %vm830, %v1145, %v1395
        %1397 = vst [vmem:[%s827 + $0x50] sm:$0x1] %v1396
        %v1398 = vld [vmem:[%s827 + $0x54] sm:$0xf]
        %v1399 = vsel %vm1348, %v1152, %v1398
        %1400 = vst [vmem:[%s827 + $0x54] sm:$0xf] %v1399
        %1401 = vst.msk [vmem:[%s827 + $0x58] sm:$0xf] %vm818, %v1161
        %v1402 = vld [vmem:[%s827 + $0x5c] sm:$0x1]
        %v1403 = vsel %vm830, %v1162, %v1402
        %1404 = vst [vmem:[%s827 + $0x5c] sm:$0x1] %v1403
        %v1405 = vld [vmem:[%s827 + $0x60] sm:$0xf]
        %v1406 = vsel %vm1348, %v1169, %v1405
        %1407 = vst [vmem:[%s827 + $0x60] sm:$0xf] %v1406
        %1408 = vst.msk [vmem:[%s827 + $0x64] sm:$0xf] %vm818, %v1178
        %v1409 = vld [vmem:[%s827 + $0x68] sm:$0x1]
        %v1410 = vsel %vm830, %v1179, %v1409
        %1411 = vst [vmem:[%s827 + $0x68] sm:$0x1] %v1410
        %v1412 = vld [vmem:[%s827 + $0x6c] sm:$0xf]
        %v1413 = vsel %vm1348, %v1186, %v1412
        %1414 = vst [vmem:[%s827 + $0x6c] sm:$0xf] %v1413
        %1415 = vst.msk [vmem:[%s827 + $0x70] sm:$0xf] %vm818, %v1195
        %v1416 = vld [vmem:[%s827 + $0x74] sm:$0x1]
        %v1417 = vsel %vm830, %v1196, %v1416
        %1418 = vst [vmem:[%s827 + $0x74] sm:$0x1] %v1417
        %v1419 = vld [vmem:[%s827 + $0x78] sm:$0xf]
        %v1420 = vsel %vm1348, %v1203, %v1419
        %1421 = vst [vmem:[%s827 + $0x78] sm:$0xf] %v1420
        %1422 = vst.msk [vmem:[%s827 + $0x7c] sm:$0xf] %vm818, %v1212
        %v1423 = vld [vmem:[%s827 + $0x80] sm:$0x1]
        %v1424 = vsel %vm830, %v1213, %v1423
        %1425 = vst [vmem:[%s827 + $0x80] sm:$0x1] %v1424
        %v1426 = vld [vmem:[%s827 + $0x84] sm:$0xf]
        %v1427 = vsel %vm1348, %v1220, %v1426
        %1428 = vst [vmem:[%s827 + $0x84] sm:$0xf] %v1427
        %1429 = vst.msk [vmem:[%s827 + $0x88] sm:$0xf] %vm818, %v1229
        %v1430 = vld [vmem:[%s827 + $0x8c] sm:$0x1]
        %v1431 = vsel %vm830, %v1230, %v1430
        %1432 = vst [vmem:[%s827 + $0x8c] sm:$0x1] %v1431
        %v1433 = vld [vmem:[%s827 + $0x90] sm:$0xf]
        %v1434 = vsel %vm1348, %v1237, %v1433
        %1435 = vst [vmem:[%s827 + $0x90] sm:$0xf] %v1434
        %1436 = vst.msk [vmem:[%s827 + $0x94] sm:$0xf] %vm818, %v1246
        %v1437 = vld [vmem:[%s827 + $0x98] sm:$0x1]
        %v1438 = vsel %vm830, %v1247, %v1437
        %1439 = vst [vmem:[%s827 + $0x98] sm:$0x1] %v1438
        %v1440 = vld [vmem:[%s827 + $0x9c] sm:$0xf]
        %v1441 = vsel %vm1348, %v1254, %v1440
        %1442 = vst [vmem:[%s827 + $0x9c] sm:$0xf] %v1441
        %1443 = vst.msk [vmem:[%s827 + $0xa0] sm:$0xf] %vm818, %v1263
        %v1444 = vld [vmem:[%s827 + $0xa4] sm:$0x1]
        %v1445 = vsel %vm830, %v1264, %v1444
        %1446 = vst [vmem:[%s827 + $0xa4] sm:$0x1] %v1445
        %v1447 = vld [vmem:[%s827 + $0xa8] sm:$0xf]
        %v1448 = vsel %vm1348, %v1271, %v1447
        %1449 = vst [vmem:[%s827 + $0xa8] sm:$0xf] %v1448
        %1450 = vst.msk [vmem:[%s827 + $0xac] sm:$0xf] %vm818, %v1280
        %v1451 = vld [vmem:[%s827 + $0xb0] sm:$0x1]
        %v1452 = vsel %vm830, %v1281, %v1451
        %1453 = vst [vmem:[%s827 + $0xb0] sm:$0x1] %v1452
        %v1454 = vld [vmem:[%s827 + $0xb4] sm:$0xf]
        %v1455 = vsel %vm1348, %v1288, %v1454
        %1456 = vst [vmem:[%s827 + $0xb4] sm:$0xf] %v1455
        %1457 = vst.msk [vmem:[%s827 + $0xb8] sm:$0xf] %vm818, %v1297
        %v1458 = vld [vmem:[%s827 + $0xbc] sm:$0x1]
        %v1459 = vsel %vm830, %v1298, %v1458
        %1460 = vst [vmem:[%s827 + $0xbc] sm:$0x1] %v1459
        %v1461 = vld [vmem:[#allocation2] sm:$0xf]
        %v1462 = vld [vmem:[#allocation2 + $0x4] sm:$0xf]
        %v1463 = vld [vmem:[#allocation2 + $0xc] sm:$0xf]
        %v1464 = vld [vmem:[#allocation2 + $0x10] sm:$0xf]
        %v1465 = vld [vmem:[#allocation2 + $0x18] sm:$0xf]
        %v1466 = vld [vmem:[#allocation2 + $0x1c] sm:$0xf]
        %v1467 = vld [vmem:[#allocation2 + $0x24] sm:$0xf]
        %v1468 = vld [vmem:[#allocation2 + $0x28] sm:$0xf]
        %v1469 = vld [vmem:[#allocation2 + $0x30] sm:$0xf]
        %v1470 = vld [vmem:[#allocation2 + $0x34] sm:$0xf]
        %v1471 = vld [vmem:[#allocation2 + $0x3c] sm:$0xf]
        %v1472 = vld [vmem:[#allocation2 + $0x40] sm:$0xf]
        %v1473 = vld [vmem:[#allocation2 + $0x48] sm:$0xf]
        %v1474 = vld [vmem:[#allocation2 + $0x4c] sm:$0xf]
        %v1475 = vld [vmem:[#allocation2 + $0x54] sm:$0xf]
        %v1476 = vld [vmem:[#allocation2 + $0x58] sm:$0xf]
        %v1477 = vld [vmem:[#allocation2 + $0x60] sm:$0xf]
        %v1478 = vld [vmem:[#allocation2 + $0x64] sm:$0xf]
        %v1479 = vld [vmem:[#allocation2 + $0x6c] sm:$0xf]
        %v1480 = vld [vmem:[#allocation2 + $0x70] sm:$0xf]
        %v1481 = vld [vmem:[#allocation2 + $0x78] sm:$0xf]
        %v1482 = vld [vmem:[#allocation2 + $0x7c] sm:$0xf]
        %v1483 = vld [vmem:[#allocation2 + $0x84] sm:$0xf]
        %v1484 = vld [vmem:[#allocation2 + $0x88] sm:$0xf]
        %v1485 = vld [vmem:[#allocation2 + $0x90] sm:$0xf]
        %v1486 = vld [vmem:[#allocation2 + $0x94] sm:$0xf]
        %v1487 = vld [vmem:[#allocation2 + $0x9c] sm:$0xf]
        %v1488 = vld [vmem:[#allocation2 + $0xa0] sm:$0xf]
        %v1489 = vld [vmem:[#allocation2 + $0xa8] sm:$0xf]
        %v1490 = vld [vmem:[#allocation2 + $0xac] sm:$0xf]
        %v1491 = vld [vmem:[#allocation2 + $0xb4] sm:$0xf]
        %v1492 = vld [vmem:[#allocation2 + $0xb8] sm:$0xf]
        %v1493 = vld [vmem:[%s3] sm:$0xf]
        %v1494 = vld [vmem:[%s3 + $0x4] sm:$0xf]
        %v1495 = vld [vmem:[%s3 + $0x8] sm:$0xf]
        %v1496 = vld [vmem:[%s3 + $0xc] sm:$0xf]
        %v1497 = vld [vmem:[%s3 + $0x10] sm:$0xf]
        %v1498 = vld [vmem:[%s3 + $0x14] sm:$0xf]
        %v1499 = vld [vmem:[%s3 + $0x18] sm:$0xf]
        %v1500 = vld [vmem:[%s3 + $0x1c] sm:$0xf]
        %v1501 = vld [vmem:[#allocation2 + $0x8] sm:$0x1]
        %v1502 = vld [vmem:[#allocation2 + $0x14] sm:$0x1]
        %v1503 = vld [vmem:[#allocation2 + $0x20] sm:$0x1]
        %v1504 = vld [vmem:[#allocation2 + $0x2c] sm:$0x1]
        %v1505 = vld [vmem:[#allocation2 + $0x38] sm:$0x1]
        %v1506 = vld [vmem:[#allocation2 + $0x44] sm:$0x1]
        %v1507 = vld [vmem:[#allocation2 + $0x50] sm:$0x1]
        %v1508 = vld [vmem:[#allocation2 + $0x5c] sm:$0x1]
        %v1509 = vld [vmem:[#allocation2 + $0x68] sm:$0x1]
        %v1510 = vld [vmem:[#allocation2 + $0x74] sm:$0x1]
        %v1511 = vld [vmem:[#allocation2 + $0x80] sm:$0x1]
        %v1512 = vld [vmem:[#allocation2 + $0x8c] sm:$0x1]
        %v1513 = vld [vmem:[#allocation2 + $0x98] sm:$0x1]
        %v1514 = vld [vmem:[#allocation2 + $0xa4] sm:$0x1]
        %v1515 = vld [vmem:[#allocation2 + $0xb0] sm:$0x1]
        %v1516 = vld [vmem:[#allocation2 + $0xbc] sm:$0x1]
        %vm1517 = vsmask.f32 3328
        %vm1518 = vsmask.f32 7440
        %vm1519 = vmor %vm1517, %vm1518
        %v1521 = vshrl.u32 %v1461, 16
        %v1523 = vrot.slane %v1521, 4
        %v1524 = vshll.u32 %v1461, 16
        %v1526 = vrot.slane %v1524, 5
        %v1527 = vor.u32 %v1523, %v1526
        %v1528 = vrot.slane %v1527, 4
        %v1530 = vshll.u32 %v1462, 16
        %v1532 = vrot.slane %v1530, 5
        %v1533 = vsel %vm1519, %v1528, %v1532
        %v1534 = vshrl.u32 %v1462, 16
        %v1536 = vrot.slane %v1534, 4
        %v1537 = vor.u32 %v1536, %v1532
        %v1538 = vrot.slane %v1537, 4
        %v1540 = vshll.u32 %v1501, 16
        %v1542 = vrot.slane %v1540, 5
        %v1543 = vsel %vm1519, %v1538, %v1542
        %v1545 = vshrl.u32 %v1463, 16
        %v1547 = vrot.slane %v1545, 4
        %v1548 = vshll.u32 %v1463, 16
        %v1550 = vrot.slane %v1548, 5
        %v1551 = vor.u32 %v1547, %v1550
        %v1552 = vrot.slane %v1551, 4
        %v1554 = vshll.u32 %v1464, 16
        %v1556 = vrot.slane %v1554, 5
        %v1557 = vsel %vm1519, %v1552, %v1556
        %v1558 = vshrl.u32 %v1464, 16
        %v1560 = vrot.slane %v1558, 4
        %v1561 = vor.u32 %v1560, %v1556
        %v1562 = vrot.slane %v1561, 4
        %v1564 = vshll.u32 %v1502, 16
        %v1566 = vrot.slane %v1564, 5
        %v1567 = vsel %vm1519, %v1562, %v1566
        %v1569 = vshrl.u32 %v1465, 16
        %v1571 = vrot.slane %v1569, 4
        %v1572 = vshll.u32 %v1465, 16
        %v1574 = vrot.slane %v1572, 5
        %v1575 = vor.u32 %v1571, %v1574
        %v1576 = vrot.slane %v1575, 4
        %v1578 = vshll.u32 %v1466, 16
        %v1580 = vrot.slane %v1578, 5
        %v1581 = vsel %vm1519, %v1576, %v1580
        %v1582 = vshrl.u32 %v1466, 16
        %v1584 = vrot.slane %v1582, 4
        %v1585 = vor.u32 %v1584, %v1580
        %v1586 = vrot.slane %v1585, 4
        %v1588 = vshll.u32 %v1503, 16
        %v1590 = vrot.slane %v1588, 5
        %v1591 = vsel %vm1519, %v1586, %v1590
        %v1593 = vshrl.u32 %v1467, 16
        %v1595 = vrot.slane %v1593, 4
        %v1596 = vshll.u32 %v1467, 16
        %v1598 = vrot.slane %v1596, 5
        %v1599 = vor.u32 %v1595, %v1598
        %v1600 = vrot.slane %v1599, 4
        %v1602 = vshll.u32 %v1468, 16
        %v1604 = vrot.slane %v1602, 5
        %v1605 = vsel %vm1519, %v1600, %v1604
        %v1606 = vshrl.u32 %v1468, 16
        %v1608 = vrot.slane %v1606, 4
        %v1609 = vor.u32 %v1608, %v1604
        %v1610 = vrot.slane %v1609, 4
        %v1612 = vshll.u32 %v1504, 16
        %v1614 = vrot.slane %v1612, 5
        %v1615 = vsel %vm1519, %v1610, %v1614
        %v1617 = vshrl.u32 %v1469, 16
        %v1619 = vrot.slane %v1617, 4
        %v1620 = vshll.u32 %v1469, 16
        %v1622 = vrot.slane %v1620, 5
        %v1623 = vor.u32 %v1619, %v1622
        %v1624 = vrot.slane %v1623, 4
        %v1626 = vshll.u32 %v1470, 16
        %v1628 = vrot.slane %v1626, 5
        %v1629 = vsel %vm1519, %v1624, %v1628
        %v1630 = vshrl.u32 %v1470, 16
        %v1632 = vrot.slane %v1630, 4
        %v1633 = vor.u32 %v1632, %v1628
        %v1634 = vrot.slane %v1633, 4
        %v1636 = vshll.u32 %v1505, 16
        %v1638 = vrot.slane %v1636, 5
        %v1639 = vsel %vm1519, %v1634, %v1638
        %v1641 = vshrl.u32 %v1471, 16
        %v1643 = vrot.slane %v1641, 4
        %v1644 = vshll.u32 %v1471, 16
        %v1646 = vrot.slane %v1644, 5
        %v1647 = vor.u32 %v1643, %v1646
        %v1648 = vrot.slane %v1647, 4
        %v1650 = vshll.u32 %v1472, 16
        %v1652 = vrot.slane %v1650, 5
        %v1653 = vsel %vm1519, %v1648, %v1652
        %v1654 = vshrl.u32 %v1472, 16
        %v1656 = vrot.slane %v1654, 4
        %v1657 = vor.u32 %v1656, %v1652
        %v1658 = vrot.slane %v1657, 4
        %v1660 = vshll.u32 %v1506, 16
        %v1662 = vrot.slane %v1660, 5
        %v1663 = vsel %vm1519, %v1658, %v1662
        %v1665 = vshrl.u32 %v1473, 16
        %v1667 = vrot.slane %v1665, 4
        %v1668 = vshll.u32 %v1473, 16
        %v1670 = vrot.slane %v1668, 5
        %v1671 = vor.u32 %v1667, %v1670
        %v1672 = vrot.slane %v1671, 4
        %v1674 = vshll.u32 %v1474, 16
        %v1676 = vrot.slane %v1674, 5
        %v1677 = vsel %vm1519, %v1672, %v1676
        %v1678 = vshrl.u32 %v1474, 16
        %v1680 = vrot.slane %v1678, 4
        %v1681 = vor.u32 %v1680, %v1676
        %v1682 = vrot.slane %v1681, 4
        %v1684 = vshll.u32 %v1507, 16
        %v1686 = vrot.slane %v1684, 5
        %v1687 = vsel %vm1519, %v1682, %v1686
        %v1689 = vshrl.u32 %v1475, 16
        %v1691 = vrot.slane %v1689, 4
        %v1692 = vshll.u32 %v1475, 16
        %v1694 = vrot.slane %v1692, 5
        %v1695 = vor.u32 %v1691, %v1694
        %v1696 = vrot.slane %v1695, 4
        %v1698 = vshll.u32 %v1476, 16
        %v1700 = vrot.slane %v1698, 5
        %v1701 = vsel %vm1519, %v1696, %v1700
        %v1702 = vshrl.u32 %v1476, 16
        %v1704 = vrot.slane %v1702, 4
        %v1705 = vor.u32 %v1704, %v1700
        %v1706 = vrot.slane %v1705, 4
        %v1708 = vshll.u32 %v1508, 16
        %v1710 = vrot.slane %v1708, 5
        %v1711 = vsel %vm1519, %v1706, %v1710
        %v1713 = vshrl.u32 %v1477, 16
        %v1715 = vrot.slane %v1713, 4
        %v1716 = vshll.u32 %v1477, 16
        %v1718 = vrot.slane %v1716, 5
        %v1719 = vor.u32 %v1715, %v1718
        %v1720 = vrot.slane %v1719, 4
        %v1722 = vshll.u32 %v1478, 16
        %v1724 = vrot.slane %v1722, 5
        %v1725 = vsel %vm1519, %v1720, %v1724
        %v1726 = vshrl.u32 %v1478, 16
        %v1728 = vrot.slane %v1726, 4
        %v1729 = vor.u32 %v1728, %v1724
        %v1730 = vrot.slane %v1729, 4
        %v1732 = vshll.u32 %v1509, 16
        %v1734 = vrot.slane %v1732, 5
        %v1735 = vsel %vm1519, %v1730, %v1734
        %v1737 = vshrl.u32 %v1479, 16
        %v1739 = vrot.slane %v1737, 4
        %v1740 = vshll.u32 %v1479, 16
        %v1742 = vrot.slane %v1740, 5
        %v1743 = vor.u32 %v1739, %v1742
        %v1744 = vrot.slane %v1743, 4
        %v1746 = vshll.u32 %v1480, 16
        %v1748 = vrot.slane %v1746, 5
        %v1749 = vsel %vm1519, %v1744, %v1748
        %v1750 = vshrl.u32 %v1480, 16
        %v1752 = vrot.slane %v1750, 4
        %v1753 = vor.u32 %v1752, %v1748
        %v1754 = vrot.slane %v1753, 4
        %v1756 = vshll.u32 %v1510, 16
        %v1758 = vrot.slane %v1756, 5
        %v1759 = vsel %vm1519, %v1754, %v1758
        %v1761 = vshrl.u32 %v1481, 16
        %v1763 = vrot.slane %v1761, 4
        %v1764 = vshll.u32 %v1481, 16
        %v1766 = vrot.slane %v1764, 5
        %v1767 = vor.u32 %v1763, %v1766
        %v1768 = vrot.slane %v1767, 4
        %v1770 = vshll.u32 %v1482, 16
        %v1772 = vrot.slane %v1770, 5
        %v1773 = vsel %vm1519, %v1768, %v1772
        %v1774 = vshrl.u32 %v1482, 16
        %v1776 = vrot.slane %v1774, 4
        %v1777 = vor.u32 %v1776, %v1772
        %v1778 = vrot.slane %v1777, 4
        %v1780 = vshll.u32 %v1511, 16
        %v1782 = vrot.slane %v1780, 5
        %v1783 = vsel %vm1519, %v1778, %v1782
        %v1785 = vshrl.u32 %v1483, 16
        %v1787 = vrot.slane %v1785, 4
        %v1788 = vshll.u32 %v1483, 16
        %v1790 = vrot.slane %v1788, 5
        %v1791 = vor.u32 %v1787, %v1790
        %v1792 = vrot.slane %v1791, 4
        %v1794 = vshll.u32 %v1484, 16
        %v1796 = vrot.slane %v1794, 5
        %v1797 = vsel %vm1519, %v1792, %v1796
        %v1798 = vshrl.u32 %v1484, 16
        %v1800 = vrot.slane %v1798, 4
        %v1801 = vor.u32 %v1800, %v1796
        %v1802 = vrot.slane %v1801, 4
        %v1804 = vshll.u32 %v1512, 16
        %v1806 = vrot.slane %v1804, 5
        %v1807 = vsel %vm1519, %v1802, %v1806
        %v1809 = vshrl.u32 %v1485, 16
        %v1811 = vrot.slane %v1809, 4
        %v1812 = vshll.u32 %v1485, 16
        %v1814 = vrot.slane %v1812, 5
        %v1815 = vor.u32 %v1811, %v1814
        %v1816 = vrot.slane %v1815, 4
        %v1818 = vshll.u32 %v1486, 16
        %v1820 = vrot.slane %v1818, 5
        %v1821 = vsel %vm1519, %v1816, %v1820
        %v1822 = vshrl.u32 %v1486, 16
        %v1824 = vrot.slane %v1822, 4
        %v1825 = vor.u32 %v1824, %v1820
        %v1826 = vrot.slane %v1825, 4
        %v1828 = vshll.u32 %v1513, 16
        %v1830 = vrot.slane %v1828, 5
        %v1831 = vsel %vm1519, %v1826, %v1830
        %v1833 = vshrl.u32 %v1487, 16
        %v1835 = vrot.slane %v1833, 4
        %v1836 = vshll.u32 %v1487, 16
        %v1838 = vrot.slane %v1836, 5
        %v1839 = vor.u32 %v1835, %v1838
        %v1840 = vrot.slane %v1839, 4
        %v1842 = vshll.u32 %v1488, 16
        %v1844 = vrot.slane %v1842, 5
        %v1845 = vsel %vm1519, %v1840, %v1844
        %v1846 = vshrl.u32 %v1488, 16
        %v1848 = vrot.slane %v1846, 4
        %v1849 = vor.u32 %v1848, %v1844
        %v1850 = vrot.slane %v1849, 4
        %v1852 = vshll.u32 %v1514, 16
        %v1854 = vrot.slane %v1852, 5
        %v1855 = vsel %vm1519, %v1850, %v1854
        %v1857 = vshrl.u32 %v1489, 16
        %v1859 = vrot.slane %v1857, 4
        %v1860 = vshll.u32 %v1489, 16
        %v1862 = vrot.slane %v1860, 5
        %v1863 = vor.u32 %v1859, %v1862
        %v1864 = vrot.slane %v1863, 4
        %v1866 = vshll.u32 %v1490, 16
        %v1868 = vrot.slane %v1866, 5
        %v1869 = vsel %vm1519, %v1864, %v1868
        %v1870 = vshrl.u32 %v1490, 16
        %v1872 = vrot.slane %v1870, 4
        %v1873 = vor.u32 %v1872, %v1868
        %v1874 = vrot.slane %v1873, 4
        %v1876 = vshll.u32 %v1515, 16
        %v1878 = vrot.slane %v1876, 5
        %v1879 = vsel %vm1519, %v1874, %v1878
        %v1881 = vshrl.u32 %v1491, 16
        %v1883 = vrot.slane %v1881, 4
        %v1884 = vshll.u32 %v1491, 16
        %v1886 = vrot.slane %v1884, 5
        %v1887 = vor.u32 %v1883, %v1886
        %v1888 = vrot.slane %v1887, 4
        %v1890 = vshll.u32 %v1492, 16
        %v1892 = vrot.slane %v1890, 5
        %v1893 = vsel %vm1519, %v1888, %v1892
        %v1894 = vshrl.u32 %v1492, 16
        %v1896 = vrot.slane %v1894, 4
        %v1897 = vor.u32 %v1896, %v1892
        %v1898 = vrot.slane %v1897, 4
        %v1900 = vshll.u32 %v1516, 16
        %v1902 = vrot.slane %v1900, 5
        %v1903 = vsel %vm1519, %v1898, %v1902
        %v1904 = vld [vmem:[%s3 + $0x20] sm:$0xf]
        %v1905 = vld [vmem:[%s3 + $0x24] sm:$0xf]
        %v1906 = vld [vmem:[%s3 + $0x28] sm:$0xf]
        %v1907 = vld [vmem:[%s3 + $0x2c] sm:$0xf]
        %v1908 = vld [vmem:[%s3 + $0x30] sm:$0xf]
        %v1909 = vld [vmem:[%s3 + $0x34] sm:$0xf]
        %v1910 = vld [vmem:[%s3 + $0x38] sm:$0xf]
        %v1911 = vld [vmem:[%s3 + $0x3c] sm:$0xf]
        %v1912 = vunpack.c.l.b16 %v1533
        %v1913 = vunpack.c.l.b16 %v1543
        %v1914 = vunpack.c.l.b16 %v1557
        %v1915 = vunpack.c.l.b16 %v1567
        %v1916 = vunpack.c.l.b16 %v1581
        %v1917 = vunpack.c.l.b16 %v1591
        %v1918 = vunpack.c.l.b16 %v1605
        %v1919 = vunpack.c.l.b16 %v1615
        %v1920 = vunpack.c.l.b16 %v1629
        %v1921 = vunpack.c.l.b16 %v1639
        %v1922 = vunpack.c.l.b16 %v1653
        %v1923 = vunpack.c.l.b16 %v1663
        %v1924 = vunpack.c.l.b16 %v1677
        %v1925 = vunpack.c.l.b16 %v1687
        %v1926 = vunpack.c.l.b16 %v1701
        %v1927 = vunpack.c.l.b16 %v1711
        %v1928 = vunpack.c.l.b16 %v1725
        %v1929 = vunpack.c.l.b16 %v1735
        %v1930 = vunpack.c.l.b16 %v1749
        %v1931 = vunpack.c.l.b16 %v1759
        %v1932 = vunpack.c.l.b16 %v1773
        %v1933 = vunpack.c.l.b16 %v1783
        %v1934 = vunpack.c.l.b16 %v1797
        %v1935 = vunpack.c.l.b16 %v1807
        %v1936 = vunpack.c.l.b16 %v1821
        %v1937 = vunpack.c.l.b16 %v1831
        %v1938 = vunpack.c.l.b16 %v1845
        %v1939 = vunpack.c.l.b16 %v1855
        %v1940 = vunpack.c.l.b16 %v1869
        %v1941 = vunpack.c.l.b16 %v1879
        %v1942 = vunpack.c.l.b16 %v1893
        %v1943 = vunpack.c.l.b16 %v1903
        %v1944 = vpack.c.b16 %v1913, %v1912
        %v1945 = vpack.c.b16 %v1915, %v1914
        %v1946 = vpack.c.b16 %v1917, %v1916
        %v1947 = vpack.c.b16 %v1919, %v1918
        %v1948 = vpack.c.b16 %v1921, %v1920
        %v1949 = vpack.c.b16 %v1923, %v1922
        %v1950 = vpack.c.b16 %v1925, %v1924
        %v1951 = vpack.c.b16 %v1927, %v1926
        %v1952 = vpack.c.b16 %v1929, %v1928
        %v1953 = vpack.c.b16 %v1931, %v1930
        %v1954 = vpack.c.b16 %v1933, %v1932
        %v1955 = vpack.c.b16 %v1935, %v1934
        %v1956 = vpack.c.b16 %v1937, %v1936
        %v1957 = vpack.c.b16 %v1939, %v1938
        %v1958 = vpack.c.b16 %v1941, %v1940
        %v1959 = vpack.c.b16 %v1943, %v1942
        %v1968 = vunpack.c.l.b16 %v1904
        %v1969 = vunpack.c.l.b16 %v1905
        %v1970 = vunpack.c.l.b16 %v1906
        %v1971 = vunpack.c.l.b16 %v1907
        %v1972 = vunpack.c.l.b16 %v1908
        %v1973 = vunpack.c.l.b16 %v1909
        %v1974 = vunpack.c.l.b16 %v1910
        %v1975 = vunpack.c.l.b16 %v1911
        %v1976 = vpack.c.b16 %v1969, %v1968
        %v1977 = vpack.c.b16 %v1971, %v1970
        %v1978 = vpack.c.b16 %v1973, %v1972
        %v1979 = vpack.c.b16 %v1975, %v1974
        %vm1984 = vcmask 523264
        %v1986 = vsel %vm1984, %v1944, 0
        %v1989 = vsel %vm1984, %v1945, 0
        %v1992 = vsel %vm1984, %v1946, 0
        %v1995 = vsel %vm1984, %v1947, 0
        %v1998 = vsel %vm1984, %v1948, 0
        %v2001 = vsel %vm1984, %v1949, 0
        %v2004 = vsel %vm1984, %v1950, 0
        %v2007 = vsel %vm1984, %v1951, 0
        %v2010 = vsel %vm1984, %v1952, 0
        %v2013 = vsel %vm1984, %v1953, 0
        %v2016 = vsel %vm1984, %v1954, 0
        %v2019 = vsel %vm1984, %v1955, 0
        %v2022 = vsel %vm1984, %v1956, 0
        %v2025 = vsel %vm1984, %v1957, 0
        %v2028 = vsel %vm1984, %v1958, 0
        %v2031 = vsel %vm1984, %v1959, 0
        %2033 = vmatprep.subr.bf16.mxu0 0
        %2034 = vmatpush1.bf16.msra.mxu0 %v1976
        %2035 = vmatprep.subr.bf16.mxu0 0
        %2036 = vmatpush1.bf16.msra.mxu0 %v1977
        %2037 = vmatprep.subr.bf16.mxu0 0
        %2038 = vmatpush1.bf16.msra.mxu0 %v1978
        %2039 = vmatprep.subr.bf16.mxu0 0
        %2040 = vmatpush1.bf16.msra.mxu0 %v1979
        %2041 = vmatprep.subr.bf16.mxu0 0
        %2042 = vmatpush1.bf16.msra.mxu0 0
        %2043 = vmatprep.subr.bf16.mxu0 0
        %2044 = vmatpush1.bf16.msra.mxu0 0
        %2045 = vmatprep.subr.bf16.mxu0 0
        %2046 = vmatpush1.bf16.msra.mxu0 0
        %2047 = vmatprep.subr.bf16.mxu0 0
        %2048 = vmatpush1.bf16.msra.mxu0 0
        %2049 = vmatprep.subr.bf16.mxu0 0
        %2050 = vmatpush1.bf16.msra.mxu0 0
        %2051 = vmatprep.subr.bf16.mxu0 0
        %2052 = vmatpush1.bf16.msra.mxu0 0
        %2053 = vmatprep.subr.bf16.mxu0 0
        %2054 = vmatpush1.bf16.msra.mxu0 0
        %2055 = vmatprep.subr.bf16.mxu0 0
        %2056 = vmatpush1.bf16.msra.mxu0 0
        %2057 = vmatprep.subr.bf16.mxu0 0
        %2058 = vmatpush1.bf16.msra.mxu0 0
        %2059 = vmatprep.subr.bf16.mxu0 0
        %2060 = vmatpush1.bf16.msra.mxu0 0
        %2061 = vmatprep.subr.bf16.mxu0 0
        %2062 = vmatpush1.bf16.msra.mxu0 0
        %2063 = vmatprep.subr.bf16.mxu0 0
        %2064 = vmatpush1.bf16.msra.mxu0 0
        %2065 = vmatprep.mubr.bf16.mxu0 0
        %2066 = vmatmul.mubr.bf16.gmra.mrb[0].mxu0 %v1986
        %v2067 = vpop.f32.mrb[0].mxu0
        %v2068 = vadd.f32 0.0, %v2067
        %v2069 = vpop.f32.mrb[0].mxu0
        %v2070 = vpop.f32.mrb[0].mxu0
        %v2071 = vadd.f32 0.0, %v2070
        %v2072 = vpop.f32.mrb[0].mxu0
        %2073 = vmatprep.mubr.bf16.mxu0 0
        %2074 = vmatmul.mubr.bf16.gmra.mrb[0].mxu0 %v1989
        %v2075 = vpop.f32.mrb[0].mxu0
        %v2076 = vadd.f32 0.0, %v2075
        %v2077 = vpop.f32.mrb[0].mxu0
        %v2078 = vpop.f32.mrb[0].mxu0
        %v2079 = vadd.f32 0.0, %v2078
        %v2080 = vpop.f32.mrb[0].mxu0
        %2081 = vmatprep.mubr.bf16.mxu0 0
        %2082 = vmatmul.mubr.bf16.gmra.mrb[0].mxu0 %v1992
        %v2083 = vpop.f32.mrb[0].mxu0
        %v2084 = vadd.f32 0.0, %v2083
        %v2085 = vpop.f32.mrb[0].mxu0
        %v2086 = vpop.f32.mrb[0].mxu0
        %v2087 = vadd.f32 0.0, %v2086
        %v2088 = vpop.f32.mrb[0].mxu0
        %2089 = vmatprep.mubr.bf16.mxu0 0
        %2090 = vmatmul.mubr.bf16.gmra.mrb[0].mxu0 %v1995
        %v2091 = vpop.f32.mrb[0].mxu0
        %v2092 = vadd.f32 0.0, %v2091
        %v2093 = vpop.f32.mrb[0].mxu0
        %v2094 = vpop.f32.mrb[0].mxu0
        %v2095 = vadd.f32 0.0, %v2094
        %v2096 = vpop.f32.mrb[0].mxu0
        %2097 = vmatprep.mubr.bf16.mxu0 0
        %2098 = vmatmul.mubr.bf16.gmra.mrb[0].mxu0 %v1998
        %v2099 = vpop.f32.mrb[0].mxu0
        %v2100 = vadd.f32 0.0, %v2099
        %v2101 = vpop.f32.mrb[0].mxu0
        %v2102 = vpop.f32.mrb[0].mxu0
        %v2103 = vadd.f32 0.0, %v2102
        %v2104 = vpop.f32.mrb[0].mxu0
        %2105 = vmatprep.mubr.bf16.mxu0 0
        %2106 = vmatmul.mubr.bf16.gmra.mrb[0].mxu0 %v2001
        %v2107 = vpop.f32.mrb[0].mxu0
        %v2108 = vadd.f32 0.0, %v2107
        %v2109 = vpop.f32.mrb[0].mxu0
        %v2110 = vpop.f32.mrb[0].mxu0
        %v2111 = vadd.f32 0.0, %v2110
        %v2112 = vpop.f32.mrb[0].mxu0
        %2113 = vmatprep.mubr.bf16.mxu0 0
        %2114 = vmatmul.mubr.bf16.gmra.mrb[0].mxu0 %v2004
        %v2115 = vpop.f32.mrb[0].mxu0
        %v2116 = vadd.f32 0.0, %v2115
        %v2117 = vpop.f32.mrb[0].mxu0
        %v2118 = vpop.f32.mrb[0].mxu0
        %v2119 = vadd.f32 0.0, %v2118
        %v2120 = vpop.f32.mrb[0].mxu0
        %2121 = vmatprep.mubr.bf16.mxu0 0
        %2122 = vmatmul.mubr.bf16.gmra.mrb[0].mxu0 %v2007
        %v2123 = vpop.f32.mrb[0].mxu0
        %v2124 = vadd.f32 0.0, %v2123
        %v2125 = vpop.f32.mrb[0].mxu0
        %v2126 = vpop.f32.mrb[0].mxu0
        %v2127 = vadd.f32 0.0, %v2126
        %v2128 = vpop.f32.mrb[0].mxu0
        %2129 = vmatprep.mubr.bf16.mxu0 0
        %2130 = vmatmul.mubr.bf16.gmra.mrb[0].mxu0 %v2010
        %v2131 = vpop.f32.mrb[0].mxu0
        %v2132 = vadd.f32 0.0, %v2131
        %v2133 = vpop.f32.mrb[0].mxu0
        %v2134 = vpop.f32.mrb[0].mxu0
        %v2135 = vadd.f32 0.0, %v2134
        %v2136 = vpop.f32.mrb[0].mxu0
        %2137 = vmatprep.mubr.bf16.mxu0 0
        %2138 = vmatmul.mubr.bf16.gmra.mrb[0].mxu0 %v2013
        %v2139 = vpop.f32.mrb[0].mxu0
        %v2140 = vadd.f32 0.0, %v2139
        %v2141 = vpop.f32.mrb[0].mxu0
        %v2142 = vpop.f32.mrb[0].mxu0
        %v2143 = vadd.f32 0.0, %v2142
        %v2144 = vpop.f32.mrb[0].mxu0
        %2145 = vmatprep.mubr.bf16.mxu0 0
        %2146 = vmatmul.mubr.bf16.gmra.mrb[0].mxu0 %v2016
        %v2147 = vpop.f32.mrb[0].mxu0
        %v2148 = vadd.f32 0.0, %v2147
        %v2149 = vpop.f32.mrb[0].mxu0
        %v2150 = vpop.f32.mrb[0].mxu0
        %v2151 = vadd.f32 0.0, %v2150
        %v2152 = vpop.f32.mrb[0].mxu0
        %2153 = vmatprep.mubr.bf16.mxu0 0
        %2154 = vmatmul.mubr.bf16.gmra.mrb[0].mxu0 %v2019
        %v2155 = vpop.f32.mrb[0].mxu0
        %v2156 = vadd.f32 0.0, %v2155
        %v2157 = vpop.f32.mrb[0].mxu0
        %v2158 = vpop.f32.mrb[0].mxu0
        %v2159 = vadd.f32 0.0, %v2158
        %v2160 = vpop.f32.mrb[0].mxu0
        %2161 = vmatprep.mubr.bf16.mxu0 0
        %2162 = vmatmul.mubr.bf16.gmra.mrb[0].mxu0 %v2022
        %v2163 = vpop.f32.mrb[0].mxu0
        %v2164 = vadd.f32 0.0, %v2163
        %v2165 = vpop.f32.mrb[0].mxu0
        %v2166 = vpop.f32.mrb[0].mxu0
        %v2167 = vadd.f32 0.0, %v2166
        %v2168 = vpop.f32.mrb[0].mxu0
        %2169 = vmatprep.mubr.bf16.mxu0 0
        %2170 = vmatmul.mubr.bf16.gmra.mrb[0].mxu0 %v2025
        %v2171 = vpop.f32.mrb[0].mxu0
        %v2172 = vadd.f32 0.0, %v2171
        %v2173 = vpop.f32.mrb[0].mxu0
        %v2174 = vpop.f32.mrb[0].mxu0
        %v2175 = vadd.f32 0.0, %v2174
        %v2176 = vpop.f32.mrb[0].mxu0
        %2177 = vmatprep.mubr.bf16.mxu0 0
        %2178 = vmatmul.mubr.bf16.gmra.mrb[0].mxu0 %v2028
        %v2179 = vpop.f32.mrb[0].mxu0
        %v2180 = vadd.f32 0.0, %v2179
        %v2181 = vpop.f32.mrb[0].mxu0
        %v2182 = vpop.f32.mrb[0].mxu0
        %v2183 = vadd.f32 0.0, %v2182
        %v2184 = vpop.f32.mrb[0].mxu0
        %2185 = vmatprep.mubr.bf16.mxu0 0
        %2186 = vmatmul.mubr.bf16.gmra.mrb[0].mxu0 %v2031
        %v2187 = vpop.f32.mrb[0].mxu0
        %v2188 = vadd.f32 0.0, %v2187
        %v2189 = vpop.f32.mrb[0].mxu0
        %v2190 = vpop.f32.mrb[0].mxu0
        %v2191 = vadd.f32 0.0, %v2190
        %v2192 = vpop.f32.mrb[0].mxu0
        %2193 = vdwg.mxu0
        %v2226 = vunpack.c.l.b16 %v1461
        %v2227 = vunpack.c.l.b16 %v1462
        %v2228 = vunpack.c.l.b16 %v1463
        %v2229 = vunpack.c.l.b16 %v1464
        %v2230 = vunpack.c.l.b16 %v1465
        %v2231 = vunpack.c.l.b16 %v1466
        %v2232 = vunpack.c.l.b16 %v1467
        %v2233 = vunpack.c.l.b16 %v1468
        %v2234 = vunpack.c.l.b16 %v1469
        %v2235 = vunpack.c.l.b16 %v1470
        %v2236 = vunpack.c.l.b16 %v1471
        %v2237 = vunpack.c.l.b16 %v1472
        %v2238 = vunpack.c.l.b16 %v1473
        %v2239 = vunpack.c.l.b16 %v1474
        %v2240 = vunpack.c.l.b16 %v1475
        %v2241 = vunpack.c.l.b16 %v1476
        %v2242 = vunpack.c.l.b16 %v1477
        %v2243 = vunpack.c.l.b16 %v1478
        %v2244 = vunpack.c.l.b16 %v1479
        %v2245 = vunpack.c.l.b16 %v1480
        %v2246 = vunpack.c.l.b16 %v1481
        %v2247 = vunpack.c.l.b16 %v1482
        %v2248 = vunpack.c.l.b16 %v1483
        %v2249 = vunpack.c.l.b16 %v1484
        %v2250 = vunpack.c.l.b16 %v1485
        %v2251 = vunpack.c.l.b16 %v1486
        %v2252 = vunpack.c.l.b16 %v1487
        %v2253 = vunpack.c.l.b16 %v1488
        %v2254 = vunpack.c.l.b16 %v1489
        %v2255 = vunpack.c.l.b16 %v1490
        %v2256 = vunpack.c.l.b16 %v1491
        %v2257 = vunpack.c.l.b16 %v1492
        %v2258 = vpack.c.b16 %v2227, %v2226
        %v2259 = vpack.c.b16 %v2229, %v2228
        %v2260 = vpack.c.b16 %v2231, %v2230
        %v2261 = vpack.c.b16 %v2233, %v2232
        %v2262 = vpack.c.b16 %v2235, %v2234
        %v2263 = vpack.c.b16 %v2237, %v2236
        %v2264 = vpack.c.b16 %v2239, %v2238
        %v2265 = vpack.c.b16 %v2241, %v2240
        %v2266 = vpack.c.b16 %v2243, %v2242
        %v2267 = vpack.c.b16 %v2245, %v2244
        %v2268 = vpack.c.b16 %v2247, %v2246
        %v2269 = vpack.c.b16 %v2249, %v2248
        %v2270 = vpack.c.b16 %v2251, %v2250
        %v2271 = vpack.c.b16 %v2253, %v2252
        %v2272 = vpack.c.b16 %v2255, %v2254
        %v2273 = vpack.c.b16 %v2257, %v2256
        %v2282 = vunpack.c.l.b16 %v1493
        %v2283 = vunpack.c.l.b16 %v1494
        %v2284 = vunpack.c.l.b16 %v1495
        %v2285 = vunpack.c.l.b16 %v1496
        %v2286 = vunpack.c.l.b16 %v1497
        %v2287 = vunpack.c.l.b16 %v1498
        %v2288 = vunpack.c.l.b16 %v1499
        %v2289 = vunpack.c.l.b16 %v1500
        %v2290 = vpack.c.b16 %v2283, %v2282
        %v2291 = vpack.c.b16 %v2285, %v2284
        %v2292 = vpack.c.b16 %v2287, %v2286
        %v2293 = vpack.c.b16 %v2289, %v2288
        %v2299 = vsel %vm1984, %v2258, 0
        %v2302 = vsel %vm1984, %v2259, 0
        %v2305 = vsel %vm1984, %v2260, 0
        %v2308 = vsel %vm1984, %v2261, 0
        %v2311 = vsel %vm1984, %v2262, 0
        %v2314 = vsel %vm1984, %v2263, 0
        %v2317 = vsel %vm1984, %v2264, 0
        %v2320 = vsel %vm1984, %v2265, 0
        %v2323 = vsel %vm1984, %v2266, 0
        %v2326 = vsel %vm1984, %v2267, 0
        %v2329 = vsel %vm1984, %v2268, 0
        %v2332 = vsel %vm1984, %v2269, 0
        %v2335 = vsel %vm1984, %v2270, 0
        %v2338 = vsel %vm1984, %v2271, 0
        %v2341 = vsel %vm1984, %v2272, 0
        %v2344 = vsel %vm1984, %v2273, 0
        %2346 = vmatprep.subr.bf16.mxu0 0
        %2347 = vmatpush1.bf16.msra.mxu0 %v2290
        %2348 = vmatprep.subr.bf16.mxu0 0
        %2349 = vmatpush1.bf16.msra.mxu0 %v2291
        %2350 = vmatprep.subr.bf16.mxu0 0
        %2351 = vmatpush1.bf16.msra.mxu0 %v2292
        %2352 = vmatprep.subr.bf16.mxu0 0
        %2353 = vmatpush1.bf16.msra.mxu0 %v2293
        %2354 = vmatprep.subr.bf16.mxu0 0
        %2355 = vmatpush1.bf16.msra.mxu0 0
        %2356 = vmatprep.subr.bf16.mxu0 0
        %2357 = vmatpush1.bf16.msra.mxu0 0
        %2358 = vmatprep.subr.bf16.mxu0 0
        %2359 = vmatpush1.bf16.msra.mxu0 0
        %2360 = vmatprep.subr.bf16.mxu0 0
        %2361 = vmatpush1.bf16.msra.mxu0 0
        %2362 = vmatprep.subr.bf16.mxu0 0
        %2363 = vmatpush1.bf16.msra.mxu0 0
        %2364 = vmatprep.subr.bf16.mxu0 0
        %2365 = vmatpush1.bf16.msra.mxu0 0
        %2366 = vmatprep.subr.bf16.mxu0 0
        %2367 = vmatpush1.bf16.msra.mxu0 0
        %2368 = vmatprep.subr.bf16.mxu0 0
        %2369 = vmatpush1.bf16.msra.mxu0 0
        %2370 = vmatprep.subr.bf16.mxu0 0
        %2371 = vmatpush1.bf16.msra.mxu0 0
        %2372 = vmatprep.subr.bf16.mxu0 0
        %2373 = vmatpush1.bf16.msra.mxu0 0
        %2374 = vmatprep.subr.bf16.mxu0 0
        %2375 = vmatpush1.bf16.msra.mxu0 0
        %2376 = vmatprep.subr.bf16.mxu0 0
        %2377 = vmatpush1.bf16.msra.mxu0 0
        %2378 = vmatprep.mubr.bf16.mxu0 0
        %2379 = vmatmul.mubr.bf16.gmra.mrb[0].mxu0 %v2299
        %v2380 = vpop.f32.mrb[0].mxu0
        %v2381 = vadd.f32 %v2068, %v2380
        %v2382 = vpop.f32.mrb[0].mxu0
        %v2383 = vpop.f32.mrb[0].mxu0
        %v2384 = vadd.f32 %v2071, %v2383
        %v2385 = vpop.f32.mrb[0].mxu0
        %2386 = vmatprep.mubr.bf16.mxu0 0
        %2387 = vmatmul.mubr.bf16.gmra.mrb[0].mxu0 %v2302
        %v2388 = vpop.f32.mrb[0].mxu0
        %v2389 = vadd.f32 %v2076, %v2388
        %v2390 = vpop.f32.mrb[0].mxu0
        %v2391 = vpop.f32.mrb[0].mxu0
        %v2392 = vadd.f32 %v2079, %v2391
        %v2393 = vpop.f32.mrb[0].mxu0
        %2394 = vmatprep.mubr.bf16.mxu0 0
        %2395 = vmatmul.mubr.bf16.gmra.mrb[0].mxu0 %v2305
        %v2396 = vpop.f32.mrb[0].mxu0
        %v2397 = vadd.f32 %v2084, %v2396
        %v2398 = vpop.f32.mrb[0].mxu0
        %v2399 = vpop.f32.mrb[0].mxu0
        %v2400 = vadd.f32 %v2087, %v2399
        %v2401 = vpop.f32.mrb[0].mxu0
        %2402 = vmatprep.mubr.bf16.mxu0 0
        %2403 = vmatmul.mubr.bf16.gmra.mrb[0].mxu0 %v2308
        %v2404 = vpop.f32.mrb[0].mxu0
        %v2405 = vadd.f32 %v2092, %v2404
        %v2406 = vpop.f32.mrb[0].mxu0
        %v2407 = vpop.f32.mrb[0].mxu0
        %v2408 = vadd.f32 %v2095, %v2407
        %v2409 = vpop.f32.mrb[0].mxu0
        %2410 = vmatprep.mubr.bf16.mxu0 0
        %2411 = vmatmul.mubr.bf16.gmra.mrb[0].mxu0 %v2311
        %v2412 = vpop.f32.mrb[0].mxu0
        %v2413 = vadd.f32 %v2100, %v2412
        %v2414 = vpop.f32.mrb[0].mxu0
        %v2415 = vpop.f32.mrb[0].mxu0
        %v2416 = vadd.f32 %v2103, %v2415
        %v2417 = vpop.f32.mrb[0].mxu0
        %2418 = vmatprep.mubr.bf16.mxu0 0
        %2419 = vmatmul.mubr.bf16.gmra.mrb[0].mxu0 %v2314
        %v2420 = vpop.f32.mrb[0].mxu0
        %v2421 = vadd.f32 %v2108, %v2420
        %v2422 = vpop.f32.mrb[0].mxu0
        %v2423 = vpop.f32.mrb[0].mxu0
        %v2424 = vadd.f32 %v2111, %v2423
        %v2425 = vpop.f32.mrb[0].mxu0
        %2426 = vmatprep.mubr.bf16.mxu0 0
        %2427 = vmatmul.mubr.bf16.gmra.mrb[0].mxu0 %v2317
        %v2428 = vpop.f32.mrb[0].mxu0
        %v2429 = vadd.f32 %v2116, %v2428
        %v2430 = vpop.f32.mrb[0].mxu0
        %v2431 = vpop.f32.mrb[0].mxu0
        %v2432 = vadd.f32 %v2119, %v2431
        %v2433 = vpop.f32.mrb[0].mxu0
        %2434 = vmatprep.mubr.bf16.mxu0 0
        %2435 = vmatmul.mubr.bf16.gmra.mrb[0].mxu0 %v2320
        %v2436 = vpop.f32.mrb[0].mxu0
        %v2437 = vadd.f32 %v2124, %v2436
        %v2438 = vpop.f32.mrb[0].mxu0
        %v2439 = vpop.f32.mrb[0].mxu0
        %v2440 = vadd.f32 %v2127, %v2439
        %v2441 = vpop.f32.mrb[0].mxu0
        %2442 = vmatprep.mubr.bf16.mxu0 0
        %2443 = vmatmul.mubr.bf16.gmra.mrb[0].mxu0 %v2323
        %v2444 = vpop.f32.mrb[0].mxu0
        %v2445 = vadd.f32 %v2132, %v2444
        %v2446 = vpop.f32.mrb[0].mxu0
        %v2447 = vpop.f32.mrb[0].mxu0
        %v2448 = vadd.f32 %v2135, %v2447
        %v2449 = vpop.f32.mrb[0].mxu0
        %2450 = vmatprep.mubr.bf16.mxu0 0
        %2451 = vmatmul.mubr.bf16.gmra.mrb[0].mxu0 %v2326
        %v2452 = vpop.f32.mrb[0].mxu0
        %v2453 = vadd.f32 %v2140, %v2452
        %v2454 = vpop.f32.mrb[0].mxu0
        %v2455 = vpop.f32.mrb[0].mxu0
        %v2456 = vadd.f32 %v2143, %v2455
        %v2457 = vpop.f32.mrb[0].mxu0
        %2458 = vmatprep.mubr.bf16.mxu0 0
        %2459 = vmatmul.mubr.bf16.gmra.mrb[0].mxu0 %v2329
        %v2460 = vpop.f32.mrb[0].mxu0
        %v2461 = vadd.f32 %v2148, %v2460
        %v2462 = vpop.f32.mrb[0].mxu0
        %v2463 = vpop.f32.mrb[0].mxu0
        %v2464 = vadd.f32 %v2151, %v2463
        %v2465 = vpop.f32.mrb[0].mxu0
        %2466 = vmatprep.mubr.bf16.mxu0 0
        %2467 = vmatmul.mubr.bf16.gmra.mrb[0].mxu0 %v2332
        %v2468 = vpop.f32.mrb[0].mxu0
        %v2469 = vadd.f32 %v2156, %v2468
        %v2470 = vpop.f32.mrb[0].mxu0
        %v2471 = vpop.f32.mrb[0].mxu0
        %v2472 = vadd.f32 %v2159, %v2471
        %v2473 = vpop.f32.mrb[0].mxu0
        %2474 = vmatprep.mubr.bf16.mxu0 0
        %2475 = vmatmul.mubr.bf16.gmra.mrb[0].mxu0 %v2335
        %v2476 = vpop.f32.mrb[0].mxu0
        %v2477 = vadd.f32 %v2164, %v2476
        %v2478 = vpop.f32.mrb[0].mxu0
        %v2479 = vpop.f32.mrb[0].mxu0
        %v2480 = vadd.f32 %v2167, %v2479
        %v2481 = vpop.f32.mrb[0].mxu0
        %2482 = vmatprep.mubr.bf16.mxu0 0
        %2483 = vmatmul.mubr.bf16.gmra.mrb[0].mxu0 %v2338
        %v2484 = vpop.f32.mrb[0].mxu0
        %v2485 = vadd.f32 %v2172, %v2484
        %v2486 = vpop.f32.mrb[0].mxu0
        %v2487 = vpop.f32.mrb[0].mxu0
        %v2488 = vadd.f32 %v2175, %v2487
        %v2489 = vpop.f32.mrb[0].mxu0
        %2490 = vmatprep.mubr.bf16.mxu0 0
        %2491 = vmatmul.mubr.bf16.gmra.mrb[0].mxu0 %v2341
        %v2492 = vpop.f32.mrb[0].mxu0
        %v2493 = vadd.f32 %v2180, %v2492
        %v2494 = vpop.f32.mrb[0].mxu0
        %v2495 = vpop.f32.mrb[0].mxu0
        %v2496 = vadd.f32 %v2183, %v2495
        %v2497 = vpop.f32.mrb[0].mxu0
        %2498 = vmatprep.mubr.bf16.mxu0 0
        %2499 = vmatmul.mubr.bf16.gmra.mrb[0].mxu0 %v2344
        %v2500 = vpop.f32.mrb[0].mxu0
        %v2501 = vadd.f32 %v2188, %v2500
        %v2502 = vpop.f32.mrb[0].mxu0
        %v2503 = vpop.f32.mrb[0].mxu0
        %v2504 = vadd.f32 %v2191, %v2503
        %v2505 = vpop.f32.mrb[0].mxu0
        %2506 = vdwg.mxu0
        %v2507 = vld [vmem:[#allocation2] sm:$0xe]
        %v2508 = vld [vmem:[#allocation2 + $0xc] sm:$0xe]
        %v2509 = vld [vmem:[#allocation2 + $0x18] sm:$0xe]
        %v2510 = vld [vmem:[#allocation2 + $0x24] sm:$0xe]
        %v2511 = vld [vmem:[#allocation2 + $0x30] sm:$0xe]
        %v2512 = vld [vmem:[#allocation2 + $0x3c] sm:$0xe]
        %v2513 = vld [vmem:[#allocation2 + $0x48] sm:$0xe]
        %v2514 = vld [vmem:[#allocation2 + $0x54] sm:$0xe]
        %v2515 = vld [vmem:[#allocation2 + $0x60] sm:$0xe]
        %v2516 = vld [vmem:[#allocation2 + $0x6c] sm:$0xe]
        %v2517 = vld [vmem:[#allocation2 + $0x78] sm:$0xe]
        %v2518 = vld [vmem:[#allocation2 + $0x84] sm:$0xe]
        %v2519 = vld [vmem:[#allocation2 + $0x90] sm:$0xe]
        %v2520 = vld [vmem:[#allocation2 + $0x9c] sm:$0xe]
        %v2521 = vld [vmem:[#allocation2 + $0xa8] sm:$0xe]
        %v2522 = vld [vmem:[#allocation2 + $0xb4] sm:$0xe]
        %vm2555 = vcmask 1042432
        %vm2556 = vcmask 1046532
        %vm2557 = vmor %vm2555, %vm2556
        %v2558 = vrot.slane %v2507, 5
        %v2559 = vrot.slane %v2558, 4
        %v2560 = vrot.slane %v1462, 5
        %v2561 = vsel %vm2557, %v2559, %v2560
        %v2562 = vrot.slane %v2560, 4
        %v2563 = vrot.slane %v1501, 5
        %v2564 = vsel %vm2557, %v2562, %v2563
        %v2565 = vrot.slane %v2508, 5
        %v2566 = vrot.slane %v2565, 4
        %v2567 = vrot.slane %v1464, 5
        %v2568 = vsel %vm2557, %v2566, %v2567
        %v2569 = vrot.slane %v2567, 4
        %v2570 = vrot.slane %v1502, 5
        %v2571 = vsel %vm2557, %v2569, %v2570
        %v2572 = vrot.slane %v2509, 5
        %v2573 = vrot.slane %v2572, 4
        %v2574 = vrot.slane %v1466, 5
        %v2575 = vsel %vm2557, %v2573, %v2574
        %v2576 = vrot.slane %v2574, 4
        %v2577 = vrot.slane %v1503, 5
        %v2578 = vsel %vm2557, %v2576, %v2577
        %v2579 = vrot.slane %v2510, 5
        %v2580 = vrot.slane %v2579, 4
        %v2581 = vrot.slane %v1468, 5
        %v2582 = vsel %vm2557, %v2580, %v2581
        %v2583 = vrot.slane %v2581, 4
        %v2584 = vrot.slane %v1504, 5
        %v2585 = vsel %vm2557, %v2583, %v2584
        %v2586 = vrot.slane %v2511, 5
        %v2587 = vrot.slane %v2586, 4
        %v2588 = vrot.slane %v1470, 5
        %v2589 = vsel %vm2557, %v2587, %v2588
        %v2590 = vrot.slane %v2588, 4
        %v2591 = vrot.slane %v1505, 5
        %v2592 = vsel %vm2557, %v2590, %v2591
        %v2593 = vrot.slane %v2512, 5
        %v2594 = vrot.slane %v2593, 4
        %v2595 = vrot.slane %v1472, 5
        %v2596 = vsel %vm2557, %v2594, %v2595
        %v2597 = vrot.slane %v2595, 4
        %v2598 = vrot.slane %v1506, 5
        %v2599 = vsel %vm2557, %v2597, %v2598
        %v2600 = vrot.slane %v2513, 5
        %v2601 = vrot.slane %v2600, 4
        %v2602 = vrot.slane %v1474, 5
        %v2603 = vsel %vm2557, %v2601, %v2602
        %v2604 = vrot.slane %v2602, 4
        %v2605 = vrot.slane %v1507, 5
        %v2606 = vsel %vm2557, %v2604, %v2605
        %v2607 = vrot.slane %v2514, 5
        %v2608 = vrot.slane %v2607, 4
        %v2609 = vrot.slane %v1476, 5
        %v2610 = vsel %vm2557, %v2608, %v2609
        %v2611 = vrot.slane %v2609, 4
        %v2612 = vrot.slane %v1508, 5
        %v2613 = vsel %vm2557, %v2611, %v2612
        %v2614 = vrot.slane %v2515, 5
        %v2615 = vrot.slane %v2614, 4
        %v2616 = vrot.slane %v1478, 5
        %v2617 = vsel %vm2557, %v2615, %v2616
        %v2618 = vrot.slane %v2616, 4
        %v2619 = vrot.slane %v1509, 5
        %v2620 = vsel %vm2557, %v2618, %v2619
        %v2621 = vrot.slane %v2516, 5
        %v2622 = vrot.slane %v2621, 4
        %v2623 = vrot.slane %v1480, 5
        %v2624 = vsel %vm2557, %v2622, %v2623
        %v2625 = vrot.slane %v2623, 4
        %v2626 = vrot.slane %v1510, 5
        %v2627 = vsel %vm2557, %v2625, %v2626
        %v2628 = vrot.slane %v2517, 5
        %v2629 = vrot.slane %v2628, 4
        %v2630 = vrot.slane %v1482, 5
        %v2631 = vsel %vm2557, %v2629, %v2630
        %v2632 = vrot.slane %v2630, 4
        %v2633 = vrot.slane %v1511, 5
        %v2634 = vsel %vm2557, %v2632, %v2633
        %v2635 = vrot.slane %v2518, 5
        %v2636 = vrot.slane %v2635, 4
        %v2637 = vrot.slane %v1484, 5
        %v2638 = vsel %vm2557, %v2636, %v2637
        %v2639 = vrot.slane %v2637, 4
        %v2640 = vrot.slane %v1512, 5
        %v2641 = vsel %vm2557, %v2639, %v2640
        %v2642 = vrot.slane %v2519, 5
        %v2643 = vrot.slane %v2642, 4
        %v2644 = vrot.slane %v1486, 5
        %v2645 = vsel %vm2557, %v2643, %v2644
        %v2646 = vrot.slane %v2644, 4
        %v2647 = vrot.slane %v1513, 5
        %v2648 = vsel %vm2557, %v2646, %v2647
        %v2649 = vrot.slane %v2520, 5
        %v2650 = vrot.slane %v2649, 4
        %v2651 = vrot.slane %v1488, 5
        %v2652 = vsel %vm2557, %v2650, %v2651
        %v2653 = vrot.slane %v2651, 4
        %v2654 = vrot.slane %v1514, 5
        %v2655 = vsel %vm2557, %v2653, %v2654
        %v2656 = vrot.slane %v2521, 5
        %v2657 = vrot.slane %v2656, 4
        %v2658 = vrot.slane %v1490, 5
        %v2659 = vsel %vm2557, %v2657, %v2658
        %v2660 = vrot.slane %v2658, 4
        %v2661 = vrot.slane %v1515, 5
        %v2662 = vsel %vm2557, %v2660, %v2661
        %v2663 = vrot.slane %v2522, 5
        %v2664 = vrot.slane %v2663, 4
        %v2665 = vrot.slane %v1492, 5
        %v2666 = vsel %vm2557, %v2664, %v2665
        %v2667 = vrot.slane %v2665, 4
        %v2668 = vrot.slane %v1516, 5
        %v2669 = vsel %vm2557, %v2667, %v2668
        %v2670 = vld [vmem:[%s3 + $0x40] sm:$0xf]
        %v2671 = vld [vmem:[%s3 + $0x44] sm:$0xf]
        %v2672 = vld [vmem:[%s3 + $0x48] sm:$0xf]
        %v2673 = vld [vmem:[%s3 + $0x4c] sm:$0xf]
        %v2674 = vld [vmem:[%s3 + $0x50] sm:$0xf]
        %v2675 = vld [vmem:[%s3 + $0x54] sm:$0xf]
        %v2676 = vld [vmem:[%s3 + $0x58] sm:$0xf]
        %v2677 = vld [vmem:[%s3 + $0x5c] sm:$0xf]
        %v2678 = vunpack.c.l.b16 %v2561
        %v2679 = vunpack.c.l.b16 %v2564
        %v2680 = vunpack.c.l.b16 %v2568
        %v2681 = vunpack.c.l.b16 %v2571
        %v2682 = vunpack.c.l.b16 %v2575
        %v2683 = vunpack.c.l.b16 %v2578
        %v2684 = vunpack.c.l.b16 %v2582
        %v2685 = vunpack.c.l.b16 %v2585
        %v2686 = vunpack.c.l.b16 %v2589
        %v2687 = vunpack.c.l.b16 %v2592
        %v2688 = vunpack.c.l.b16 %v2596
        %v2689 = vunpack.c.l.b16 %v2599
        %v2690 = vunpack.c.l.b16 %v2603
        %v2691 = vunpack.c.l.b16 %v2606
        %v2692 = vunpack.c.l.b16 %v2610
        %v2693 = vunpack.c.l.b16 %v2613
        %v2694 = vunpack.c.l.b16 %v2617
        %v2695 = vunpack.c.l.b16 %v2620
        %v2696 = vunpack.c.l.b16 %v2624
        %v2697 = vunpack.c.l.b16 %v2627
        %v2698 = vunpack.c.l.b16 %v2631
        %v2699 = vunpack.c.l.b16 %v2634
        %v2700 = vunpack.c.l.b16 %v2638
        %v2701 = vunpack.c.l.b16 %v2641
        %v2702 = vunpack.c.l.b16 %v2645
        %v2703 = vunpack.c.l.b16 %v2648
        %v2704 = vunpack.c.l.b16 %v2652
        %v2705 = vunpack.c.l.b16 %v2655
        %v2706 = vunpack.c.l.b16 %v2659
        %v2707 = vunpack.c.l.b16 %v2662
        %v2708 = vunpack.c.l.b16 %v2666
        %v2709 = vunpack.c.l.b16 %v2669
        %v2710 = vpack.c.b16 %v2679, %v2678
        %v2711 = vpack.c.b16 %v2681, %v2680
        %v2712 = vpack.c.b16 %v2683, %v2682
        %v2713 = vpack.c.b16 %v2685, %v2684
        %v2714 = vpack.c.b16 %v2687, %v2686
        %v2715 = vpack.c.b16 %v2689, %v2688
        %v2716 = vpack.c.b16 %v2691, %v2690
        %v2717 = vpack.c.b16 %v2693, %v2692
        %v2718 = vpack.c.b16 %v2695, %v2694
        %v2719 = vpack.c.b16 %v2697, %v2696
        %v2720 = vpack.c.b16 %v2699, %v2698
        %v2721 = vpack.c.b16 %v2701, %v2700
        %v2722 = vpack.c.b16 %v2703, %v2702
        %v2723 = vpack.c.b16 %v2705, %v2704
        %v2724 = vpack.c.b16 %v2707, %v2706
        %v2725 = vpack.c.b16 %v2709, %v2708
        %v2734 = vunpack.c.l.b16 %v2670
        %v2735 = vunpack.c.l.b16 %v2671
        %v2736 = vunpack.c.l.b16 %v2672
        %v2737 = vunpack.c.l.b16 %v2673
        %v2738 = vunpack.c.l.b16 %v2674
        %v2739 = vunpack.c.l.b16 %v2675
        %v2740 = vunpack.c.l.b16 %v2676
        %v2741 = vunpack.c.l.b16 %v2677
        %v2742 = vpack.c.b16 %v2735, %v2734
        %v2743 = vpack.c.b16 %v2737, %v2736
        %v2744 = vpack.c.b16 %v2739, %v2738
        %v2745 = vpack.c.b16 %v2741, %v2740
        %v2751 = vsel %vm1984, %v2710, 0
        %v2754 = vsel %vm1984, %v2711, 0
        %v2757 = vsel %vm1984, %v2712, 0
        %v2760 = vsel %vm1984, %v2713, 0
        %v2763 = vsel %vm1984, %v2714, 0
        %v2766 = vsel %vm1984, %v2715, 0
        %v2769 = vsel %vm1984, %v2716, 0
        %v2772 = vsel %vm1984, %v2717, 0
        %v2775 = vsel %vm1984, %v2718, 0
        %v2778 = vsel %vm1984, %v2719, 0
        %v2781 = vsel %vm1984, %v2720, 0
        %v2784 = vsel %vm1984, %v2721, 0
        %v2787 = vsel %vm1984, %v2722, 0
        %v2790 = vsel %vm1984, %v2723, 0
        %v2793 = vsel %vm1984, %v2724, 0
        %v2796 = vsel %vm1984, %v2725, 0
        %2798 = vmatprep.subr.bf16.mxu0 0
        %2799 = vmatpush1.bf16.msra.mxu0 %v2742
        %2800 = vmatprep.subr.bf16.mxu0 0
        %2801 = vmatpush1.bf16.msra.mxu0 %v2743
        %2802 = vmatprep.subr.bf16.mxu0 0
        %2803 = vmatpush1.bf16.msra.mxu0 %v2744
        %2804 = vmatprep.subr.bf16.mxu0 0
        %2805 = vmatpush1.bf16.msra.mxu0 %v2745
        %2806 = vmatprep.subr.bf16.mxu0 0
        %2807 = vmatpush1.bf16.msra.mxu0 0
        %2808 = vmatprep.subr.bf16.mxu0 0
        %2809 = vmatpush1.bf16.msra.mxu0 0
        %2810 = vmatprep.subr.bf16.mxu0 0
        %2811 = vmatpush1.bf16.msra.mxu0 0
        %2812 = vmatprep.subr.bf16.mxu0 0
        %2813 = vmatpush1.bf16.msra.mxu0 0
        %2814 = vmatprep.subr.bf16.mxu0 0
        %2815 = vmatpush1.bf16.msra.mxu0 0
        %2816 = vmatprep.subr.bf16.mxu0 0
        %2817 = vmatpush1.bf16.msra.mxu0 0
        %2818 = vmatprep.subr.bf16.mxu0 0
        %2819 = vmatpush1.bf16.msra.mxu0 0
        %2820 = vmatprep.subr.bf16.mxu0 0
        %2821 = vmatpush1.bf16.msra.mxu0 0
        %2822 = vmatprep.subr.bf16.mxu0 0
        %2823 = vmatpush1.bf16.msra.mxu0 0
        %2824 = vmatprep.subr.bf16.mxu0 0
        %2825 = vmatpush1.bf16.msra.mxu0 0
        %2826 = vmatprep.subr.bf16.mxu0 0
        %2827 = vmatpush1.bf16.msra.mxu0 0
        %2828 = vmatprep.subr.bf16.mxu0 0
        %2829 = vmatpush1.bf16.msra.mxu0 0
        %2830 = vmatprep.mubr.bf16.mxu0 0
        %2831 = vmatmul.mubr.bf16.gmra.mrb[0].mxu0 %v2751
        %v2832 = vpop.f32.mrb[0].mxu0
        %v2833 = vadd.f32 0.0, %v2832
        %v2834 = vpop.f32.mrb[0].mxu0
        %v2835 = vpop.f32.mrb[0].mxu0
        %v2836 = vadd.f32 0.0, %v2835
        %v2837 = vpop.f32.mrb[0].mxu0
        %2838 = vmatprep.mubr.bf16.mxu0 0
        %2839 = vmatmul.mubr.bf16.gmra.mrb[0].mxu0 %v2754
        %v2840 = vpop.f32.mrb[0].mxu0
        %v2841 = vadd.f32 0.0, %v2840
        %v2842 = vpop.f32.mrb[0].mxu0
        %v2843 = vpop.f32.mrb[0].mxu0
        %v2844 = vadd.f32 0.0, %v2843
        %v2845 = vpop.f32.mrb[0].mxu0
        %2846 = vmatprep.mubr.bf16.mxu0 0
        %2847 = vmatmul.mubr.bf16.gmra.mrb[0].mxu0 %v2757
        %v2848 = vpop.f32.mrb[0].mxu0
        %v2849 = vadd.f32 0.0, %v2848
        %v2850 = vpop.f32.mrb[0].mxu0
        %v2851 = vpop.f32.mrb[0].mxu0
        %v2852 = vadd.f32 0.0, %v2851
        %v2853 = vpop.f32.mrb[0].mxu0
        %2854 = vmatprep.mubr.bf16.mxu0 0
        %2855 = vmatmul.mubr.bf16.gmra.mrb[0].mxu0 %v2760
        %v2856 = vpop.f32.mrb[0].mxu0
        %v2857 = vadd.f32 0.0, %v2856
        %v2858 = vpop.f32.mrb[0].mxu0
        %v2859 = vpop.f32.mrb[0].mxu0
        %v2860 = vadd.f32 0.0, %v2859
        %v2861 = vpop.f32.mrb[0].mxu0
        %2862 = vmatprep.mubr.bf16.mxu0 0
        %2863 = vmatmul.mubr.bf16.gmra.mrb[0].mxu0 %v2763
        %v2864 = vpop.f32.mrb[0].mxu0
        %v2865 = vadd.f32 0.0, %v2864
        %v2866 = vpop.f32.mrb[0].mxu0
        %v2867 = vpop.f32.mrb[0].mxu0
        %v2868 = vadd.f32 0.0, %v2867
        %v2869 = vpop.f32.mrb[0].mxu0
        %2870 = vmatprep.mubr.bf16.mxu0 0
        %2871 = vmatmul.mubr.bf16.gmra.mrb[0].mxu0 %v2766
        %v2872 = vpop.f32.mrb[0].mxu0
        %v2873 = vadd.f32 0.0, %v2872
        %v2874 = vpop.f32.mrb[0].mxu0
        %v2875 = vpop.f32.mrb[0].mxu0
        %v2876 = vadd.f32 0.0, %v2875
        %v2877 = vpop.f32.mrb[0].mxu0
        %2878 = vmatprep.mubr.bf16.mxu0 0
        %2879 = vmatmul.mubr.bf16.gmra.mrb[0].mxu0 %v2769
        %v2880 = vpop.f32.mrb[0].mxu0
        %v2881 = vadd.f32 0.0, %v2880
        %v2882 = vpop.f32.mrb[0].mxu0
        %v2883 = vpop.f32.mrb[0].mxu0
        %v2884 = vadd.f32 0.0, %v2883
        %v2885 = vpop.f32.mrb[0].mxu0
        %2886 = vmatprep.mubr.bf16.mxu0 0
        %2887 = vmatmul.mubr.bf16.gmra.mrb[0].mxu0 %v2772
        %v2888 = vpop.f32.mrb[0].mxu0
        %v2889 = vadd.f32 0.0, %v2888
        %v2890 = vpop.f32.mrb[0].mxu0
        %v2891 = vpop.f32.mrb[0].mxu0
        %v2892 = vadd.f32 0.0, %v2891
        %v2893 = vpop.f32.mrb[0].mxu0
        %2894 = vmatprep.mubr.bf16.mxu0 0
        %2895 = vmatmul.mubr.bf16.gmra.mrb[0].mxu0 %v2775
        %v2896 = vpop.f32.mrb[0].mxu0
        %v2897 = vadd.f32 0.0, %v2896
        %v2898 = vpop.f32.mrb[0].mxu0
        %v2899 = vpop.f32.mrb[0].mxu0
        %v2900 = vadd.f32 0.0, %v2899
        %v2901 = vpop.f32.mrb[0].mxu0
        %2902 = vmatprep.mubr.bf16.mxu0 0
        %2903 = vmatmul.mubr.bf16.gmra.mrb[0].mxu0 %v2778
        %v2904 = vpop.f32.mrb[0].mxu0
        %v2905 = vadd.f32 0.0, %v2904
        %v2906 = vpop.f32.mrb[0].mxu0
        %v2907 = vpop.f32.mrb[0].mxu0
        %v2908 = vadd.f32 0.0, %v2907
        %v2909 = vpop.f32.mrb[0].mxu0
        %2910 = vmatprep.mubr.bf16.mxu0 0
        %2911 = vmatmul.mubr.bf16.gmra.mrb[0].mxu0 %v2781
        %v2912 = vpop.f32.mrb[0].mxu0
        %v2913 = vadd.f32 0.0, %v2912
        %v2914 = vpop.f32.mrb[0].mxu0
        %v2915 = vpop.f32.mrb[0].mxu0
        %v2916 = vadd.f32 0.0, %v2915
        %v2917 = vpop.f32.mrb[0].mxu0
        %2918 = vmatprep.mubr.bf16.mxu0 0
        %2919 = vmatmul.mubr.bf16.gmra.mrb[0].mxu0 %v2784
        %v2920 = vpop.f32.mrb[0].mxu0
        %v2921 = vadd.f32 0.0, %v2920
        %v2922 = vpop.f32.mrb[0].mxu0
        %v2923 = vpop.f32.mrb[0].mxu0
        %v2924 = vadd.f32 0.0, %v2923
        %v2925 = vpop.f32.mrb[0].mxu0
        %2926 = vmatprep.mubr.bf16.mxu0 0
        %2927 = vmatmul.mubr.bf16.gmra.mrb[0].mxu0 %v2787
        %v2928 = vpop.f32.mrb[0].mxu0
        %v2929 = vadd.f32 0.0, %v2928
        %v2930 = vpop.f32.mrb[0].mxu0
        %v2931 = vpop.f32.mrb[0].mxu0
        %v2932 = vadd.f32 0.0, %v2931
        %v2933 = vpop.f32.mrb[0].mxu0
        %2934 = vmatprep.mubr.bf16.mxu0 0
        %2935 = vmatmul.mubr.bf16.gmra.mrb[0].mxu0 %v2790
        %v2936 = vpop.f32.mrb[0].mxu0
        %v2937 = vadd.f32 0.0, %v2936
        %v2938 = vpop.f32.mrb[0].mxu0
        %v2939 = vpop.f32.mrb[0].mxu0
        %v2940 = vadd.f32 0.0, %v2939
        %v2941 = vpop.f32.mrb[0].mxu0
        %2942 = vmatprep.mubr.bf16.mxu0 0
        %2943 = vmatmul.mubr.bf16.gmra.mrb[0].mxu0 %v2793
        %v2944 = vpop.f32.mrb[0].mxu0
        %v2945 = vadd.f32 0.0, %v2944
        %v2946 = vpop.f32.mrb[0].mxu0
        %v2947 = vpop.f32.mrb[0].mxu0
        %v2948 = vadd.f32 0.0, %v2947
        %v2949 = vpop.f32.mrb[0].mxu0
        %2950 = vmatprep.mubr.bf16.mxu0 0
        %2951 = vmatmul.mubr.bf16.gmra.mrb[0].mxu0 %v2796
        %v2952 = vpop.f32.mrb[0].mxu0
        %v2953 = vadd.f32 0.0, %v2952
        %v2954 = vpop.f32.mrb[0].mxu0
        %v2955 = vpop.f32.mrb[0].mxu0
        %v2956 = vadd.f32 0.0, %v2955
        %v2957 = vpop.f32.mrb[0].mxu0
        %2958 = vdwg.mxu0
        %v2959 = vadd.f32 %v2381, %v2833
        %v2960 = vadd.f32 %v2384, %v2836
        %v2961 = vadd.f32 %v2389, %v2841
        %v2962 = vadd.f32 %v2392, %v2844
        %v2963 = vadd.f32 %v2397, %v2849
        %v2964 = vadd.f32 %v2400, %v2852
        %v2965 = vadd.f32 %v2405, %v2857
        %v2966 = vadd.f32 %v2408, %v2860
        %v2967 = vadd.f32 %v2413, %v2865
        %v2968 = vadd.f32 %v2416, %v2868
        %v2969 = vadd.f32 %v2421, %v2873
        %v2970 = vadd.f32 %v2424, %v2876
        %v2971 = vadd.f32 %v2429, %v2881
        %v2972 = vadd.f32 %v2432, %v2884
        %v2973 = vadd.f32 %v2437, %v2889
        %v2974 = vadd.f32 %v2440, %v2892
        %v2975 = vadd.f32 %v2445, %v2897
        %v2976 = vadd.f32 %v2448, %v2900
        %v2977 = vadd.f32 %v2453, %v2905
        %v2978 = vadd.f32 %v2456, %v2908
        %v2979 = vadd.f32 %v2461, %v2913
        %v2980 = vadd.f32 %v2464, %v2916
        %v2981 = vadd.f32 %v2469, %v2921
        %v2982 = vadd.f32 %v2472, %v2924
        %v2983 = vadd.f32 %v2477, %v2929
        %v2984 = vadd.f32 %v2480, %v2932
        %v2985 = vadd.f32 %v2485, %v2937
        %v2986 = vadd.f32 %v2488, %v2940
        %v2987 = vadd.f32 %v2493, %v2945
        %v2988 = vadd.f32 %v2496, %v2948
        %v2989 = vadd.f32 %v2501, %v2953
        %v2990 = vadd.f32 %v2504, %v2956
        %v2991 = vld [vmem:[%s827] sm:$0xf]
        %v2992 = vld [vmem:[%s827 + $0x4] sm:$0xf]
        %v2993 = vld [vmem:[%s827 + $0xc] sm:$0xf]
        %v2994 = vld [vmem:[%s827 + $0x10] sm:$0xf]
        %v2995 = vld [vmem:[%s827 + $0x18] sm:$0xf]
        %v2996 = vld [vmem:[%s827 + $0x1c] sm:$0xf]
        %v2997 = vld [vmem:[%s827 + $0x24] sm:$0xf]
        %v2998 = vld [vmem:[%s827 + $0x28] sm:$0xf]
        %v2999 = vld [vmem:[%s827 + $0x30] sm:$0xf]
        %v3000 = vld [vmem:[%s827 + $0x34] sm:$0xf]
        %v3001 = vld [vmem:[%s827 + $0x3c] sm:$0xf]
        %v3002 = vld [vmem:[%s827 + $0x40] sm:$0xf]
        %v3003 = vld [vmem:[%s827 + $0x48] sm:$0xf]
        %v3004 = vld [vmem:[%s827 + $0x4c] sm:$0xf]
        %v3005 = vld [vmem:[%s827 + $0x54] sm:$0xf]
        %v3006 = vld [vmem:[%s827 + $0x58] sm:$0xf]
        %v3007 = vld [vmem:[%s827 + $0x60] sm:$0xf]
        %v3008 = vld [vmem:[%s827 + $0x64] sm:$0xf]
        %v3009 = vld [vmem:[%s827 + $0x6c] sm:$0xf]
        %v3010 = vld [vmem:[%s827 + $0x70] sm:$0xf]
        %v3011 = vld [vmem:[%s827 + $0x78] sm:$0xf]
        %v3012 = vld [vmem:[%s827 + $0x7c] sm:$0xf]
        %v3013 = vld [vmem:[%s827 + $0x84] sm:$0xf]
        %v3014 = vld [vmem:[%s827 + $0x88] sm:$0xf]
        %v3015 = vld [vmem:[%s827 + $0x90] sm:$0xf]
        %v3016 = vld [vmem:[%s827 + $0x94] sm:$0xf]
        %v3017 = vld [vmem:[%s827 + $0x9c] sm:$0xf]
        %v3018 = vld [vmem:[%s827 + $0xa0] sm:$0xf]
        %v3019 = vld [vmem:[%s827 + $0xa8] sm:$0xf]
        %v3020 = vld [vmem:[%s827 + $0xac] sm:$0xf]
        %v3021 = vld [vmem:[%s827 + $0xb4] sm:$0xf]
        %v3022 = vld [vmem:[%s827 + $0xb8] sm:$0xf]
        %v3023 = vld [vmem:[%s3 + $0x60] sm:$0xf]
        %v3024 = vld [vmem:[%s3 + $0x64] sm:$0xf]
        %v3025 = vld [vmem:[%s3 + $0x68] sm:$0xf]
        %v3026 = vld [vmem:[%s3 + $0x6c] sm:$0xf]
        %v3027 = vld [vmem:[%s3 + $0x70] sm:$0xf]
        %v3028 = vld [vmem:[%s3 + $0x74] sm:$0xf]
        %v3029 = vld [vmem:[%s3 + $0x78] sm:$0xf]
        %v3030 = vld [vmem:[%s3 + $0x7c] sm:$0xf]
        %v3063 = vunpack.c.l.b16 %v2991
        %v3064 = vunpack.c.l.b16 %v2992
        %v3065 = vunpack.c.l.b16 %v2993
        %v3066 = vunpack.c.l.b16 %v2994
        %v3067 = vunpack.c.l.b16 %v2995
        %v3068 = vunpack.c.l.b16 %v2996
        %v3069 = vunpack.c.l.b16 %v2997
        %v3070 = vunpack.c.l.b16 %v2998
        %v3071 = vunpack.c.l.b16 %v2999
        %v3072 = vunpack.c.l.b16 %v3000
        %v3073 = vunpack.c.l.b16 %v3001
        %v3074 = vunpack.c.l.b16 %v3002
        %v3075 = vunpack.c.l.b16 %v3003
        %v3076 = vunpack.c.l.b16 %v3004
        %v3077 = vunpack.c.l.b16 %v3005
        %v3078 = vunpack.c.l.b16 %v3006
        %v3079 = vunpack.c.l.b16 %v3007
        %v3080 = vunpack.c.l.b16 %v3008
        %v3081 = vunpack.c.l.b16 %v3009
        %v3082 = vunpack.c.l.b16 %v3010
        %v3083 = vunpack.c.l.b16 %v3011
        %v3084 = vunpack.c.l.b16 %v3012
        %v3085 = vunpack.c.l.b16 %v3013
        %v3086 = vunpack.c.l.b16 %v3014
        %v3087 = vunpack.c.l.b16 %v3015
        %v3088 = vunpack.c.l.b16 %v3016
        %v3089 = vunpack.c.l.b16 %v3017
        %v3090 = vunpack.c.l.b16 %v3018
        %v3091 = vunpack.c.l.b16 %v3019
        %v3092 = vunpack.c.l.b16 %v3020
        %v3093 = vunpack.c.l.b16 %v3021
        %v3094 = vunpack.c.l.b16 %v3022
        %v3095 = vpack.c.b16 %v3064, %v3063
        %v3096 = vpack.c.b16 %v3066, %v3065
        %v3097 = vpack.c.b16 %v3068, %v3067
        %v3098 = vpack.c.b16 %v3070, %v3069
        %v3099 = vpack.c.b16 %v3072, %v3071
        %v3100 = vpack.c.b16 %v3074, %v3073
        %v3101 = vpack.c.b16 %v3076, %v3075
        %v3102 = vpack.c.b16 %v3078, %v3077
        %v3103 = vpack.c.b16 %v3080, %v3079
        %v3104 = vpack.c.b16 %v3082, %v3081
        %v3105 = vpack.c.b16 %v3084, %v3083
        %v3106 = vpack.c.b16 %v3086, %v3085
        %v3107 = vpack.c.b16 %v3088, %v3087
        %v3108 = vpack.c.b16 %v3090, %v3089
        %v3109 = vpack.c.b16 %v3092, %v3091
        %v3110 = vpack.c.b16 %v3094, %v3093
        %v3119 = vunpack.c.l.b16 %v3023
        %v3120 = vunpack.c.l.b16 %v3024
        %v3121 = vunpack.c.l.b16 %v3025
        %v3122 = vunpack.c.l.b16 %v3026
        %v3123 = vunpack.c.l.b16 %v3027
        %v3124 = vunpack.c.l.b16 %v3028
        %v3125 = vunpack.c.l.b16 %v3029
        %v3126 = vunpack.c.l.b16 %v3030
        %v3127 = vpack.c.b16 %v3120, %v3119
        %v3128 = vpack.c.b16 %v3122, %v3121
        %v3129 = vpack.c.b16 %v3124, %v3123
        %v3130 = vpack.c.b16 %v3126, %v3125
        %v3136 = vsel %vm1984, %v3095, 0
        %v3139 = vsel %vm1984, %v3096, 0
        %v3142 = vsel %vm1984, %v3097, 0
        %v3145 = vsel %vm1984, %v3098, 0
        %v3148 = vsel %vm1984, %v3099, 0
        %v3151 = vsel %vm1984, %v3100, 0
        %v3154 = vsel %vm1984, %v3101, 0
        %v3157 = vsel %vm1984, %v3102, 0
        %v3160 = vsel %vm1984, %v3103, 0
        %v3163 = vsel %vm1984, %v3104, 0
        %v3166 = vsel %vm1984, %v3105, 0
        %v3169 = vsel %vm1984, %v3106, 0
        %v3172 = vsel %vm1984, %v3107, 0
        %v3175 = vsel %vm1984, %v3108, 0
        %v3178 = vsel %vm1984, %v3109, 0
        %v3181 = vsel %vm1984, %v3110, 0
        %3183 = vmatprep.subr.bf16.mxu0 0
        %3184 = vmatpush1.bf16.msra.mxu0 %v3127
        %3185 = vmatprep.subr.bf16.mxu0 0
        %3186 = vmatpush1.bf16.msra.mxu0 %v3128
        %3187 = vmatprep.subr.bf16.mxu0 0
        %3188 = vmatpush1.bf16.msra.mxu0 %v3129
        %3189 = vmatprep.subr.bf16.mxu0 0
        %3190 = vmatpush1.bf16.msra.mxu0 %v3130
        %3191 = vmatprep.subr.bf16.mxu0 0
        %3192 = vmatpush1.bf16.msra.mxu0 0
        %3193 = vmatprep.subr.bf16.mxu0 0
        %3194 = vmatpush1.bf16.msra.mxu0 0
        %3195 = vmatprep.subr.bf16.mxu0 0
        %3196 = vmatpush1.bf16.msra.mxu0 0
        %3197 = vmatprep.subr.bf16.mxu0 0
        %3198 = vmatpush1.bf16.msra.mxu0 0
        %3199 = vmatprep.subr.bf16.mxu0 0
        %3200 = vmatpush1.bf16.msra.mxu0 0
        %3201 = vmatprep.subr.bf16.mxu0 0
        %3202 = vmatpush1.bf16.msra.mxu0 0
        %3203 = vmatprep.subr.bf16.mxu0 0
        %3204 = vmatpush1.bf16.msra.mxu0 0
        %3205 = vmatprep.subr.bf16.mxu0 0
        %3206 = vmatpush1.bf16.msra.mxu0 0
        %3207 = vmatprep.subr.bf16.mxu0 0
        %3208 = vmatpush1.bf16.msra.mxu0 0
        %3209 = vmatprep.subr.bf16.mxu0 0
        %3210 = vmatpush1.bf16.msra.mxu0 0
        %3211 = vmatprep.subr.bf16.mxu0 0
        %3212 = vmatpush1.bf16.msra.mxu0 0
        %3213 = vmatprep.subr.bf16.mxu0 0
        %3214 = vmatpush1.bf16.msra.mxu0 0
        %3215 = vmatprep.mubr.bf16.mxu0 0
        %3216 = vmatmul.mubr.bf16.gmra.mrb[0].mxu0 %v3136
        %v3217 = vpop.f32.mrb[0].mxu0
        %v3218 = vadd.f32 0.0, %v3217
        %v3219 = vpop.f32.mrb[0].mxu0
        %v3220 = vpop.f32.mrb[0].mxu0
        %v3221 = vadd.f32 0.0, %v3220
        %v3222 = vpop.f32.mrb[0].mxu0
        %3223 = vmatprep.mubr.bf16.mxu0 0
        %3224 = vmatmul.mubr.bf16.gmra.mrb[0].mxu0 %v3139
        %v3225 = vpop.f32.mrb[0].mxu0
        %v3226 = vadd.f32 0.0, %v3225
        %v3227 = vpop.f32.mrb[0].mxu0
        %v3228 = vpop.f32.mrb[0].mxu0
        %v3229 = vadd.f32 0.0, %v3228
        %v3230 = vpop.f32.mrb[0].mxu0
        %3231 = vmatprep.mubr.bf16.mxu0 0
        %3232 = vmatmul.mubr.bf16.gmra.mrb[0].mxu0 %v3142
        %v3233 = vpop.f32.mrb[0].mxu0
        %v3234 = vadd.f32 0.0, %v3233
        %v3235 = vpop.f32.mrb[0].mxu0
        %v3236 = vpop.f32.mrb[0].mxu0
        %v3237 = vadd.f32 0.0, %v3236
        %v3238 = vpop.f32.mrb[0].mxu0
        %3239 = vmatprep.mubr.bf16.mxu0 0
        %3240 = vmatmul.mubr.bf16.gmra.mrb[0].mxu0 %v3145
        %v3241 = vpop.f32.mrb[0].mxu0
        %v3242 = vadd.f32 0.0, %v3241
        %v3243 = vpop.f32.mrb[0].mxu0
        %v3244 = vpop.f32.mrb[0].mxu0
        %v3245 = vadd.f32 0.0, %v3244
        %v3246 = vpop.f32.mrb[0].mxu0
        %3247 = vmatprep.mubr.bf16.mxu0 0
        %3248 = vmatmul.mubr.bf16.gmra.mrb[0].mxu0 %v3148
        %v3249 = vpop.f32.mrb[0].mxu0
        %v3250 = vadd.f32 0.0, %v3249
        %v3251 = vpop.f32.mrb[0].mxu0
        %v3252 = vpop.f32.mrb[0].mxu0
        %v3253 = vadd.f32 0.0, %v3252
        %v3254 = vpop.f32.mrb[0].mxu0
        %3255 = vmatprep.mubr.bf16.mxu0 0
        %3256 = vmatmul.mubr.bf16.gmra.mrb[0].mxu0 %v3151
        %v3257 = vpop.f32.mrb[0].mxu0
        %v3258 = vadd.f32 0.0, %v3257
        %v3259 = vpop.f32.mrb[0].mxu0
        %v3260 = vpop.f32.mrb[0].mxu0
        %v3261 = vadd.f32 0.0, %v3260
        %v3262 = vpop.f32.mrb[0].mxu0
        %3263 = vmatprep.mubr.bf16.mxu0 0
        %3264 = vmatmul.mubr.bf16.gmra.mrb[0].mxu0 %v3154
        %v3265 = vpop.f32.mrb[0].mxu0
        %v3266 = vadd.f32 0.0, %v3265
        %v3267 = vpop.f32.mrb[0].mxu0
        %v3268 = vpop.f32.mrb[0].mxu0
        %v3269 = vadd.f32 0.0, %v3268
        %v3270 = vpop.f32.mrb[0].mxu0
        %3271 = vmatprep.mubr.bf16.mxu0 0
        %3272 = vmatmul.mubr.bf16.gmra.mrb[0].mxu0 %v3157
        %v3273 = vpop.f32.mrb[0].mxu0
        %v3274 = vadd.f32 0.0, %v3273
        %v3275 = vpop.f32.mrb[0].mxu0
        %v3276 = vpop.f32.mrb[0].mxu0
        %v3277 = vadd.f32 0.0, %v3276
        %v3278 = vpop.f32.mrb[0].mxu0
        %3279 = vmatprep.mubr.bf16.mxu0 0
        %3280 = vmatmul.mubr.bf16.gmra.mrb[0].mxu0 %v3160
        %v3281 = vpop.f32.mrb[0].mxu0
        %v3282 = vadd.f32 0.0, %v3281
        %v3283 = vpop.f32.mrb[0].mxu0
        %v3284 = vpop.f32.mrb[0].mxu0
        %v3285 = vadd.f32 0.0, %v3284
        %v3286 = vpop.f32.mrb[0].mxu0
        %3287 = vmatprep.mubr.bf16.mxu0 0
        %3288 = vmatmul.mubr.bf16.gmra.mrb[0].mxu0 %v3163
        %v3289 = vpop.f32.mrb[0].mxu0
        %v3290 = vadd.f32 0.0, %v3289
        %v3291 = vpop.f32.mrb[0].mxu0
        %v3292 = vpop.f32.mrb[0].mxu0
        %v3293 = vadd.f32 0.0, %v3292
        %v3294 = vpop.f32.mrb[0].mxu0
        %3295 = vmatprep.mubr.bf16.mxu0 0
        %3296 = vmatmul.mubr.bf16.gmra.mrb[0].mxu0 %v3166
        %v3297 = vpop.f32.mrb[0].mxu0
        %v3298 = vadd.f32 0.0, %v3297
        %v3299 = vpop.f32.mrb[0].mxu0
        %v3300 = vpop.f32.mrb[0].mxu0
        %v3301 = vadd.f32 0.0, %v3300
        %v3302 = vpop.f32.mrb[0].mxu0
        %3303 = vmatprep.mubr.bf16.mxu0 0
        %3304 = vmatmul.mubr.bf16.gmra.mrb[0].mxu0 %v3169
        %v3305 = vpop.f32.mrb[0].mxu0
        %v3306 = vadd.f32 0.0, %v3305
        %v3307 = vpop.f32.mrb[0].mxu0
        %v3308 = vpop.f32.mrb[0].mxu0
        %v3309 = vadd.f32 0.0, %v3308
        %v3310 = vpop.f32.mrb[0].mxu0
        %3311 = vmatprep.mubr.bf16.mxu0 0
        %3312 = vmatmul.mubr.bf16.gmra.mrb[0].mxu0 %v3172
        %v3313 = vpop.f32.mrb[0].mxu0
        %v3314 = vadd.f32 0.0, %v3313
        %v3315 = vpop.f32.mrb[0].mxu0
        %v3316 = vpop.f32.mrb[0].mxu0
        %v3317 = vadd.f32 0.0, %v3316
        %v3318 = vpop.f32.mrb[0].mxu0
        %3319 = vmatprep.mubr.bf16.mxu0 0
        %3320 = vmatmul.mubr.bf16.gmra.mrb[0].mxu0 %v3175
        %v3321 = vpop.f32.mrb[0].mxu0
        %v3322 = vadd.f32 0.0, %v3321
        %v3323 = vpop.f32.mrb[0].mxu0
        %v3324 = vpop.f32.mrb[0].mxu0
        %v3325 = vadd.f32 0.0, %v3324
        %v3326 = vpop.f32.mrb[0].mxu0
        %3327 = vmatprep.mubr.bf16.mxu0 0
        %3328 = vmatmul.mubr.bf16.gmra.mrb[0].mxu0 %v3178
        %v3329 = vpop.f32.mrb[0].mxu0
        %v3330 = vadd.f32 0.0, %v3329
        %v3331 = vpop.f32.mrb[0].mxu0
        %v3332 = vpop.f32.mrb[0].mxu0
        %v3333 = vadd.f32 0.0, %v3332
        %v3334 = vpop.f32.mrb[0].mxu0
        %3335 = vmatprep.mubr.bf16.mxu0 0
        %3336 = vmatmul.mubr.bf16.gmra.mrb[0].mxu0 %v3181
        %v3337 = vpop.f32.mrb[0].mxu0
        %v3338 = vadd.f32 0.0, %v3337
        %v3339 = vpop.f32.mrb[0].mxu0
        %v3340 = vpop.f32.mrb[0].mxu0
        %v3341 = vadd.f32 0.0, %v3340
        %v3342 = vpop.f32.mrb[0].mxu0
        %3343 = vdwg.mxu0
        %v3344 = vadd.f32 %v2959, %v3218
        %v3345 = vadd.f32 %v2960, %v3221
        %v3346 = vadd.f32 %v2961, %v3226
        %v3347 = vadd.f32 %v2962, %v3229
        %v3348 = vadd.f32 %v2963, %v3234
        %v3349 = vadd.f32 %v2964, %v3237
        %v3350 = vadd.f32 %v2965, %v3242
        %v3351 = vadd.f32 %v2966, %v3245
        %v3352 = vadd.f32 %v2967, %v3250
        %v3353 = vadd.f32 %v2968, %v3253
        %v3354 = vadd.f32 %v2969, %v3258
        %v3355 = vadd.f32 %v2970, %v3261
        %v3356 = vadd.f32 %v2971, %v3266
        %v3357 = vadd.f32 %v2972, %v3269
        %v3358 = vadd.f32 %v2973, %v3274
        %v3359 = vadd.f32 %v2974, %v3277
        %v3360 = vadd.f32 %v2975, %v3282
        %v3361 = vadd.f32 %v2976, %v3285
        %v3362 = vadd.f32 %v2977, %v3290
        %v3363 = vadd.f32 %v2978, %v3293
        %v3364 = vadd.f32 %v2979, %v3298
        %v3365 = vadd.f32 %v2980, %v3301
        %v3366 = vadd.f32 %v2981, %v3306
        %v3367 = vadd.f32 %v2982, %v3309
        %v3368 = vadd.f32 %v2983, %v3314
        %v3369 = vadd.f32 %v2984, %v3317
        %v3370 = vadd.f32 %v2985, %v3322
        %v3371 = vadd.f32 %v2986, %v3325
        %v3372 = vadd.f32 %v2987, %v3330
        %v3373 = vadd.f32 %v2988, %v3333
        %v3374 = vadd.f32 %v2989, %v3338
        %v3375 = vadd.f32 %v2990, %v3341
        %v3376 = vld [vmem:[%s827] sm:$0xf]
        %v3377 = vld [vmem:[%s827 + $0x4] sm:$0xf]
        %v3378 = vld [vmem:[%s827 + $0x8] sm:$0x1]
        %v3379 = vld [vmem:[%s827 + $0xc] sm:$0xf]
        %v3380 = vld [vmem:[%s827 + $0x10] sm:$0xf]
        %v3381 = vld [vmem:[%s827 + $0x14] sm:$0x1]
        %v3382 = vld [vmem:[%s827 + $0x18] sm:$0xf]
        %v3383 = vld [vmem:[%s827 + $0x1c] sm:$0xf]
        %v3384 = vld [vmem:[%s827 + $0x20] sm:$0x1]
        %v3385 = vld [vmem:[%s827 + $0x24] sm:$0xf]
        %v3386 = vld [vmem:[%s827 + $0x28] sm:$0xf]
        %v3387 = vld [vmem:[%s827 + $0x2c] sm:$0x1]
        %v3388 = vld [vmem:[%s827 + $0x30] sm:$0xf]
        %v3389 = vld [vmem:[%s827 + $0x34] sm:$0xf]
        %v3390 = vld [vmem:[%s827 + $0x38] sm:$0x1]
        %v3391 = vld [vmem:[%s827 + $0x3c] sm:$0xf]
        %v3392 = vld [vmem:[%s827 + $0x40] sm:$0xf]
        %v3393 = vld [vmem:[%s827 + $0x44] sm:$0x1]
        %v3394 = vld [vmem:[%s827 + $0x48] sm:$0xf]
        %v3395 = vld [vmem:[%s827 + $0x4c] sm:$0xf]
        %v3396 = vld [vmem:[%s827 + $0x50] sm:$0x1]
        %v3397 = vld [vmem:[%s827 + $0x54] sm:$0xf]
        %v3398 = vld [vmem:[%s827 + $0x58] sm:$0xf]
        %v3399 = vld [vmem:[%s827 + $0x5c] sm:$0x1]
        %v3400 = vld [vmem:[%s827 + $0x60] sm:$0xf]
        %v3401 = vld [vmem:[%s827 + $0x64] sm:$0xf]
        %v3402 = vld [vmem:[%s827 + $0x68] sm:$0x1]
        %v3403 = vld [vmem:[%s827 + $0x6c] sm:$0xf]
        %v3404 = vld [vmem:[%s827 + $0x70] sm:$0xf]
        %v3405 = vld [vmem:[%s827 + $0x74] sm:$0x1]
        %v3406 = vld [vmem:[%s827 + $0x78] sm:$0xf]
        %v3407 = vld [vmem:[%s827 + $0x7c] sm:$0xf]
        %v3408 = vld [vmem:[%s827 + $0x80] sm:$0x1]
        %v3409 = vld [vmem:[%s827 + $0x84] sm:$0xf]
        %v3410 = vld [vmem:[%s827 + $0x88] sm:$0xf]
        %v3411 = vld [vmem:[%s827 + $0x8c] sm:$0x1]
        %v3412 = vld [vmem:[%s827 + $0x90] sm:$0xf]
        %v3413 = vld [vmem:[%s827 + $0x94] sm:$0xf]
        %v3414 = vld [vmem:[%s827 + $0x98] sm:$0x1]
        %v3415 = vld [vmem:[%s827 + $0x9c] sm:$0xf]
        %v3416 = vld [vmem:[%s827 + $0xa0] sm:$0xf]
        %v3417 = vld [vmem:[%s827 + $0xa4] sm:$0x1]
        %v3418 = vld [vmem:[%s827 + $0xa8] sm:$0xf]
        %v3419 = vld [vmem:[%s827 + $0xac] sm:$0xf]
        %v3420 = vld [vmem:[%s827 + $0xb0] sm:$0x1]
        %v3421 = vld [vmem:[%s827 + $0xb4] sm:$0xf]
        %v3422 = vld [vmem:[%s827 + $0xb8] sm:$0xf]
        %v3423 = vld [vmem:[%s827 + $0xbc] sm:$0x1]
        %v3425 = vshrl.u32 %v3376, 16
        %v3427 = vrot.slane %v3425, 4
        %v3428 = vshll.u32 %v3376, 16
        %v3430 = vrot.slane %v3428, 5
        %v3431 = vor.u32 %v3427, %v3430
        %v3432 = vrot.slane %v3431, 4
        %v3434 = vshll.u32 %v3377, 16
        %v3436 = vrot.slane %v3434, 5
        %v3437 = vsel %vm1519, %v3432, %v3436
        %v3438 = vshrl.u32 %v3377, 16
        %v3440 = vrot.slane %v3438, 4
        %v3441 = vor.u32 %v3440, %v3436
        %v3442 = vrot.slane %v3441, 4
        %v3444 = vshll.u32 %v3378, 16
        %v3446 = vrot.slane %v3444, 5
        %v3447 = vsel %vm1519, %v3442, %v3446
        %v3449 = vshrl.u32 %v3379, 16
        %v3451 = vrot.slane %v3449, 4
        %v3452 = vshll.u32 %v3379, 16
        %v3454 = vrot.slane %v3452, 5
        %v3455 = vor.u32 %v3451, %v3454
        %v3456 = vrot.slane %v3455, 4
        %v3458 = vshll.u32 %v3380, 16
        %v3460 = vrot.slane %v3458, 5
        %v3461 = vsel %vm1519, %v3456, %v3460
        %v3462 = vshrl.u32 %v3380, 16
        %v3464 = vrot.slane %v3462, 4
        %v3465 = vor.u32 %v3464, %v3460
        %v3466 = vrot.slane %v3465, 4
        %v3468 = vshll.u32 %v3381, 16
        %v3470 = vrot.slane %v3468, 5
        %v3471 = vsel %vm1519, %v3466, %v3470
        %v3473 = vshrl.u32 %v3382, 16
        %v3475 = vrot.slane %v3473, 4
        %v3476 = vshll.u32 %v3382, 16
        %v3478 = vrot.slane %v3476, 5
        %v3479 = vor.u32 %v3475, %v3478
        %v3480 = vrot.slane %v3479, 4
        %v3482 = vshll.u32 %v3383, 16
        %v3484 = vrot.slane %v3482, 5
        %v3485 = vsel %vm1519, %v3480, %v3484
        %v3486 = vshrl.u32 %v3383, 16
        %v3488 = vrot.slane %v3486, 4
        %v3489 = vor.u32 %v3488, %v3484
        %v3490 = vrot.slane %v3489, 4
        %v3492 = vshll.u32 %v3384, 16
        %v3494 = vrot.slane %v3492, 5
        %v3495 = vsel %vm1519, %v3490, %v3494
        %v3497 = vshrl.u32 %v3385, 16
        %v3499 = vrot.slane %v3497, 4
        %v3500 = vshll.u32 %v3385, 16
        %v3502 = vrot.slane %v3500, 5
        %v3503 = vor.u32 %v3499, %v3502
        %v3504 = vrot.slane %v3503, 4
        %v3506 = vshll.u32 %v3386, 16
        %v3508 = vrot.slane %v3506, 5
        %v3509 = vsel %vm1519, %v3504, %v3508
        %v3510 = vshrl.u32 %v3386, 16
        %v3512 = vrot.slane %v3510, 4
        %v3513 = vor.u32 %v3512, %v3508
        %v3514 = vrot.slane %v3513, 4
        %v3516 = vshll.u32 %v3387, 16
        %v3518 = vrot.slane %v3516, 5
        %v3519 = vsel %vm1519, %v3514, %v3518
        %v3521 = vshrl.u32 %v3388, 16
        %v3523 = vrot.slane %v3521, 4
        %v3524 = vshll.u32 %v3388, 16
        %v3526 = vrot.slane %v3524, 5
        %v3527 = vor.u32 %v3523, %v3526
        %v3528 = vrot.slane %v3527, 4
        %v3530 = vshll.u32 %v3389, 16
        %v3532 = vrot.slane %v3530, 5
        %v3533 = vsel %vm1519, %v3528, %v3532
        %v3534 = vshrl.u32 %v3389, 16
        %v3536 = vrot.slane %v3534, 4
        %v3537 = vor.u32 %v3536, %v3532
        %v3538 = vrot.slane %v3537, 4
        %v3540 = vshll.u32 %v3390, 16
        %v3542 = vrot.slane %v3540, 5
        %v3543 = vsel %vm1519, %v3538, %v3542
        %v3545 = vshrl.u32 %v3391, 16
        %v3547 = vrot.slane %v3545, 4
        %v3548 = vshll.u32 %v3391, 16
        %v3550 = vrot.slane %v3548, 5
        %v3551 = vor.u32 %v3547, %v3550
        %v3552 = vrot.slane %v3551, 4
        %v3554 = vshll.u32 %v3392, 16
        %v3556 = vrot.slane %v3554, 5
        %v3557 = vsel %vm1519, %v3552, %v3556
        %v3558 = vshrl.u32 %v3392, 16
        %v3560 = vrot.slane %v3558, 4
        %v3561 = vor.u32 %v3560, %v3556
        %v3562 = vrot.slane %v3561, 4
        %v3564 = vshll.u32 %v3393, 16
        %v3566 = vrot.slane %v3564, 5
        %v3567 = vsel %vm1519, %v3562, %v3566
        %v3569 = vshrl.u32 %v3394, 16
        %v3571 = vrot.slane %v3569, 4
        %v3572 = vshll.u32 %v3394, 16
        %v3574 = vrot.slane %v3572, 5
        %v3575 = vor.u32 %v3571, %v3574
        %v3576 = vrot.slane %v3575, 4
        %v3578 = vshll.u32 %v3395, 16
        %v3580 = vrot.slane %v3578, 5
        %v3581 = vsel %vm1519, %v3576, %v3580
        %v3582 = vshrl.u32 %v3395, 16
        %v3584 = vrot.slane %v3582, 4
        %v3585 = vor.u32 %v3584, %v3580
        %v3586 = vrot.slane %v3585, 4
        %v3588 = vshll.u32 %v3396, 16
        %v3590 = vrot.slane %v3588, 5
        %v3591 = vsel %vm1519, %v3586, %v3590
        %v3593 = vshrl.u32 %v3397, 16
        %v3595 = vrot.slane %v3593, 4
        %v3596 = vshll.u32 %v3397, 16
        %v3598 = vrot.slane %v3596, 5
        %v3599 = vor.u32 %v3595, %v3598
        %v3600 = vrot.slane %v3599, 4
        %v3602 = vshll.u32 %v3398, 16
        %v3604 = vrot.slane %v3602, 5
        %v3605 = vsel %vm1519, %v3600, %v3604
        %v3606 = vshrl.u32 %v3398, 16
        %v3608 = vrot.slane %v3606, 4
        %v3609 = vor.u32 %v3608, %v3604
        %v3610 = vrot.slane %v3609, 4
        %v3612 = vshll.u32 %v3399, 16
        %v3614 = vrot.slane %v3612, 5
        %v3615 = vsel %vm1519, %v3610, %v3614
        %v3617 = vshrl.u32 %v3400, 16
        %v3619 = vrot.slane %v3617, 4
        %v3620 = vshll.u32 %v3400, 16
        %v3622 = vrot.slane %v3620, 5
        %v3623 = vor.u32 %v3619, %v3622
        %v3624 = vrot.slane %v3623, 4
        %v3626 = vshll.u32 %v3401, 16
        %v3628 = vrot.slane %v3626, 5
        %v3629 = vsel %vm1519, %v3624, %v3628
        %v3630 = vshrl.u32 %v3401, 16
        %v3632 = vrot.slane %v3630, 4
        %v3633 = vor.u32 %v3632, %v3628
        %v3634 = vrot.slane %v3633, 4
        %v3636 = vshll.u32 %v3402, 16
        %v3638 = vrot.slane %v3636, 5
        %v3639 = vsel %vm1519, %v3634, %v3638
        %v3641 = vshrl.u32 %v3403, 16
        %v3643 = vrot.slane %v3641, 4
        %v3644 = vshll.u32 %v3403, 16
        %v3646 = vrot.slane %v3644, 5
        %v3647 = vor.u32 %v3643, %v3646
        %v3648 = vrot.slane %v3647, 4
        %v3650 = vshll.u32 %v3404, 16
        %v3652 = vrot.slane %v3650, 5
        %v3653 = vsel %vm1519, %v3648, %v3652
        %v3654 = vshrl.u32 %v3404, 16
        %v3656 = vrot.slane %v3654, 4
        %v3657 = vor.u32 %v3656, %v3652
        %v3658 = vrot.slane %v3657, 4
        %v3660 = vshll.u32 %v3405, 16
        %v3662 = vrot.slane %v3660, 5
        %v3663 = vsel %vm1519, %v3658, %v3662
        %v3665 = vshrl.u32 %v3406, 16
        %v3667 = vrot.slane %v3665, 4
        %v3668 = vshll.u32 %v3406, 16
        %v3670 = vrot.slane %v3668, 5
        %v3671 = vor.u32 %v3667, %v3670
        %v3672 = vrot.slane %v3671, 4
        %v3674 = vshll.u32 %v3407, 16
        %v3676 = vrot.slane %v3674, 5
        %v3677 = vsel %vm1519, %v3672, %v3676
        %v3678 = vshrl.u32 %v3407, 16
        %v3680 = vrot.slane %v3678, 4
        %v3681 = vor.u32 %v3680, %v3676
        %v3682 = vrot.slane %v3681, 4
        %v3684 = vshll.u32 %v3408, 16
        %v3686 = vrot.slane %v3684, 5
        %v3687 = vsel %vm1519, %v3682, %v3686
        %v3689 = vshrl.u32 %v3409, 16
        %v3691 = vrot.slane %v3689, 4
        %v3692 = vshll.u32 %v3409, 16
        %v3694 = vrot.slane %v3692, 5
        %v3695 = vor.u32 %v3691, %v3694
        %v3696 = vrot.slane %v3695, 4
        %v3698 = vshll.u32 %v3410, 16
        %v3700 = vrot.slane %v3698, 5
        %v3701 = vsel %vm1519, %v3696, %v3700
        %v3702 = vshrl.u32 %v3410, 16
        %v3704 = vrot.slane %v3702, 4
        %v3705 = vor.u32 %v3704, %v3700
        %v3706 = vrot.slane %v3705, 4
        %v3708 = vshll.u32 %v3411, 16
        %v3710 = vrot.slane %v3708, 5
        %v3711 = vsel %vm1519, %v3706, %v3710
        %v3713 = vshrl.u32 %v3412, 16
        %v3715 = vrot.slane %v3713, 4
        %v3716 = vshll.u32 %v3412, 16
        %v3718 = vrot.slane %v3716, 5
        %v3719 = vor.u32 %v3715, %v3718
        %v3720 = vrot.slane %v3719, 4
        %v3722 = vshll.u32 %v3413, 16
        %v3724 = vrot.slane %v3722, 5
        %v3725 = vsel %vm1519, %v3720, %v3724
        %v3726 = vshrl.u32 %v3413, 16
        %v3728 = vrot.slane %v3726, 4
        %v3729 = vor.u32 %v3728, %v3724
        %v3730 = vrot.slane %v3729, 4
        %v3732 = vshll.u32 %v3414, 16
        %v3734 = vrot.slane %v3732, 5
        %v3735 = vsel %vm1519, %v3730, %v3734
        %v3737 = vshrl.u32 %v3415, 16
        %v3739 = vrot.slane %v3737, 4
        %v3740 = vshll.u32 %v3415, 16
        %v3742 = vrot.slane %v3740, 5
        %v3743 = vor.u32 %v3739, %v3742
        %v3744 = vrot.slane %v3743, 4
        %v3746 = vshll.u32 %v3416, 16
        %v3748 = vrot.slane %v3746, 5
        %v3749 = vsel %vm1519, %v3744, %v3748
        %v3750 = vshrl.u32 %v3416, 16
        %v3752 = vrot.slane %v3750, 4
        %v3753 = vor.u32 %v3752, %v3748
        %v3754 = vrot.slane %v3753, 4
        %v3756 = vshll.u32 %v3417, 16
        %v3758 = vrot.slane %v3756, 5
        %v3759 = vsel %vm1519, %v3754, %v3758
        %v3761 = vshrl.u32 %v3418, 16
        %v3763 = vrot.slane %v3761, 4
        %v3764 = vshll.u32 %v3418, 16
        %v3766 = vrot.slane %v3764, 5
        %v3767 = vor.u32 %v3763, %v3766
        %v3768 = vrot.slane %v3767, 4
        %v3770 = vshll.u32 %v3419, 16
        %v3772 = vrot.slane %v3770, 5
        %v3773 = vsel %vm1519, %v3768, %v3772
        %v3774 = vshrl.u32 %v3419, 16
        %v3776 = vrot.slane %v3774, 4
        %v3777 = vor.u32 %v3776, %v3772
        %v3778 = vrot.slane %v3777, 4
        %v3780 = vshll.u32 %v3420, 16
        %v3782 = vrot.slane %v3780, 5
        %v3783 = vsel %vm1519, %v3778, %v3782
        %v3785 = vshrl.u32 %v3421, 16
        %v3787 = vrot.slane %v3785, 4
        %v3788 = vshll.u32 %v3421, 16
        %v3790 = vrot.slane %v3788, 5
        %v3791 = vor.u32 %v3787, %v3790
        %v3792 = vrot.slane %v3791, 4
        %v3794 = vshll.u32 %v3422, 16
        %v3796 = vrot.slane %v3794, 5
        %v3797 = vsel %vm1519, %v3792, %v3796
        %v3798 = vshrl.u32 %v3422, 16
        %v3800 = vrot.slane %v3798, 4
        %v3801 = vor.u32 %v3800, %v3796
        %v3802 = vrot.slane %v3801, 4
        %v3804 = vshll.u32 %v3423, 16
        %v3806 = vrot.slane %v3804, 5
        %v3807 = vsel %vm1519, %v3802, %v3806
        %v3808 = vld [vmem:[%s3 + $0x80] sm:$0xf]
        %v3809 = vld [vmem:[%s3 + $0x84] sm:$0xf]
        %v3810 = vld [vmem:[%s3 + $0x88] sm:$0xf]
        %v3811 = vld [vmem:[%s3 + $0x8c] sm:$0xf]
        %v3812 = vld [vmem:[%s3 + $0x90] sm:$0xf]
        %v3813 = vld [vmem:[%s3 + $0x94] sm:$0xf]
        %v3814 = vld [vmem:[%s3 + $0x98] sm:$0xf]
        %v3815 = vld [vmem:[%s3 + $0x9c] sm:$0xf]
        %v3816 = vunpack.c.l.b16 %v3437
        %v3817 = vunpack.c.l.b16 %v3447
        %v3818 = vunpack.c.l.b16 %v3461
        %v3819 = vunpack.c.l.b16 %v3471
        %v3820 = vunpack.c.l.b16 %v3485
        %v3821 = vunpack.c.l.b16 %v3495
        %v3822 = vunpack.c.l.b16 %v3509
        %v3823 = vunpack.c.l.b16 %v3519
        %v3824 = vunpack.c.l.b16 %v3533
        %v3825 = vunpack.c.l.b16 %v3543
        %v3826 = vunpack.c.l.b16 %v3557
        %v3827 = vunpack.c.l.b16 %v3567
        %v3828 = vunpack.c.l.b16 %v3581
        %v3829 = vunpack.c.l.b16 %v3591
        %v3830 = vunpack.c.l.b16 %v3605
        %v3831 = vunpack.c.l.b16 %v3615
        %v3832 = vunpack.c.l.b16 %v3629
        %v3833 = vunpack.c.l.b16 %v3639
        %v3834 = vunpack.c.l.b16 %v3653
        %v3835 = vunpack.c.l.b16 %v3663
        %v3836 = vunpack.c.l.b16 %v3677
        %v3837 = vunpack.c.l.b16 %v3687
        %v3838 = vunpack.c.l.b16 %v3701
        %v3839 = vunpack.c.l.b16 %v3711
        %v3840 = vunpack.c.l.b16 %v3725
        %v3841 = vunpack.c.l.b16 %v3735
        %v3842 = vunpack.c.l.b16 %v3749
        %v3843 = vunpack.c.l.b16 %v3759
        %v3844 = vunpack.c.l.b16 %v3773
        %v3845 = vunpack.c.l.b16 %v3783
        %v3846 = vunpack.c.l.b16 %v3797
        %v3847 = vunpack.c.l.b16 %v3807
        %v3848 = vpack.c.b16 %v3817, %v3816
        %v3849 = vpack.c.b16 %v3819, %v3818
        %v3850 = vpack.c.b16 %v3821, %v3820
        %v3851 = vpack.c.b16 %v3823, %v3822
        %v3852 = vpack.c.b16 %v3825, %v3824
        %v3853 = vpack.c.b16 %v3827, %v3826
        %v3854 = vpack.c.b16 %v3829, %v3828
        %v3855 = vpack.c.b16 %v3831, %v3830
        %v3856 = vpack.c.b16 %v3833, %v3832
        %v3857 = vpack.c.b16 %v3835, %v3834
        %v3858 = vpack.c.b16 %v3837, %v3836
        %v3859 = vpack.c.b16 %v3839, %v3838
        %v3860 = vpack.c.b16 %v3841, %v3840
        %v3861 = vpack.c.b16 %v3843, %v3842
        %v3862 = vpack.c.b16 %v3845, %v3844
        %v3863 = vpack.c.b16 %v3847, %v3846
        %v3872 = vunpack.c.l.b16 %v3808
        %v3873 = vunpack.c.l.b16 %v3809
        %v3874 = vunpack.c.l.b16 %v3810
        %v3875 = vunpack.c.l.b16 %v3811
        %v3876 = vunpack.c.l.b16 %v3812
        %v3877 = vunpack.c.l.b16 %v3813
        %v3878 = vunpack.c.l.b16 %v3814
        %v3879 = vunpack.c.l.b16 %v3815
        %v3880 = vpack.c.b16 %v3873, %v3872
        %v3881 = vpack.c.b16 %v3875, %v3874
        %v3882 = vpack.c.b16 %v3877, %v3876
        %v3883 = vpack.c.b16 %v3879, %v3878
        %v3889 = vsel %vm1984, %v3848, 0
        %v3892 = vsel %vm1984, %v3849, 0
        %v3895 = vsel %vm1984, %v3850, 0
        %v3898 = vsel %vm1984, %v3851, 0
        %v3901 = vsel %vm1984, %v3852, 0
        %v3904 = vsel %vm1984, %v3853, 0
        %v3907 = vsel %vm1984, %v3854, 0
        %v3910 = vsel %vm1984, %v3855, 0
        %v3913 = vsel %vm1984, %v3856, 0
        %v3916 = vsel %vm1984, %v3857, 0
        %v3919 = vsel %vm1984, %v3858, 0
        %v3922 = vsel %vm1984, %v3859, 0
        %v3925 = vsel %vm1984, %v3860, 0
        %v3928 = vsel %vm1984, %v3861, 0
        %v3931 = vsel %vm1984, %v3862, 0
        %v3934 = vsel %vm1984, %v3863, 0
        %3936 = vmatprep.subr.bf16.mxu0 0
        %3937 = vmatpush1.bf16.msra.mxu0 %v3880
        %3938 = vmatprep.subr.bf16.mxu0 0
        %3939 = vmatpush1.bf16.msra.mxu0 %v3881
        %3940 = vmatprep.subr.bf16.mxu0 0
        %3941 = vmatpush1.bf16.msra.mxu0 %v3882
        %3942 = vmatprep.subr.bf16.mxu0 0
        %3943 = vmatpush1.bf16.msra.mxu0 %v3883
        %3944 = vmatprep.subr.bf16.mxu0 0
        %3945 = vmatpush1.bf16.msra.mxu0 0
        %3946 = vmatprep.subr.bf16.mxu0 0
        %3947 = vmatpush1.bf16.msra.mxu0 0
        %3948 = vmatprep.subr.bf16.mxu0 0
        %3949 = vmatpush1.bf16.msra.mxu0 0
        %3950 = vmatprep.subr.bf16.mxu0 0
        %3951 = vmatpush1.bf16.msra.mxu0 0
        %3952 = vmatprep.subr.bf16.mxu0 0
        %3953 = vmatpush1.bf16.msra.mxu0 0
        %3954 = vmatprep.subr.bf16.mxu0 0
        %3955 = vmatpush1.bf16.msra.mxu0 0
        %3956 = vmatprep.subr.bf16.mxu0 0
        %3957 = vmatpush1.bf16.msra.mxu0 0
        %3958 = vmatprep.subr.bf16.mxu0 0
        %3959 = vmatpush1.bf16.msra.mxu0 0
        %3960 = vmatprep.subr.bf16.mxu0 0
        %3961 = vmatpush1.bf16.msra.mxu0 0
        %3962 = vmatprep.subr.bf16.mxu0 0
        %3963 = vmatpush1.bf16.msra.mxu0 0
        %3964 = vmatprep.subr.bf16.mxu0 0
        %3965 = vmatpush1.bf16.msra.mxu0 0
        %3966 = vmatprep.subr.bf16.mxu0 0
        %3967 = vmatpush1.bf16.msra.mxu0 0
        %3968 = vmatprep.mubr.bf16.mxu0 0
        %3969 = vmatmul.mubr.bf16.gmra.mrb[0].mxu0 %v3889
        %v3970 = vpop.f32.mrb[0].mxu0
        %v3971 = vadd.f32 0.0, %v3970
        %v3972 = vpop.f32.mrb[0].mxu0
        %v3973 = vpop.f32.mrb[0].mxu0
        %v3974 = vadd.f32 0.0, %v3973
        %v3975 = vpop.f32.mrb[0].mxu0
        %3976 = vmatprep.mubr.bf16.mxu0 0
        %3977 = vmatmul.mubr.bf16.gmra.mrb[0].mxu0 %v3892
        %v3978 = vpop.f32.mrb[0].mxu0
        %v3979 = vadd.f32 0.0, %v3978
        %v3980 = vpop.f32.mrb[0].mxu0
        %v3981 = vpop.f32.mrb[0].mxu0
        %v3982 = vadd.f32 0.0, %v3981
        %v3983 = vpop.f32.mrb[0].mxu0
        %3984 = vmatprep.mubr.bf16.mxu0 0
        %3985 = vmatmul.mubr.bf16.gmra.mrb[0].mxu0 %v3895
        %v3986 = vpop.f32.mrb[0].mxu0
        %v3987 = vadd.f32 0.0, %v3986
        %v3988 = vpop.f32.mrb[0].mxu0
        %v3989 = vpop.f32.mrb[0].mxu0
        %v3990 = vadd.f32 0.0, %v3989
        %v3991 = vpop.f32.mrb[0].mxu0
        %3992 = vmatprep.mubr.bf16.mxu0 0
        %3993 = vmatmul.mubr.bf16.gmra.mrb[0].mxu0 %v3898
        %v3994 = vpop.f32.mrb[0].mxu0
        %v3995 = vadd.f32 0.0, %v3994
        %v3996 = vpop.f32.mrb[0].mxu0
        %v3997 = vpop.f32.mrb[0].mxu0
        %v3998 = vadd.f32 0.0, %v3997
        %v3999 = vpop.f32.mrb[0].mxu0
        %4000 = vmatprep.mubr.bf16.mxu0 0
        %4001 = vmatmul.mubr.bf16.gmra.mrb[0].mxu0 %v3901
        %v4002 = vpop.f32.mrb[0].mxu0
        %v4003 = vadd.f32 0.0, %v4002
        %v4004 = vpop.f32.mrb[0].mxu0
        %v4005 = vpop.f32.mrb[0].mxu0
        %v4006 = vadd.f32 0.0, %v4005
        %v4007 = vpop.f32.mrb[0].mxu0
        %4008 = vmatprep.mubr.bf16.mxu0 0
        %4009 = vmatmul.mubr.bf16.gmra.mrb[0].mxu0 %v3904
        %v4010 = vpop.f32.mrb[0].mxu0
        %v4011 = vadd.f32 0.0, %v4010
        %v4012 = vpop.f32.mrb[0].mxu0
        %v4013 = vpop.f32.mrb[0].mxu0
        %v4014 = vadd.f32 0.0, %v4013
        %v4015 = vpop.f32.mrb[0].mxu0
        %4016 = vmatprep.mubr.bf16.mxu0 0
        %4017 = vmatmul.mubr.bf16.gmra.mrb[0].mxu0 %v3907
        %v4018 = vpop.f32.mrb[0].mxu0
        %v4019 = vadd.f32 0.0, %v4018
        %v4020 = vpop.f32.mrb[0].mxu0
        %v4021 = vpop.f32.mrb[0].mxu0
        %v4022 = vadd.f32 0.0, %v4021
        %v4023 = vpop.f32.mrb[0].mxu0
        %4024 = vmatprep.mubr.bf16.mxu0 0
        %4025 = vmatmul.mubr.bf16.gmra.mrb[0].mxu0 %v3910
        %v4026 = vpop.f32.mrb[0].mxu0
        %v4027 = vadd.f32 0.0, %v4026
        %v4028 = vpop.f32.mrb[0].mxu0
        %v4029 = vpop.f32.mrb[0].mxu0
        %v4030 = vadd.f32 0.0, %v4029
        %v4031 = vpop.f32.mrb[0].mxu0
        %4032 = vmatprep.mubr.bf16.mxu0 0
        %4033 = vmatmul.mubr.bf16.gmra.mrb[0].mxu0 %v3913
        %v4034 = vpop.f32.mrb[0].mxu0
        %v4035 = vadd.f32 0.0, %v4034
        %v4036 = vpop.f32.mrb[0].mxu0
        %v4037 = vpop.f32.mrb[0].mxu0
        %v4038 = vadd.f32 0.0, %v4037
        %v4039 = vpop.f32.mrb[0].mxu0
        %4040 = vmatprep.mubr.bf16.mxu0 0
        %4041 = vmatmul.mubr.bf16.gmra.mrb[0].mxu0 %v3916
        %v4042 = vpop.f32.mrb[0].mxu0
        %v4043 = vadd.f32 0.0, %v4042
        %v4044 = vpop.f32.mrb[0].mxu0
        %v4045 = vpop.f32.mrb[0].mxu0
        %v4046 = vadd.f32 0.0, %v4045
        %v4047 = vpop.f32.mrb[0].mxu0
        %4048 = vmatprep.mubr.bf16.mxu0 0
        %4049 = vmatmul.mubr.bf16.gmra.mrb[0].mxu0 %v3919
        %v4050 = vpop.f32.mrb[0].mxu0
        %v4051 = vadd.f32 0.0, %v4050
        %v4052 = vpop.f32.mrb[0].mxu0
        %v4053 = vpop.f32.mrb[0].mxu0
        %v4054 = vadd.f32 0.0, %v4053
        %v4055 = vpop.f32.mrb[0].mxu0
        %4056 = vmatprep.mubr.bf16.mxu0 0
        %4057 = vmatmul.mubr.bf16.gmra.mrb[0].mxu0 %v3922
        %v4058 = vpop.f32.mrb[0].mxu0
        %v4059 = vadd.f32 0.0, %v4058
        %v4060 = vpop.f32.mrb[0].mxu0
        %v4061 = vpop.f32.mrb[0].mxu0
        %v4062 = vadd.f32 0.0, %v4061
        %v4063 = vpop.f32.mrb[0].mxu0
        %4064 = vmatprep.mubr.bf16.mxu0 0
        %4065 = vmatmul.mubr.bf16.gmra.mrb[0].mxu0 %v3925
        %v4066 = vpop.f32.mrb[0].mxu0
        %v4067 = vadd.f32 0.0, %v4066
        %v4068 = vpop.f32.mrb[0].mxu0
        %v4069 = vpop.f32.mrb[0].mxu0
        %v4070 = vadd.f32 0.0, %v4069
        %v4071 = vpop.f32.mrb[0].mxu0
        %4072 = vmatprep.mubr.bf16.mxu0 0
        %4073 = vmatmul.mubr.bf16.gmra.mrb[0].mxu0 %v3928
        %v4074 = vpop.f32.mrb[0].mxu0
        %v4075 = vadd.f32 0.0, %v4074
        %v4076 = vpop.f32.mrb[0].mxu0
        %v4077 = vpop.f32.mrb[0].mxu0
        %v4078 = vadd.f32 0.0, %v4077
        %v4079 = vpop.f32.mrb[0].mxu0
        %4080 = vmatprep.mubr.bf16.mxu0 0
        %4081 = vmatmul.mubr.bf16.gmra.mrb[0].mxu0 %v3931
        %v4082 = vpop.f32.mrb[0].mxu0
        %v4083 = vadd.f32 0.0, %v4082
        %v4084 = vpop.f32.mrb[0].mxu0
        %v4085 = vpop.f32.mrb[0].mxu0
        %v4086 = vadd.f32 0.0, %v4085
        %v4087 = vpop.f32.mrb[0].mxu0
        %4088 = vmatprep.mubr.bf16.mxu0 0
        %4089 = vmatmul.mubr.bf16.gmra.mrb[0].mxu0 %v3934
        %v4090 = vpop.f32.mrb[0].mxu0
        %v4091 = vadd.f32 0.0, %v4090
        %v4092 = vpop.f32.mrb[0].mxu0
        %v4093 = vpop.f32.mrb[0].mxu0
        %v4094 = vadd.f32 0.0, %v4093
        %v4095 = vpop.f32.mrb[0].mxu0
        %4096 = vdwg.mxu0
        %v4097 = vadd.f32 %v3344, %v3971
        %v4098 = vadd.f32 %v3345, %v3974
        %v4099 = vadd.f32 %v3346, %v3979
        %v4100 = vadd.f32 %v3347, %v3982
        %v4101 = vadd.f32 %v3348, %v3987
        %v4102 = vadd.f32 %v3349, %v3990
        %v4103 = vadd.f32 %v3350, %v3995
        %v4104 = vadd.f32 %v3351, %v3998
        %v4105 = vadd.f32 %v3352, %v4003
        %v4106 = vadd.f32 %v3353, %v4006
        %v4107 = vadd.f32 %v3354, %v4011
        %v4108 = vadd.f32 %v3355, %v4014
        %v4109 = vadd.f32 %v3356, %v4019
        %v4110 = vadd.f32 %v3357, %v4022
        %v4111 = vadd.f32 %v3358, %v4027
        %v4112 = vadd.f32 %v3359, %v4030
        %v4113 = vadd.f32 %v3360, %v4035
        %v4114 = vadd.f32 %v3361, %v4038
        %v4115 = vadd.f32 %v3362, %v4043
        %v4116 = vadd.f32 %v3363, %v4046
        %v4117 = vadd.f32 %v3364, %v4051
        %v4118 = vadd.f32 %v3365, %v4054
        %v4119 = vadd.f32 %v3366, %v4059
        %v4120 = vadd.f32 %v3367, %v4062
        %v4121 = vadd.f32 %v3368, %v4067
        %v4122 = vadd.f32 %v3369, %v4070
        %v4123 = vadd.f32 %v3370, %v4075
        %v4124 = vadd.f32 %v3371, %v4078
        %v4125 = vadd.f32 %v3372, %v4083
        %v4126 = vadd.f32 %v3373, %v4086
        %v4127 = vadd.f32 %v3374, %v4091
        %v4128 = vadd.f32 %v3375, %v4094
        %v4129 = vld [vmem:[%s827] sm:$0xe]
        %v4130 = vld [vmem:[%s827 + $0xc] sm:$0xe]
        %v4131 = vld [vmem:[%s827 + $0x18] sm:$0xe]
        %v4132 = vld [vmem:[%s827 + $0x24] sm:$0xe]
        %v4133 = vld [vmem:[%s827 + $0x30] sm:$0xe]
        %v4134 = vld [vmem:[%s827 + $0x3c] sm:$0xe]
        %v4135 = vld [vmem:[%s827 + $0x48] sm:$0xe]
        %v4136 = vld [vmem:[%s827 + $0x54] sm:$0xe]
        %v4137 = vld [vmem:[%s827 + $0x60] sm:$0xe]
        %v4138 = vld [vmem:[%s827 + $0x6c] sm:$0xe]
        %v4139 = vld [vmem:[%s827 + $0x78] sm:$0xe]
        %v4140 = vld [vmem:[%s827 + $0x84] sm:$0xe]
        %v4141 = vld [vmem:[%s827 + $0x90] sm:$0xe]
        %v4142 = vld [vmem:[%s827 + $0x9c] sm:$0xe]
        %v4143 = vld [vmem:[%s827 + $0xa8] sm:$0xe]
        %v4144 = vld [vmem:[%s827 + $0xb4] sm:$0xe]
        %v4193 = vrot.slane %v4129, 5
        %v4194 = vrot.slane %v4193, 4
        %v4195 = vrot.slane %v3377, 5
        %v4196 = vsel %vm2557, %v4194, %v4195
        %v4197 = vrot.slane %v4195, 4
        %v4198 = vrot.slane %v3378, 5
        %v4199 = vsel %vm2557, %v4197, %v4198
        %v4200 = vrot.slane %v4130, 5
        %v4201 = vrot.slane %v4200, 4
        %v4202 = vrot.slane %v3380, 5
        %v4203 = vsel %vm2557, %v4201, %v4202
        %v4204 = vrot.slane %v4202, 4
        %v4205 = vrot.slane %v3381, 5
        %v4206 = vsel %vm2557, %v4204, %v4205
        %v4207 = vrot.slane %v4131, 5
        %v4208 = vrot.slane %v4207, 4
        %v4209 = vrot.slane %v3383, 5
        %v4210 = vsel %vm2557, %v4208, %v4209
        %v4211 = vrot.slane %v4209, 4
        %v4212 = vrot.slane %v3384, 5
        %v4213 = vsel %vm2557, %v4211, %v4212
        %v4214 = vrot.slane %v4132, 5
        %v4215 = vrot.slane %v4214, 4
        %v4216 = vrot.slane %v3386, 5
        %v4217 = vsel %vm2557, %v4215, %v4216
        %v4218 = vrot.slane %v4216, 4
        %v4219 = vrot.slane %v3387, 5
        %v4220 = vsel %vm2557, %v4218, %v4219
        %v4221 = vrot.slane %v4133, 5
        %v4222 = vrot.slane %v4221, 4
        %v4223 = vrot.slane %v3389, 5
        %v4224 = vsel %vm2557, %v4222, %v4223
        %v4225 = vrot.slane %v4223, 4
        %v4226 = vrot.slane %v3390, 5
        %v4227 = vsel %vm2557, %v4225, %v4226
        %v4228 = vrot.slane %v4134, 5
        %v4229 = vrot.slane %v4228, 4
        %v4230 = vrot.slane %v3392, 5
        %v4231 = vsel %vm2557, %v4229, %v4230
        %v4232 = vrot.slane %v4230, 4
        %v4233 = vrot.slane %v3393, 5
        %v4234 = vsel %vm2557, %v4232, %v4233
        %v4235 = vrot.slane %v4135, 5
        %v4236 = vrot.slane %v4235, 4
        %v4237 = vrot.slane %v3395, 5
        %v4238 = vsel %vm2557, %v4236, %v4237
        %v4239 = vrot.slane %v4237, 4
        %v4240 = vrot.slane %v3396, 5
        %v4241 = vsel %vm2557, %v4239, %v4240
        %v4242 = vrot.slane %v4136, 5
        %v4243 = vrot.slane %v4242, 4
        %v4244 = vrot.slane %v3398, 5
        %v4245 = vsel %vm2557, %v4243, %v4244
        %v4246 = vrot.slane %v4244, 4
        %v4247 = vrot.slane %v3399, 5
        %v4248 = vsel %vm2557, %v4246, %v4247
        %v4249 = vrot.slane %v4137, 5
        %v4250 = vrot.slane %v4249, 4
        %v4251 = vrot.slane %v3401, 5
        %v4252 = vsel %vm2557, %v4250, %v4251
        %v4253 = vrot.slane %v4251, 4
        %v4254 = vrot.slane %v3402, 5
        %v4255 = vsel %vm2557, %v4253, %v4254
        %v4256 = vrot.slane %v4138, 5
        %v4257 = vrot.slane %v4256, 4
        %v4258 = vrot.slane %v3404, 5
        %v4259 = vsel %vm2557, %v4257, %v4258
        %v4260 = vrot.slane %v4258, 4
        %v4261 = vrot.slane %v3405, 5
        %v4262 = vsel %vm2557, %v4260, %v4261
        %v4263 = vrot.slane %v4139, 5
        %v4264 = vrot.slane %v4263, 4
        %v4265 = vrot.slane %v3407, 5
        %v4266 = vsel %vm2557, %v4264, %v4265
        %v4267 = vrot.slane %v4265, 4
        %v4268 = vrot.slane %v3408, 5
        %v4269 = vsel %vm2557, %v4267, %v4268
        %v4270 = vrot.slane %v4140, 5
        %v4271 = vrot.slane %v4270, 4
        %v4272 = vrot.slane %v3410, 5
        %v4273 = vsel %vm2557, %v4271, %v4272
        %v4274 = vrot.slane %v4272, 4
        %v4275 = vrot.slane %v3411, 5
        %v4276 = vsel %vm2557, %v4274, %v4275
        %v4277 = vrot.slane %v4141, 5
        %v4278 = vrot.slane %v4277, 4
        %v4279 = vrot.slane %v3413, 5
        %v4280 = vsel %vm2557, %v4278, %v4279
        %v4281 = vrot.slane %v4279, 4
        %v4282 = vrot.slane %v3414, 5
        %v4283 = vsel %vm2557, %v4281, %v4282
        %v4284 = vrot.slane %v4142, 5
        %v4285 = vrot.slane %v4284, 4
        %v4286 = vrot.slane %v3416, 5
        %v4287 = vsel %vm2557, %v4285, %v4286
        %v4288 = vrot.slane %v4286, 4
        %v4289 = vrot.slane %v3417, 5
        %v4290 = vsel %vm2557, %v4288, %v4289
        %v4291 = vrot.slane %v4143, 5
        %v4292 = vrot.slane %v4291, 4
        %v4293 = vrot.slane %v3419, 5
        %v4294 = vsel %vm2557, %v4292, %v4293
        %v4295 = vrot.slane %v4293, 4
        %v4296 = vrot.slane %v3420, 5
        %v4297 = vsel %vm2557, %v4295, %v4296
        %v4298 = vrot.slane %v4144, 5
        %v4299 = vrot.slane %v4298, 4
        %v4300 = vrot.slane %v3422, 5
        %v4301 = vsel %vm2557, %v4299, %v4300
        %v4302 = vrot.slane %v4300, 4
        %v4303 = vrot.slane %v3423, 5
        %v4304 = vsel %vm2557, %v4302, %v4303
        %v4305 = vld [vmem:[%s3 + $0xa0] sm:$0xf]
        %v4306 = vld [vmem:[%s3 + $0xa4] sm:$0xf]
        %v4307 = vld [vmem:[%s3 + $0xa8] sm:$0xf]
        %v4308 = vld [vmem:[%s3 + $0xac] sm:$0xf]
        %v4309 = vld [vmem:[%s3 + $0xb0] sm:$0xf]
        %v4310 = vld [vmem:[%s3 + $0xb4] sm:$0xf]
        %v4311 = vld [vmem:[%s3 + $0xb8] sm:$0xf]
        %v4312 = vld [vmem:[%s3 + $0xbc] sm:$0xf]
        %v4313 = vunpack.c.l.b16 %v4196
        %v4314 = vunpack.c.l.b16 %v4199
        %v4315 = vunpack.c.l.b16 %v4203
        %v4316 = vunpack.c.l.b16 %v4206
        %v4317 = vunpack.c.l.b16 %v4210
        %v4318 = vunpack.c.l.b16 %v4213
        %v4319 = vunpack.c.l.b16 %v4217
        %v4320 = vunpack.c.l.b16 %v4220
        %v4321 = vunpack.c.l.b16 %v4224
        %v4322 = vunpack.c.l.b16 %v4227
        %v4323 = vunpack.c.l.b16 %v4231
        %v4324 = vunpack.c.l.b16 %v4234
        %v4325 = vunpack.c.l.b16 %v4238
        %v4326 = vunpack.c.l.b16 %v4241
        %v4327 = vunpack.c.l.b16 %v4245
        %v4328 = vunpack.c.l.b16 %v4248
        %v4329 = vunpack.c.l.b16 %v4252
        %v4330 = vunpack.c.l.b16 %v4255
        %v4331 = vunpack.c.l.b16 %v4259
        %v4332 = vunpack.c.l.b16 %v4262
        %v4333 = vunpack.c.l.b16 %v4266
        %v4334 = vunpack.c.l.b16 %v4269
        %v4335 = vunpack.c.l.b16 %v4273
        %v4336 = vunpack.c.l.b16 %v4276
        %v4337 = vunpack.c.l.b16 %v4280
        %v4338 = vunpack.c.l.b16 %v4283
        %v4339 = vunpack.c.l.b16 %v4287
        %v4340 = vunpack.c.l.b16 %v4290
        %v4341 = vunpack.c.l.b16 %v4294
        %v4342 = vunpack.c.l.b16 %v4297
        %v4343 = vunpack.c.l.b16 %v4301
        %v4344 = vunpack.c.l.b16 %v4304
        %v4345 = vpack.c.b16 %v4314, %v4313
        %v4346 = vpack.c.b16 %v4316, %v4315
        %v4347 = vpack.c.b16 %v4318, %v4317
        %v4348 = vpack.c.b16 %v4320, %v4319
        %v4349 = vpack.c.b16 %v4322, %v4321
        %v4350 = vpack.c.b16 %v4324, %v4323
        %v4351 = vpack.c.b16 %v4326, %v4325
        %v4352 = vpack.c.b16 %v4328, %v4327
        %v4353 = vpack.c.b16 %v4330, %v4329
        %v4354 = vpack.c.b16 %v4332, %v4331
        %v4355 = vpack.c.b16 %v4334, %v4333
        %v4356 = vpack.c.b16 %v4336, %v4335
        %v4357 = vpack.c.b16 %v4338, %v4337
        %v4358 = vpack.c.b16 %v4340, %v4339
        %v4359 = vpack.c.b16 %v4342, %v4341
        %v4360 = vpack.c.b16 %v4344, %v4343
        %v4369 = vunpack.c.l.b16 %v4305
        %v4370 = vunpack.c.l.b16 %v4306
        %v4371 = vunpack.c.l.b16 %v4307
        %v4372 = vunpack.c.l.b16 %v4308
        %v4373 = vunpack.c.l.b16 %v4309
        %v4374 = vunpack.c.l.b16 %v4310
        %v4375 = vunpack.c.l.b16 %v4311
        %v4376 = vunpack.c.l.b16 %v4312
        %v4377 = vpack.c.b16 %v4370, %v4369
        %v4378 = vpack.c.b16 %v4372, %v4371
        %v4379 = vpack.c.b16 %v4374, %v4373
        %v4380 = vpack.c.b16 %v4376, %v4375
        %v4386 = vsel %vm1984, %v4345, 0
        %v4389 = vsel %vm1984, %v4346, 0
        %v4392 = vsel %vm1984, %v4347, 0
        %v4395 = vsel %vm1984, %v4348, 0
        %v4398 = vsel %vm1984, %v4349, 0
        %v4401 = vsel %vm1984, %v4350, 0
        %v4404 = vsel %vm1984, %v4351, 0
        %v4407 = vsel %vm1984, %v4352, 0
        %v4410 = vsel %vm1984, %v4353, 0
        %v4413 = vsel %vm1984, %v4354, 0
        %v4416 = vsel %vm1984, %v4355, 0
        %v4419 = vsel %vm1984, %v4356, 0
        %v4422 = vsel %vm1984, %v4357, 0
        %v4425 = vsel %vm1984, %v4358, 0
        %v4428 = vsel %vm1984, %v4359, 0
        %v4431 = vsel %vm1984, %v4360, 0
        %4433 = vmatprep.subr.bf16.mxu0 0
        %4434 = vmatpush1.bf16.msra.mxu0 %v4377
        %4435 = vmatprep.subr.bf16.mxu0 0
        %4436 = vmatpush1.bf16.msra.mxu0 %v4378
        %4437 = vmatprep.subr.bf16.mxu0 0
        %4438 = vmatpush1.bf16.msra.mxu0 %v4379
        %4439 = vmatprep.subr.bf16.mxu0 0
        %4440 = vmatpush1.bf16.msra.mxu0 %v4380
        %4441 = vmatprep.subr.bf16.mxu0 0
        %4442 = vmatpush1.bf16.msra.mxu0 0
        %4443 = vmatprep.subr.bf16.mxu0 0
        %4444 = vmatpush1.bf16.msra.mxu0 0
        %4445 = vmatprep.subr.bf16.mxu0 0
        %4446 = vmatpush1.bf16.msra.mxu0 0
        %4447 = vmatprep.subr.bf16.mxu0 0
        %4448 = vmatpush1.bf16.msra.mxu0 0
        %4449 = vmatprep.subr.bf16.mxu0 0
        %4450 = vmatpush1.bf16.msra.mxu0 0
        %4451 = vmatprep.subr.bf16.mxu0 0
        %4452 = vmatpush1.bf16.msra.mxu0 0
        %4453 = vmatprep.subr.bf16.mxu0 0
        %4454 = vmatpush1.bf16.msra.mxu0 0
        %4455 = vmatprep.subr.bf16.mxu0 0
        %4456 = vmatpush1.bf16.msra.mxu0 0
        %4457 = vmatprep.subr.bf16.mxu0 0
        %4458 = vmatpush1.bf16.msra.mxu0 0
        %4459 = vmatprep.subr.bf16.mxu0 0
        %4460 = vmatpush1.bf16.msra.mxu0 0
        %4461 = vmatprep.subr.bf16.mxu0 0
        %4462 = vmatpush1.bf16.msra.mxu0 0
        %4463 = vmatprep.subr.bf16.mxu0 0
        %4464 = vmatpush1.bf16.msra.mxu0 0
        %4465 = vmatprep.mubr.bf16.mxu0 0
        %4466 = vmatmul.mubr.bf16.gmra.mrb[0].mxu0 %v4386
        %v4467 = vpop.f32.mrb[0].mxu0
        %v4468 = vadd.f32 0.0, %v4467
        %v4469 = vpop.f32.mrb[0].mxu0
        %v4470 = vpop.f32.mrb[0].mxu0
        %v4471 = vadd.f32 0.0, %v4470
        %v4472 = vpop.f32.mrb[0].mxu0
        %4473 = vmatprep.mubr.bf16.mxu0 0
        %4474 = vmatmul.mubr.bf16.gmra.mrb[0].mxu0 %v4389
        %v4475 = vpop.f32.mrb[0].mxu0
        %v4476 = vadd.f32 0.0, %v4475
        %v4477 = vpop.f32.mrb[0].mxu0
        %v4478 = vpop.f32.mrb[0].mxu0
        %v4479 = vadd.f32 0.0, %v4478
        %v4480 = vpop.f32.mrb[0].mxu0
        %4481 = vmatprep.mubr.bf16.mxu0 0
        %4482 = vmatmul.mubr.bf16.gmra.mrb[0].mxu0 %v4392
        %v4483 = vpop.f32.mrb[0].mxu0
        %v4484 = vadd.f32 0.0, %v4483
        %v4485 = vpop.f32.mrb[0].mxu0
        %v4486 = vpop.f32.mrb[0].mxu0
        %v4487 = vadd.f32 0.0, %v4486
        %v4488 = vpop.f32.mrb[0].mxu0
        %4489 = vmatprep.mubr.bf16.mxu0 0
        %4490 = vmatmul.mubr.bf16.gmra.mrb[0].mxu0 %v4395
        %v4491 = vpop.f32.mrb[0].mxu0
        %v4492 = vadd.f32 0.0, %v4491
        %v4493 = vpop.f32.mrb[0].mxu0
        %v4494 = vpop.f32.mrb[0].mxu0
        %v4495 = vadd.f32 0.0, %v4494
        %v4496 = vpop.f32.mrb[0].mxu0
        %4497 = vmatprep.mubr.bf16.mxu0 0
        %4498 = vmatmul.mubr.bf16.gmra.mrb[0].mxu0 %v4398
        %v4499 = vpop.f32.mrb[0].mxu0
        %v4500 = vadd.f32 0.0, %v4499
        %v4501 = vpop.f32.mrb[0].mxu0
        %v4502 = vpop.f32.mrb[0].mxu0
        %v4503 = vadd.f32 0.0, %v4502
        %v4504 = vpop.f32.mrb[0].mxu0
        %4505 = vmatprep.mubr.bf16.mxu0 0
        %4506 = vmatmul.mubr.bf16.gmra.mrb[0].mxu0 %v4401
        %v4507 = vpop.f32.mrb[0].mxu0
        %v4508 = vadd.f32 0.0, %v4507
        %v4509 = vpop.f32.mrb[0].mxu0
        %v4510 = vpop.f32.mrb[0].mxu0
        %v4511 = vadd.f32 0.0, %v4510
        %v4512 = vpop.f32.mrb[0].mxu0
        %4513 = vmatprep.mubr.bf16.mxu0 0
        %4514 = vmatmul.mubr.bf16.gmra.mrb[0].mxu0 %v4404
        %v4515 = vpop.f32.mrb[0].mxu0
        %v4516 = vadd.f32 0.0, %v4515
        %v4517 = vpop.f32.mrb[0].mxu0
        %v4518 = vpop.f32.mrb[0].mxu0
        %v4519 = vadd.f32 0.0, %v4518
        %v4520 = vpop.f32.mrb[0].mxu0
        %4521 = vmatprep.mubr.bf16.mxu0 0
        %4522 = vmatmul.mubr.bf16.gmra.mrb[0].mxu0 %v4407
        %v4523 = vpop.f32.mrb[0].mxu0
        %v4524 = vadd.f32 0.0, %v4523
        %v4525 = vpop.f32.mrb[0].mxu0
        %v4526 = vpop.f32.mrb[0].mxu0
        %v4527 = vadd.f32 0.0, %v4526
        %v4528 = vpop.f32.mrb[0].mxu0
        %4529 = vmatprep.mubr.bf16.mxu0 0
        %4530 = vmatmul.mubr.bf16.gmra.mrb[0].mxu0 %v4410
        %v4531 = vpop.f32.mrb[0].mxu0
        %v4532 = vadd.f32 0.0, %v4531
        %v4533 = vpop.f32.mrb[0].mxu0
        %v4534 = vpop.f32.mrb[0].mxu0
        %v4535 = vadd.f32 0.0, %v4534
        %v4536 = vpop.f32.mrb[0].mxu0
        %4537 = vmatprep.mubr.bf16.mxu0 0
        %4538 = vmatmul.mubr.bf16.gmra.mrb[0].mxu0 %v4413
        %v4539 = vpop.f32.mrb[0].mxu0
        %v4540 = vadd.f32 0.0, %v4539
        %v4541 = vpop.f32.mrb[0].mxu0
        %v4542 = vpop.f32.mrb[0].mxu0
        %v4543 = vadd.f32 0.0, %v4542
        %v4544 = vpop.f32.mrb[0].mxu0
        %4545 = vmatprep.mubr.bf16.mxu0 0
        %4546 = vmatmul.mubr.bf16.gmra.mrb[0].mxu0 %v4416
        %v4547 = vpop.f32.mrb[0].mxu0
        %v4548 = vadd.f32 0.0, %v4547
        %v4549 = vpop.f32.mrb[0].mxu0
        %v4550 = vpop.f32.mrb[0].mxu0
        %v4551 = vadd.f32 0.0, %v4550
        %v4552 = vpop.f32.mrb[0].mxu0
        %4553 = vmatprep.mubr.bf16.mxu0 0
        %4554 = vmatmul.mubr.bf16.gmra.mrb[0].mxu0 %v4419
        %v4555 = vpop.f32.mrb[0].mxu0
        %v4556 = vadd.f32 0.0, %v4555
        %v4557 = vpop.f32.mrb[0].mxu0
        %v4558 = vpop.f32.mrb[0].mxu0
        %v4559 = vadd.f32 0.0, %v4558
        %v4560 = vpop.f32.mrb[0].mxu0
        %4561 = vmatprep.mubr.bf16.mxu0 0
        %4562 = vmatmul.mubr.bf16.gmra.mrb[0].mxu0 %v4422
        %v4563 = vpop.f32.mrb[0].mxu0
        %v4564 = vadd.f32 0.0, %v4563
        %v4565 = vpop.f32.mrb[0].mxu0
        %v4566 = vpop.f32.mrb[0].mxu0
        %v4567 = vadd.f32 0.0, %v4566
        %v4568 = vpop.f32.mrb[0].mxu0
        %4569 = vmatprep.mubr.bf16.mxu0 0
        %4570 = vmatmul.mubr.bf16.gmra.mrb[0].mxu0 %v4425
        %v4571 = vpop.f32.mrb[0].mxu0
        %v4572 = vadd.f32 0.0, %v4571
        %v4573 = vpop.f32.mrb[0].mxu0
        %v4574 = vpop.f32.mrb[0].mxu0
        %v4575 = vadd.f32 0.0, %v4574
        %v4576 = vpop.f32.mrb[0].mxu0
        %4577 = vmatprep.mubr.bf16.mxu0 0
        %4578 = vmatmul.mubr.bf16.gmra.mrb[0].mxu0 %v4428
        %v4579 = vpop.f32.mrb[0].mxu0
        %v4580 = vadd.f32 0.0, %v4579
        %v4581 = vpop.f32.mrb[0].mxu0
        %v4582 = vpop.f32.mrb[0].mxu0
        %v4583 = vadd.f32 0.0, %v4582
        %v4584 = vpop.f32.mrb[0].mxu0
        %4585 = vmatprep.mubr.bf16.mxu0 0
        %4586 = vmatmul.mubr.bf16.gmra.mrb[0].mxu0 %v4431
        %v4587 = vpop.f32.mrb[0].mxu0
        %v4588 = vadd.f32 0.0, %v4587
        %v4589 = vpop.f32.mrb[0].mxu0
        %v4590 = vpop.f32.mrb[0].mxu0
        %v4591 = vadd.f32 0.0, %v4590
        %v4592 = vpop.f32.mrb[0].mxu0
        %4593 = vdwg.mxu0
        %v4594 = vadd.f32 %v4097, %v4468
        %v4595 = vadd.f32 %v4098, %v4471
        %v4596 = vadd.f32 %v4099, %v4476
        %v4597 = vadd.f32 %v4100, %v4479
        %v4598 = vadd.f32 %v4101, %v4484
        %v4599 = vadd.f32 %v4102, %v4487
        %v4600 = vadd.f32 %v4103, %v4492
        %v4601 = vadd.f32 %v4104, %v4495
        %v4602 = vadd.f32 %v4105, %v4500
        %v4603 = vadd.f32 %v4106, %v4503
        %v4604 = vadd.f32 %v4107, %v4508
        %v4605 = vadd.f32 %v4108, %v4511
        %v4606 = vadd.f32 %v4109, %v4516
        %v4607 = vadd.f32 %v4110, %v4519
        %v4608 = vadd.f32 %v4111, %v4524
        %v4609 = vadd.f32 %v4112, %v4527
        %v4610 = vadd.f32 %v4113, %v4532
        %v4611 = vadd.f32 %v4114, %v4535
        %v4612 = vadd.f32 %v4115, %v4540
        %v4613 = vadd.f32 %v4116, %v4543
        %v4614 = vadd.f32 %v4117, %v4548
        %v4615 = vadd.f32 %v4118, %v4551
        %v4616 = vadd.f32 %v4119, %v4556
        %v4617 = vadd.f32 %v4120, %v4559
        %v4618 = vadd.f32 %v4121, %v4564
        %v4619 = vadd.f32 %v4122, %v4567
        %v4620 = vadd.f32 %v4123, %v4572
        %v4621 = vadd.f32 %v4124, %v4575
        %v4622 = vadd.f32 %v4125, %v4580
        %v4623 = vadd.f32 %v4126, %v4583
        %v4624 = vadd.f32 %v4127, %v4588
        %v4625 = vadd.f32 %v4128, %v4591
        %s4626 = scalar_lea.vmem [#allocation2], 24
        %v4627 = vld [vmem:[%s4626] sm:$0xf]
        %v4628 = vld [vmem:[%s4626 + $0x4] sm:$0xf]
        %v4629 = vld [vmem:[%s4626 + $0xc] sm:$0xf]
        %v4630 = vld [vmem:[%s4626 + $0x10] sm:$0xf]
        %v4631 = vld [vmem:[%s4626 + $0x18] sm:$0xf]
        %v4632 = vld [vmem:[%s4626 + $0x1c] sm:$0xf]
        %v4633 = vld [vmem:[%s4626 + $0x24] sm:$0xf]
        %v4634 = vld [vmem:[%s4626 + $0x28] sm:$0xf]
        %v4635 = vld [vmem:[%s4626 + $0x30] sm:$0xf]
        %v4636 = vld [vmem:[%s4626 + $0x34] sm:$0xf]
        %v4637 = vld [vmem:[%s4626 + $0x3c] sm:$0xf]
        %v4638 = vld [vmem:[%s4626 + $0x40] sm:$0xf]
        %v4639 = vld [vmem:[%s4626 + $0x48] sm:$0xf]
        %v4640 = vld [vmem:[%s4626 + $0x4c] sm:$0xf]
        %v4641 = vld [vmem:[%s4626 + $0x54] sm:$0xf]
        %v4642 = vld [vmem:[%s4626 + $0x58] sm:$0xf]
        %v4643 = vld [vmem:[%s4626 + $0x60] sm:$0xf]
        %v4644 = vld [vmem:[%s4626 + $0x64] sm:$0xf]
        %v4645 = vld [vmem:[%s4626 + $0x6c] sm:$0xf]
        %v4646 = vld [vmem:[%s4626 + $0x70] sm:$0xf]
        %v4647 = vld [vmem:[%s4626 + $0x78] sm:$0xf]
        %v4648 = vld [vmem:[%s4626 + $0x7c] sm:$0xf]
        %v4649 = vld [vmem:[%s4626 + $0x84] sm:$0xf]
        %v4650 = vld [vmem:[%s4626 + $0x88] sm:$0xf]
        %v4651 = vld [vmem:[%s4626 + $0x90] sm:$0xf]
        %v4652 = vld [vmem:[%s4626 + $0x94] sm:$0xf]
        %v4653 = vld [vmem:[%s4626 + $0x9c] sm:$0xf]
        %v4654 = vld [vmem:[%s4626 + $0xa0] sm:$0xf]
        %v4655 = vld [vmem:[%s4626 + $0xa8] sm:$0xf]
        %v4656 = vld [vmem:[%s4626 + $0xac] sm:$0xf]
        %v4657 = vld [vmem:[%s4626 + $0xb4] sm:$0xf]
        %v4658 = vld [vmem:[%s4626 + $0xb8] sm:$0xf]
        %v4659 = vld [vmem:[%s3 + $0xc0] sm:$0xf]
        %v4660 = vld [vmem:[%s3 + $0xc4] sm:$0xf]
        %v4661 = vld [vmem:[%s3 + $0xc8] sm:$0xf]
        %v4662 = vld [vmem:[%s3 + $0xcc] sm:$0xf]
        %v4663 = vld [vmem:[%s3 + $0xd0] sm:$0xf]
        %v4664 = vld [vmem:[%s3 + $0xd4] sm:$0xf]
        %v4665 = vld [vmem:[%s3 + $0xd8] sm:$0xf]
        %v4666 = vld [vmem:[%s3 + $0xdc] sm:$0xf]
        %v4699 = vunpack.c.l.b16 %v4627
        %v4700 = vunpack.c.l.b16 %v4628
        %v4701 = vunpack.c.l.b16 %v4629
        %v4702 = vunpack.c.l.b16 %v4630
        %v4703 = vunpack.c.l.b16 %v4631
        %v4704 = vunpack.c.l.b16 %v4632
        %v4705 = vunpack.c.l.b16 %v4633
        %v4706 = vunpack.c.l.b16 %v4634
        %v4707 = vunpack.c.l.b16 %v4635
        %v4708 = vunpack.c.l.b16 %v4636
        %v4709 = vunpack.c.l.b16 %v4637
        %v4710 = vunpack.c.l.b16 %v4638
        %v4711 = vunpack.c.l.b16 %v4639
        %v4712 = vunpack.c.l.b16 %v4640
        %v4713 = vunpack.c.l.b16 %v4641
        %v4714 = vunpack.c.l.b16 %v4642
        %v4715 = vunpack.c.l.b16 %v4643
        %v4716 = vunpack.c.l.b16 %v4644
        %v4717 = vunpack.c.l.b16 %v4645
        %v4718 = vunpack.c.l.b16 %v4646
        %v4719 = vunpack.c.l.b16 %v4647
        %v4720 = vunpack.c.l.b16 %v4648
        %v4721 = vunpack.c.l.b16 %v4649
        %v4722 = vunpack.c.l.b16 %v4650
        %v4723 = vunpack.c.l.b16 %v4651
        %v4724 = vunpack.c.l.b16 %v4652
        %v4725 = vunpack.c.l.b16 %v4653
        %v4726 = vunpack.c.l.b16 %v4654
        %v4727 = vunpack.c.l.b16 %v4655
        %v4728 = vunpack.c.l.b16 %v4656
        %v4729 = vunpack.c.l.b16 %v4657
        %v4730 = vunpack.c.l.b16 %v4658
        %v4731 = vpack.c.b16 %v4700, %v4699
        %v4732 = vpack.c.b16 %v4702, %v4701
        %v4733 = vpack.c.b16 %v4704, %v4703
        %v4734 = vpack.c.b16 %v4706, %v4705
        %v4735 = vpack.c.b16 %v4708, %v4707
        %v4736 = vpack.c.b16 %v4710, %v4709
        %v4737 = vpack.c.b16 %v4712, %v4711
        %v4738 = vpack.c.b16 %v4714, %v4713
        %v4739 = vpack.c.b16 %v4716, %v4715
        %v4740 = vpack.c.b16 %v4718, %v4717
        %v4741 = vpack.c.b16 %v4720, %v4719
        %v4742 = vpack.c.b16 %v4722, %v4721
        %v4743 = vpack.c.b16 %v4724, %v4723
        %v4744 = vpack.c.b16 %v4726, %v4725
        %v4745 = vpack.c.b16 %v4728, %v4727
        %v4746 = vpack.c.b16 %v4730, %v4729
        %v4755 = vunpack.c.l.b16 %v4659
        %v4756 = vunpack.c.l.b16 %v4660
        %v4757 = vunpack.c.l.b16 %v4661
        %v4758 = vunpack.c.l.b16 %v4662
        %v4759 = vunpack.c.l.b16 %v4663
        %v4760 = vunpack.c.l.b16 %v4664
        %v4761 = vunpack.c.l.b16 %v4665
        %v4762 = vunpack.c.l.b16 %v4666
        %v4763 = vpack.c.b16 %v4756, %v4755
        %v4764 = vpack.c.b16 %v4758, %v4757
        %v4765 = vpack.c.b16 %v4760, %v4759
        %v4766 = vpack.c.b16 %v4762, %v4761
        %v4772 = vsel %vm1984, %v4731, 0
        %v4775 = vsel %vm1984, %v4732, 0
        %v4778 = vsel %vm1984, %v4733, 0
        %v4781 = vsel %vm1984, %v4734, 0
        %v4784 = vsel %vm1984, %v4735, 0
        %v4787 = vsel %vm1984, %v4736, 0
        %v4790 = vsel %vm1984, %v4737, 0
        %v4793 = vsel %vm1984, %v4738, 0
        %v4796 = vsel %vm1984, %v4739, 0
        %v4799 = vsel %vm1984, %v4740, 0
        %v4802 = vsel %vm1984, %v4741, 0
        %v4805 = vsel %vm1984, %v4742, 0
        %v4808 = vsel %vm1984, %v4743, 0
        %v4811 = vsel %vm1984, %v4744, 0
        %v4814 = vsel %vm1984, %v4745, 0
        %v4817 = vsel %vm1984, %v4746, 0
        %4819 = vmatprep.subr.bf16.mxu0 0
        %4820 = vmatpush1.bf16.msra.mxu0 %v4763
        %4821 = vmatprep.subr.bf16.mxu0 0
        %4822 = vmatpush1.bf16.msra.mxu0 %v4764
        %4823 = vmatprep.subr.bf16.mxu0 0
        %4824 = vmatpush1.bf16.msra.mxu0 %v4765
        %4825 = vmatprep.subr.bf16.mxu0 0
        %4826 = vmatpush1.bf16.msra.mxu0 %v4766
        %4827 = vmatprep.subr.bf16.mxu0 0
        %4828 = vmatpush1.bf16.msra.mxu0 0
        %4829 = vmatprep.subr.bf16.mxu0 0
        %4830 = vmatpush1.bf16.msra.mxu0 0
        %4831 = vmatprep.subr.bf16.mxu0 0
        %4832 = vmatpush1.bf16.msra.mxu0 0
        %4833 = vmatprep.subr.bf16.mxu0 0
        %4834 = vmatpush1.bf16.msra.mxu0 0
        %4835 = vmatprep.subr.bf16.mxu0 0
        %4836 = vmatpush1.bf16.msra.mxu0 0
        %4837 = vmatprep.subr.bf16.mxu0 0
        %4838 = vmatpush1.bf16.msra.mxu0 0
        %4839 = vmatprep.subr.bf16.mxu0 0
        %4840 = vmatpush1.bf16.msra.mxu0 0
        %4841 = vmatprep.subr.bf16.mxu0 0
        %4842 = vmatpush1.bf16.msra.mxu0 0
        %4843 = vmatprep.subr.bf16.mxu0 0
        %4844 = vmatpush1.bf16.msra.mxu0 0
        %4845 = vmatprep.subr.bf16.mxu0 0
        %4846 = vmatpush1.bf16.msra.mxu0 0
        %4847 = vmatprep.subr.bf16.mxu0 0
        %4848 = vmatpush1.bf16.msra.mxu0 0
        %4849 = vmatprep.subr.bf16.mxu0 0
        %4850 = vmatpush1.bf16.msra.mxu0 0
        %4851 = vmatprep.mubr.bf16.mxu0 0
        %4852 = vmatmul.mubr.bf16.gmra.mrb[0].mxu0 %v4772
        %v4853 = vpop.f32.mrb[0].mxu0
        %v4854 = vadd.f32 0.0, %v4853
        %v4855 = vpop.f32.mrb[0].mxu0
        %v4856 = vpop.f32.mrb[0].mxu0
        %v4857 = vadd.f32 0.0, %v4856
        %v4858 = vpop.f32.mrb[0].mxu0
        %4859 = vmatprep.mubr.bf16.mxu0 0
        %4860 = vmatmul.mubr.bf16.gmra.mrb[0].mxu0 %v4775
        %v4861 = vpop.f32.mrb[0].mxu0
        %v4862 = vadd.f32 0.0, %v4861
        %v4863 = vpop.f32.mrb[0].mxu0
        %v4864 = vpop.f32.mrb[0].mxu0
        %v4865 = vadd.f32 0.0, %v4864
        %v4866 = vpop.f32.mrb[0].mxu0
        %4867 = vmatprep.mubr.bf16.mxu0 0
        %4868 = vmatmul.mubr.bf16.gmra.mrb[0].mxu0 %v4778
        %v4869 = vpop.f32.mrb[0].mxu0
        %v4870 = vadd.f32 0.0, %v4869
        %v4871 = vpop.f32.mrb[0].mxu0
        %v4872 = vpop.f32.mrb[0].mxu0
        %v4873 = vadd.f32 0.0, %v4872
        %v4874 = vpop.f32.mrb[0].mxu0
        %4875 = vmatprep.mubr.bf16.mxu0 0
        %4876 = vmatmul.mubr.bf16.gmra.mrb[0].mxu0 %v4781
        %v4877 = vpop.f32.mrb[0].mxu0
        %v4878 = vadd.f32 0.0, %v4877
        %v4879 = vpop.f32.mrb[0].mxu0
        %v4880 = vpop.f32.mrb[0].mxu0
        %v4881 = vadd.f32 0.0, %v4880
        %v4882 = vpop.f32.mrb[0].mxu0
        %4883 = vmatprep.mubr.bf16.mxu0 0
        %4884 = vmatmul.mubr.bf16.gmra.mrb[0].mxu0 %v4784
        %v4885 = vpop.f32.mrb[0].mxu0
        %v4886 = vadd.f32 0.0, %v4885
        %v4887 = vpop.f32.mrb[0].mxu0
        %v4888 = vpop.f32.mrb[0].mxu0
        %v4889 = vadd.f32 0.0, %v4888
        %v4890 = vpop.f32.mrb[0].mxu0
        %4891 = vmatprep.mubr.bf16.mxu0 0
        %4892 = vmatmul.mubr.bf16.gmra.mrb[0].mxu0 %v4787
        %v4893 = vpop.f32.mrb[0].mxu0
        %v4894 = vadd.f32 0.0, %v4893
        %v4895 = vpop.f32.mrb[0].mxu0
        %v4896 = vpop.f32.mrb[0].mxu0
        %v4897 = vadd.f32 0.0, %v4896
        %v4898 = vpop.f32.mrb[0].mxu0
        %4899 = vmatprep.mubr.bf16.mxu0 0
        %4900 = vmatmul.mubr.bf16.gmra.mrb[0].mxu0 %v4790
        %v4901 = vpop.f32.mrb[0].mxu0
        %v4902 = vadd.f32 0.0, %v4901
        %v4903 = vpop.f32.mrb[0].mxu0
        %v4904 = vpop.f32.mrb[0].mxu0
        %v4905 = vadd.f32 0.0, %v4904
        %v4906 = vpop.f32.mrb[0].mxu0
        %4907 = vmatprep.mubr.bf16.mxu0 0
        %4908 = vmatmul.mubr.bf16.gmra.mrb[0].mxu0 %v4793
        %v4909 = vpop.f32.mrb[0].mxu0
        %v4910 = vadd.f32 0.0, %v4909
        %v4911 = vpop.f32.mrb[0].mxu0
        %v4912 = vpop.f32.mrb[0].mxu0
        %v4913 = vadd.f32 0.0, %v4912
        %v4914 = vpop.f32.mrb[0].mxu0
        %4915 = vmatprep.mubr.bf16.mxu0 0
        %4916 = vmatmul.mubr.bf16.gmra.mrb[0].mxu0 %v4796
        %v4917 = vpop.f32.mrb[0].mxu0
        %v4918 = vadd.f32 0.0, %v4917
        %v4919 = vpop.f32.mrb[0].mxu0
        %v4920 = vpop.f32.mrb[0].mxu0
        %v4921 = vadd.f32 0.0, %v4920
        %v4922 = vpop.f32.mrb[0].mxu0
        %4923 = vmatprep.mubr.bf16.mxu0 0
        %4924 = vmatmul.mubr.bf16.gmra.mrb[0].mxu0 %v4799
        %v4925 = vpop.f32.mrb[0].mxu0
        %v4926 = vadd.f32 0.0, %v4925
        %v4927 = vpop.f32.mrb[0].mxu0
        %v4928 = vpop.f32.mrb[0].mxu0
        %v4929 = vadd.f32 0.0, %v4928
        %v4930 = vpop.f32.mrb[0].mxu0
        %4931 = vmatprep.mubr.bf16.mxu0 0
        %4932 = vmatmul.mubr.bf16.gmra.mrb[0].mxu0 %v4802
        %v4933 = vpop.f32.mrb[0].mxu0
        %v4934 = vadd.f32 0.0, %v4933
        %v4935 = vpop.f32.mrb[0].mxu0
        %v4936 = vpop.f32.mrb[0].mxu0
        %v4937 = vadd.f32 0.0, %v4936
        %v4938 = vpop.f32.mrb[0].mxu0
        %4939 = vmatprep.mubr.bf16.mxu0 0
        %4940 = vmatmul.mubr.bf16.gmra.mrb[0].mxu0 %v4805
        %v4941 = vpop.f32.mrb[0].mxu0
        %v4942 = vadd.f32 0.0, %v4941
        %v4943 = vpop.f32.mrb[0].mxu0
        %v4944 = vpop.f32.mrb[0].mxu0
        %v4945 = vadd.f32 0.0, %v4944
        %v4946 = vpop.f32.mrb[0].mxu0
        %4947 = vmatprep.mubr.bf16.mxu0 0
        %4948 = vmatmul.mubr.bf16.gmra.mrb[0].mxu0 %v4808
        %v4949 = vpop.f32.mrb[0].mxu0
        %v4950 = vadd.f32 0.0, %v4949
        %v4951 = vpop.f32.mrb[0].mxu0
        %v4952 = vpop.f32.mrb[0].mxu0
        %v4953 = vadd.f32 0.0, %v4952
        %v4954 = vpop.f32.mrb[0].mxu0
        %4955 = vmatprep.mubr.bf16.mxu0 0
        %4956 = vmatmul.mubr.bf16.gmra.mrb[0].mxu0 %v4811
        %v4957 = vpop.f32.mrb[0].mxu0
        %v4958 = vadd.f32 0.0, %v4957
        %v4959 = vpop.f32.mrb[0].mxu0
        %v4960 = vpop.f32.mrb[0].mxu0
        %v4961 = vadd.f32 0.0, %v4960
        %v4962 = vpop.f32.mrb[0].mxu0
        %4963 = vmatprep.mubr.bf16.mxu0 0
        %4964 = vmatmul.mubr.bf16.gmra.mrb[0].mxu0 %v4814
        %v4965 = vpop.f32.mrb[0].mxu0
        %v4966 = vadd.f32 0.0, %v4965
        %v4967 = vpop.f32.mrb[0].mxu0
        %v4968 = vpop.f32.mrb[0].mxu0
        %v4969 = vadd.f32 0.0, %v4968
        %v4970 = vpop.f32.mrb[0].mxu0
        %4971 = vmatprep.mubr.bf16.mxu0 0
        %4972 = vmatmul.mubr.bf16.gmra.mrb[0].mxu0 %v4817
        %v4973 = vpop.f32.mrb[0].mxu0
        %v4974 = vadd.f32 0.0, %v4973
        %v4975 = vpop.f32.mrb[0].mxu0
        %v4976 = vpop.f32.mrb[0].mxu0
        %v4977 = vadd.f32 0.0, %v4976
        %v4978 = vpop.f32.mrb[0].mxu0
        %4979 = vdwg.mxu0
        %v4980 = vadd.f32 %v4594, %v4854
        %v4981 = vadd.f32 %v4595, %v4857
        %v4982 = vadd.f32 %v4596, %v4862
        %v4983 = vadd.f32 %v4597, %v4865
        %v4984 = vadd.f32 %v4598, %v4870
        %v4985 = vadd.f32 %v4599, %v4873
        %v4986 = vadd.f32 %v4600, %v4878
        %v4987 = vadd.f32 %v4601, %v4881
        %v4988 = vadd.f32 %v4602, %v4886
        %v4989 = vadd.f32 %v4603, %v4889
        %v4990 = vadd.f32 %v4604, %v4894
        %v4991 = vadd.f32 %v4605, %v4897
        %v4992 = vadd.f32 %v4606, %v4902
        %v4993 = vadd.f32 %v4607, %v4905
        %v4994 = vadd.f32 %v4608, %v4910
        %v4995 = vadd.f32 %v4609, %v4913
        %v4996 = vadd.f32 %v4610, %v4918
        %v4997 = vadd.f32 %v4611, %v4921
        %v4998 = vadd.f32 %v4612, %v4926
        %v4999 = vadd.f32 %v4613, %v4929
        %v5000 = vadd.f32 %v4614, %v4934
        %v5001 = vadd.f32 %v4615, %v4937
        %v5002 = vadd.f32 %v4616, %v4942
        %v5003 = vadd.f32 %v4617, %v4945
        %v5004 = vadd.f32 %v4618, %v4950
        %v5005 = vadd.f32 %v4619, %v4953
        %v5006 = vadd.f32 %v4620, %v4958
        %v5007 = vadd.f32 %v4621, %v4961
        %v5008 = vadd.f32 %v4622, %v4966
        %v5009 = vadd.f32 %v4623, %v4969
        %v5010 = vadd.f32 %v4624, %v4974
        %v5011 = vadd.f32 %v4625, %v4977
        %v5012 = vld [vmem:[%s4626] sm:$0xf]
        %v5013 = vld [vmem:[%s4626 + $0x4] sm:$0xf]
        %v5014 = vld [vmem:[%s4626 + $0x8] sm:$0x1]
        %v5015 = vld [vmem:[%s4626 + $0xc] sm:$0xf]
        %v5016 = vld [vmem:[%s4626 + $0x10] sm:$0xf]
        %v5017 = vld [vmem:[%s4626 + $0x14] sm:$0x1]
        %v5018 = vld [vmem:[%s4626 + $0x18] sm:$0xf]
        %v5019 = vld [vmem:[%s4626 + $0x1c] sm:$0xf]
        %v5020 = vld [vmem:[%s4626 + $0x20] sm:$0x1]
        %v5021 = vld [vmem:[%s4626 + $0x24] sm:$0xf]
        %v5022 = vld [vmem:[%s4626 + $0x28] sm:$0xf]
        %v5023 = vld [vmem:[%s4626 + $0x2c] sm:$0x1]
        %v5024 = vld [vmem:[%s4626 + $0x30] sm:$0xf]
        %v5025 = vld [vmem:[%s4626 + $0x34] sm:$0xf]
        %v5026 = vld [vmem:[%s4626 + $0x38] sm:$0x1]
        %v5027 = vld [vmem:[%s4626 + $0x3c] sm:$0xf]
        %v5028 = vld [vmem:[%s4626 + $0x40] sm:$0xf]
        %v5029 = vld [vmem:[%s4626 + $0x44] sm:$0x1]
        %v5030 = vld [vmem:[%s4626 + $0x48] sm:$0xf]
        %v5031 = vld [vmem:[%s4626 + $0x4c] sm:$0xf]
        %v5032 = vld [vmem:[%s4626 + $0x50] sm:$0x1]
        %v5033 = vld [vmem:[%s4626 + $0x54] sm:$0xf]
        %v5034 = vld [vmem:[%s4626 + $0x58] sm:$0xf]
        %v5035 = vld [vmem:[%s4626 + $0x5c] sm:$0x1]
        %v5036 = vld [vmem:[%s4626 + $0x60] sm:$0xf]
        %v5037 = vld [vmem:[%s4626 + $0x64] sm:$0xf]
        %v5038 = vld [vmem:[%s4626 + $0x68] sm:$0x1]
        %v5039 = vld [vmem:[%s4626 + $0x6c] sm:$0xf]
        %v5040 = vld [vmem:[%s4626 + $0x70] sm:$0xf]
        %v5041 = vld [vmem:[%s4626 + $0x74] sm:$0x1]
        %v5042 = vld [vmem:[%s4626 + $0x78] sm:$0xf]
        %v5043 = vld [vmem:[%s4626 + $0x7c] sm:$0xf]
        %v5044 = vld [vmem:[%s4626 + $0x80] sm:$0x1]
        %v5045 = vld [vmem:[%s4626 + $0x84] sm:$0xf]
        %v5046 = vld [vmem:[%s4626 + $0x88] sm:$0xf]
        %v5047 = vld [vmem:[%s4626 + $0x8c] sm:$0x1]
        %v5048 = vld [vmem:[%s4626 + $0x90] sm:$0xf]
        %v5049 = vld [vmem:[%s4626 + $0x94] sm:$0xf]
        %v5050 = vld [vmem:[%s4626 + $0x98] sm:$0x1]
        %v5051 = vld [vmem:[%s4626 + $0x9c] sm:$0xf]
        %v5052 = vld [vmem:[%s4626 + $0xa0] sm:$0xf]
        %v5053 = vld [vmem:[%s4626 + $0xa4] sm:$0x1]
        %v5054 = vld [vmem:[%s4626 + $0xa8] sm:$0xf]
        %v5055 = vld [vmem:[%s4626 + $0xac] sm:$0xf]
        %v5056 = vld [vmem:[%s4626 + $0xb0] sm:$0x1]
        %v5057 = vld [vmem:[%s4626 + $0xb4] sm:$0xf]
        %v5058 = vld [vmem:[%s4626 + $0xb8] sm:$0xf]
        %v5059 = vld [vmem:[%s4626 + $0xbc] sm:$0x1]
        %v5061 = vshrl.u32 %v5012, 16
        %v5063 = vrot.slane %v5061, 4
        %v5064 = vshll.u32 %v5012, 16
        %v5066 = vrot.slane %v5064, 5
        %v5067 = vor.u32 %v5063, %v5066
        %v5068 = vrot.slane %v5067, 4
        %v5070 = vshll.u32 %v5013, 16
        %v5072 = vrot.slane %v5070, 5
        %v5073 = vsel %vm1519, %v5068, %v5072
        %v5074 = vshrl.u32 %v5013, 16
        %v5076 = vrot.slane %v5074, 4
        %v5077 = vor.u32 %v5076, %v5072
        %v5078 = vrot.slane %v5077, 4
        %v5080 = vshll.u32 %v5014, 16
        %v5082 = vrot.slane %v5080, 5
        %v5083 = vsel %vm1519, %v5078, %v5082
        %v5085 = vshrl.u32 %v5015, 16
        %v5087 = vrot.slane %v5085, 4
        %v5088 = vshll.u32 %v5015, 16
        %v5090 = vrot.slane %v5088, 5
        %v5091 = vor.u32 %v5087, %v5090
        %v5092 = vrot.slane %v5091, 4
        %v5094 = vshll.u32 %v5016, 16
        %v5096 = vrot.slane %v5094, 5
        %v5097 = vsel %vm1519, %v5092, %v5096
        %v5098 = vshrl.u32 %v5016, 16
        %v5100 = vrot.slane %v5098, 4
        %v5101 = vor.u32 %v5100, %v5096
        %v5102 = vrot.slane %v5101, 4
        %v5104 = vshll.u32 %v5017, 16
        %v5106 = vrot.slane %v5104, 5
        %v5107 = vsel %vm1519, %v5102, %v5106
        %v5109 = vshrl.u32 %v5018, 16
        %v5111 = vrot.slane %v5109, 4
        %v5112 = vshll.u32 %v5018, 16
        %v5114 = vrot.slane %v5112, 5
        %v5115 = vor.u32 %v5111, %v5114
        %v5116 = vrot.slane %v5115, 4
        %v5118 = vshll.u32 %v5019, 16
        %v5120 = vrot.slane %v5118, 5
        %v5121 = vsel %vm1519, %v5116, %v5120
        %v5122 = vshrl.u32 %v5019, 16
        %v5124 = vrot.slane %v5122, 4
        %v5125 = vor.u32 %v5124, %v5120
        %v5126 = vrot.slane %v5125, 4
        %v5128 = vshll.u32 %v5020, 16
        %v5130 = vrot.slane %v5128, 5
        %v5131 = vsel %vm1519, %v5126, %v5130
        %v5133 = vshrl.u32 %v5021, 16
        %v5135 = vrot.slane %v5133, 4
        %v5136 = vshll.u32 %v5021, 16
        %v5138 = vrot.slane %v5136, 5
        %v5139 = vor.u32 %v5135, %v5138
        %v5140 = vrot.slane %v5139, 4
        %v5142 = vshll.u32 %v5022, 16
        %v5144 = vrot.slane %v5142, 5
        %v5145 = vsel %vm1519, %v5140, %v5144
        %v5146 = vshrl.u32 %v5022, 16
        %v5148 = vrot.slane %v5146, 4
        %v5149 = vor.u32 %v5148, %v5144
        %v5150 = vrot.slane %v5149, 4
        %v5152 = vshll.u32 %v5023, 16
        %v5154 = vrot.slane %v5152, 5
        %v5155 = vsel %vm1519, %v5150, %v5154
        %v5157 = vshrl.u32 %v5024, 16
        %v5159 = vrot.slane %v5157, 4
        %v5160 = vshll.u32 %v5024, 16
        %v5162 = vrot.slane %v5160, 5
        %v5163 = vor.u32 %v5159, %v5162
        %v5164 = vrot.slane %v5163, 4
        %v5166 = vshll.u32 %v5025, 16
        %v5168 = vrot.slane %v5166, 5
        %v5169 = vsel %vm1519, %v5164, %v5168
        %v5170 = vshrl.u32 %v5025, 16
        %v5172 = vrot.slane %v5170, 4
        %v5173 = vor.u32 %v5172, %v5168
        %v5174 = vrot.slane %v5173, 4
        %v5176 = vshll.u32 %v5026, 16
        %v5178 = vrot.slane %v5176, 5
        %v5179 = vsel %vm1519, %v5174, %v5178
        %v5181 = vshrl.u32 %v5027, 16
        %v5183 = vrot.slane %v5181, 4
        %v5184 = vshll.u32 %v5027, 16
        %v5186 = vrot.slane %v5184, 5
        %v5187 = vor.u32 %v5183, %v5186
        %v5188 = vrot.slane %v5187, 4
        %v5190 = vshll.u32 %v5028, 16
        %v5192 = vrot.slane %v5190, 5
        %v5193 = vsel %vm1519, %v5188, %v5192
        %v5194 = vshrl.u32 %v5028, 16
        %v5196 = vrot.slane %v5194, 4
        %v5197 = vor.u32 %v5196, %v5192
        %v5198 = vrot.slane %v5197, 4
        %v5200 = vshll.u32 %v5029, 16
        %v5202 = vrot.slane %v5200, 5
        %v5203 = vsel %vm1519, %v5198, %v5202
        %v5205 = vshrl.u32 %v5030, 16
        %v5207 = vrot.slane %v5205, 4
        %v5208 = vshll.u32 %v5030, 16
        %v5210 = vrot.slane %v5208, 5
        %v5211 = vor.u32 %v5207, %v5210
        %v5212 = vrot.slane %v5211, 4
        %v5214 = vshll.u32 %v5031, 16
        %v5216 = vrot.slane %v5214, 5
        %v5217 = vsel %vm1519, %v5212, %v5216
        %v5218 = vshrl.u32 %v5031, 16
        %v5220 = vrot.slane %v5218, 4
        %v5221 = vor.u32 %v5220, %v5216
        %v5222 = vrot.slane %v5221, 4
        %v5224 = vshll.u32 %v5032, 16
        %v5226 = vrot.slane %v5224, 5
        %v5227 = vsel %vm1519, %v5222, %v5226
        %v5229 = vshrl.u32 %v5033, 16
        %v5231 = vrot.slane %v5229, 4
        %v5232 = vshll.u32 %v5033, 16
        %v5234 = vrot.slane %v5232, 5
        %v5235 = vor.u32 %v5231, %v5234
        %v5236 = vrot.slane %v5235, 4
        %v5238 = vshll.u32 %v5034, 16
        %v5240 = vrot.slane %v5238, 5
        %v5241 = vsel %vm1519, %v5236, %v5240
        %v5242 = vshrl.u32 %v5034, 16
        %v5244 = vrot.slane %v5242, 4
        %v5245 = vor.u32 %v5244, %v5240
        %v5246 = vrot.slane %v5245, 4
        %v5248 = vshll.u32 %v5035, 16
        %v5250 = vrot.slane %v5248, 5
        %v5251 = vsel %vm1519, %v5246, %v5250
        %v5253 = vshrl.u32 %v5036, 16
        %v5255 = vrot.slane %v5253, 4
        %v5256 = vshll.u32 %v5036, 16
        %v5258 = vrot.slane %v5256, 5
        %v5259 = vor.u32 %v5255, %v5258
        %v5260 = vrot.slane %v5259, 4
        %v5262 = vshll.u32 %v5037, 16
        %v5264 = vrot.slane %v5262, 5
        %v5265 = vsel %vm1519, %v5260, %v5264
        %v5266 = vshrl.u32 %v5037, 16
        %v5268 = vrot.slane %v5266, 4
        %v5269 = vor.u32 %v5268, %v5264
        %v5270 = vrot.slane %v5269, 4
        %v5272 = vshll.u32 %v5038, 16
        %v5274 = vrot.slane %v5272, 5
        %v5275 = vsel %vm1519, %v5270, %v5274
        %v5277 = vshrl.u32 %v5039, 16
        %v5279 = vrot.slane %v5277, 4
        %v5280 = vshll.u32 %v5039, 16
        %v5282 = vrot.slane %v5280, 5
        %v5283 = vor.u32 %v5279, %v5282
        %v5284 = vrot.slane %v5283, 4
        %v5286 = vshll.u32 %v5040, 16
        %v5288 = vrot.slane %v5286, 5
        %v5289 = vsel %vm1519, %v5284, %v5288
        %v5290 = vshrl.u32 %v5040, 16
        %v5292 = vrot.slane %v5290, 4
        %v5293 = vor.u32 %v5292, %v5288
        %v5294 = vrot.slane %v5293, 4
        %v5296 = vshll.u32 %v5041, 16
        %v5298 = vrot.slane %v5296, 5
        %v5299 = vsel %vm1519, %v5294, %v5298
        %v5301 = vshrl.u32 %v5042, 16
        %v5303 = vrot.slane %v5301, 4
        %v5304 = vshll.u32 %v5042, 16
        %v5306 = vrot.slane %v5304, 5
        %v5307 = vor.u32 %v5303, %v5306
        %v5308 = vrot.slane %v5307, 4
        %v5310 = vshll.u32 %v5043, 16
        %v5312 = vrot.slane %v5310, 5
        %v5313 = vsel %vm1519, %v5308, %v5312
        %v5314 = vshrl.u32 %v5043, 16
        %v5316 = vrot.slane %v5314, 4
        %v5317 = vor.u32 %v5316, %v5312
        %v5318 = vrot.slane %v5317, 4
        %v5320 = vshll.u32 %v5044, 16
        %v5322 = vrot.slane %v5320, 5
        %v5323 = vsel %vm1519, %v5318, %v5322
        %v5325 = vshrl.u32 %v5045, 16
        %v5327 = vrot.slane %v5325, 4
        %v5328 = vshll.u32 %v5045, 16
        %v5330 = vrot.slane %v5328, 5
        %v5331 = vor.u32 %v5327, %v5330
        %v5332 = vrot.slane %v5331, 4
        %v5334 = vshll.u32 %v5046, 16
        %v5336 = vrot.slane %v5334, 5
        %v5337 = vsel %vm1519, %v5332, %v5336
        %v5338 = vshrl.u32 %v5046, 16
        %v5340 = vrot.slane %v5338, 4
        %v5341 = vor.u32 %v5340, %v5336
        %v5342 = vrot.slane %v5341, 4
        %v5344 = vshll.u32 %v5047, 16
        %v5346 = vrot.slane %v5344, 5
        %v5347 = vsel %vm1519, %v5342, %v5346
        %v5349 = vshrl.u32 %v5048, 16
        %v5351 = vrot.slane %v5349, 4
        %v5352 = vshll.u32 %v5048, 16
        %v5354 = vrot.slane %v5352, 5
        %v5355 = vor.u32 %v5351, %v5354
        %v5356 = vrot.slane %v5355, 4
        %v5358 = vshll.u32 %v5049, 16
        %v5360 = vrot.slane %v5358, 5
        %v5361 = vsel %vm1519, %v5356, %v5360
        %v5362 = vshrl.u32 %v5049, 16
        %v5364 = vrot.slane %v5362, 4
        %v5365 = vor.u32 %v5364, %v5360
        %v5366 = vrot.slane %v5365, 4
        %v5368 = vshll.u32 %v5050, 16
        %v5370 = vrot.slane %v5368, 5
        %v5371 = vsel %vm1519, %v5366, %v5370
        %v5373 = vshrl.u32 %v5051, 16
        %v5375 = vrot.slane %v5373, 4
        %v5376 = vshll.u32 %v5051, 16
        %v5378 = vrot.slane %v5376, 5
        %v5379 = vor.u32 %v5375, %v5378
        %v5380 = vrot.slane %v5379, 4
        %v5382 = vshll.u32 %v5052, 16
        %v5384 = vrot.slane %v5382, 5
        %v5385 = vsel %vm1519, %v5380, %v5384
        %v5386 = vshrl.u32 %v5052, 16
        %v5388 = vrot.slane %v5386, 4
        %v5389 = vor.u32 %v5388, %v5384
        %v5390 = vrot.slane %v5389, 4
        %v5392 = vshll.u32 %v5053, 16
        %v5394 = vrot.slane %v5392, 5
        %v5395 = vsel %vm1519, %v5390, %v5394
        %v5397 = vshrl.u32 %v5054, 16
        %v5399 = vrot.slane %v5397, 4
        %v5400 = vshll.u32 %v5054, 16
        %v5402 = vrot.slane %v5400, 5
        %v5403 = vor.u32 %v5399, %v5402
        %v5404 = vrot.slane %v5403, 4
        %v5406 = vshll.u32 %v5055, 16
        %v5408 = vrot.slane %v5406, 5
        %v5409 = vsel %vm1519, %v5404, %v5408
        %v5410 = vshrl.u32 %v5055, 16
        %v5412 = vrot.slane %v5410, 4
        %v5413 = vor.u32 %v5412, %v5408
        %v5414 = vrot.slane %v5413, 4
        %v5416 = vshll.u32 %v5056, 16
        %v5418 = vrot.slane %v5416, 5
        %v5419 = vsel %vm1519, %v5414, %v5418
        %v5421 = vshrl.u32 %v5057, 16
        %v5423 = vrot.slane %v5421, 4
        %v5424 = vshll.u32 %v5057, 16
        %v5426 = vrot.slane %v5424, 5
        %v5427 = vor.u32 %v5423, %v5426
        %v5428 = vrot.slane %v5427, 4
        %v5430 = vshll.u32 %v5058, 16
        %v5432 = vrot.slane %v5430, 5
        %v5433 = vsel %vm1519, %v5428, %v5432
        %v5434 = vshrl.u32 %v5058, 16
        %v5436 = vrot.slane %v5434, 4
        %v5437 = vor.u32 %v5436, %v5432
        %v5438 = vrot.slane %v5437, 4
        %v5440 = vshll.u32 %v5059, 16
        %v5442 = vrot.slane %v5440, 5
        %v5443 = vsel %vm1519, %v5438, %v5442
        %v5444 = vld [vmem:[%s3 + $0xe0] sm:$0xf]
        %v5445 = vld [vmem:[%s3 + $0xe4] sm:$0xf]
        %v5446 = vld [vmem:[%s3 + $0xe8] sm:$0xf]
        %v5447 = vld [vmem:[%s3 + $0xec] sm:$0xf]
        %v5448 = vld [vmem:[%s3 + $0xf0] sm:$0xf]
        %v5449 = vld [vmem:[%s3 + $0xf4] sm:$0xf]
        %v5450 = vld [vmem:[%s3 + $0xf8] sm:$0xf]
        %v5451 = vld [vmem:[%s3 + $0xfc] sm:$0xf]
        %v5452 = vunpack.c.l.b16 %v5073
        %v5453 = vunpack.c.l.b16 %v5083
        %v5454 = vunpack.c.l.b16 %v5097
        %v5455 = vunpack.c.l.b16 %v5107
        %v5456 = vunpack.c.l.b16 %v5121
        %v5457 = vunpack.c.l.b16 %v5131
        %v5458 = vunpack.c.l.b16 %v5145
        %v5459 = vunpack.c.l.b16 %v5155
        %v5460 = vunpack.c.l.b16 %v5169
        %v5461 = vunpack.c.l.b16 %v5179
        %v5462 = vunpack.c.l.b16 %v5193
        %v5463 = vunpack.c.l.b16 %v5203
        %v5464 = vunpack.c.l.b16 %v5217
        %v5465 = vunpack.c.l.b16 %v5227
        %v5466 = vunpack.c.l.b16 %v5241
        %v5467 = vunpack.c.l.b16 %v5251
        %v5468 = vunpack.c.l.b16 %v5265
        %v5469 = vunpack.c.l.b16 %v5275
        %v5470 = vunpack.c.l.b16 %v5289
        %v5471 = vunpack.c.l.b16 %v5299
        %v5472 = vunpack.c.l.b16 %v5313
        %v5473 = vunpack.c.l.b16 %v5323
        %v5474 = vunpack.c.l.b16 %v5337
        %v5475 = vunpack.c.l.b16 %v5347
        %v5476 = vunpack.c.l.b16 %v5361
        %v5477 = vunpack.c.l.b16 %v5371
        %v5478 = vunpack.c.l.b16 %v5385
        %v5479 = vunpack.c.l.b16 %v5395
        %v5480 = vunpack.c.l.b16 %v5409
        %v5481 = vunpack.c.l.b16 %v5419
        %v5482 = vunpack.c.l.b16 %v5433
        %v5483 = vunpack.c.l.b16 %v5443
        %v5484 = vpack.c.b16 %v5453, %v5452
        %v5485 = vpack.c.b16 %v5455, %v5454
        %v5486 = vpack.c.b16 %v5457, %v5456
        %v5487 = vpack.c.b16 %v5459, %v5458
        %v5488 = vpack.c.b16 %v5461, %v5460
        %v5489 = vpack.c.b16 %v5463, %v5462
        %v5490 = vpack.c.b16 %v5465, %v5464
        %v5491 = vpack.c.b16 %v5467, %v5466
        %v5492 = vpack.c.b16 %v5469, %v5468
        %v5493 = vpack.c.b16 %v5471, %v5470
        %v5494 = vpack.c.b16 %v5473, %v5472
        %v5495 = vpack.c.b16 %v5475, %v5474
        %v5496 = vpack.c.b16 %v5477, %v5476
        %v5497 = vpack.c.b16 %v5479, %v5478
        %v5498 = vpack.c.b16 %v5481, %v5480
        %v5499 = vpack.c.b16 %v5483, %v5482
        %v5508 = vunpack.c.l.b16 %v5444
        %v5509 = vunpack.c.l.b16 %v5445
        %v5510 = vunpack.c.l.b16 %v5446
        %v5511 = vunpack.c.l.b16 %v5447
        %v5512 = vunpack.c.l.b16 %v5448
        %v5513 = vunpack.c.l.b16 %v5449
        %v5514 = vunpack.c.l.b16 %v5450
        %v5515 = vunpack.c.l.b16 %v5451
        %v5516 = vpack.c.b16 %v5509, %v5508
        %v5517 = vpack.c.b16 %v5511, %v5510
        %v5518 = vpack.c.b16 %v5513, %v5512
        %v5519 = vpack.c.b16 %v5515, %v5514
        %v5525 = vsel %vm1984, %v5484, 0
        %v5528 = vsel %vm1984, %v5485, 0
        %v5531 = vsel %vm1984, %v5486, 0
        %v5534 = vsel %vm1984, %v5487, 0
        %v5537 = vsel %vm1984, %v5488, 0
        %v5540 = vsel %vm1984, %v5489, 0
        %v5543 = vsel %vm1984, %v5490, 0
        %v5546 = vsel %vm1984, %v5491, 0
        %v5549 = vsel %vm1984, %v5492, 0
        %v5552 = vsel %vm1984, %v5493, 0
        %v5555 = vsel %vm1984, %v5494, 0
        %v5558 = vsel %vm1984, %v5495, 0
        %v5561 = vsel %vm1984, %v5496, 0
        %v5564 = vsel %vm1984, %v5497, 0
        %v5567 = vsel %vm1984, %v5498, 0
        %v5570 = vsel %vm1984, %v5499, 0
        %5572 = vmatprep.subr.bf16.mxu0 0
        %5573 = vmatpush1.bf16.msra.mxu0 %v5516
        %5574 = vmatprep.subr.bf16.mxu0 0
        %5575 = vmatpush1.bf16.msra.mxu0 %v5517
        %5576 = vmatprep.subr.bf16.mxu0 0
        %5577 = vmatpush1.bf16.msra.mxu0 %v5518
        %5578 = vmatprep.subr.bf16.mxu0 0
        %5579 = vmatpush1.bf16.msra.mxu0 %v5519
        %5580 = vmatprep.subr.bf16.mxu0 0
        %5581 = vmatpush1.bf16.msra.mxu0 0
        %5582 = vmatprep.subr.bf16.mxu0 0
        %5583 = vmatpush1.bf16.msra.mxu0 0
        %5584 = vmatprep.subr.bf16.mxu0 0
        %5585 = vmatpush1.bf16.msra.mxu0 0
        %5586 = vmatprep.subr.bf16.mxu0 0
        %5587 = vmatpush1.bf16.msra.mxu0 0
        %5588 = vmatprep.subr.bf16.mxu0 0
        %5589 = vmatpush1.bf16.msra.mxu0 0
        %5590 = vmatprep.subr.bf16.mxu0 0
        %5591 = vmatpush1.bf16.msra.mxu0 0
        %5592 = vmatprep.subr.bf16.mxu0 0
        %5593 = vmatpush1.bf16.msra.mxu0 0
        %5594 = vmatprep.subr.bf16.mxu0 0
        %5595 = vmatpush1.bf16.msra.mxu0 0
        %5596 = vmatprep.subr.bf16.mxu0 0
        %5597 = vmatpush1.bf16.msra.mxu0 0
        %5598 = vmatprep.subr.bf16.mxu0 0
        %5599 = vmatpush1.bf16.msra.mxu0 0
        %5600 = vmatprep.subr.bf16.mxu0 0
        %5601 = vmatpush1.bf16.msra.mxu0 0
        %5602 = vmatprep.subr.bf16.mxu0 0
        %5603 = vmatpush1.bf16.msra.mxu0 0
        %5604 = vmatprep.mubr.bf16.mxu0 0
        %5605 = vmatmul.mubr.bf16.gmra.mrb[0].mxu0 %v5525
        %v5606 = vpop.f32.mrb[0].mxu0
        %v5607 = vadd.f32 0.0, %v5606
        %v5608 = vpop.f32.mrb[0].mxu0
        %v5609 = vpop.f32.mrb[0].mxu0
        %v5610 = vadd.f32 0.0, %v5609
        %v5611 = vpop.f32.mrb[0].mxu0
        %5612 = vmatprep.mubr.bf16.mxu0 0
        %5613 = vmatmul.mubr.bf16.gmra.mrb[0].mxu0 %v5528
        %v5614 = vpop.f32.mrb[0].mxu0
        %v5615 = vadd.f32 0.0, %v5614
        %v5616 = vpop.f32.mrb[0].mxu0
        %v5617 = vpop.f32.mrb[0].mxu0
        %v5618 = vadd.f32 0.0, %v5617
        %v5619 = vpop.f32.mrb[0].mxu0
        %5620 = vmatprep.mubr.bf16.mxu0 0
        %5621 = vmatmul.mubr.bf16.gmra.mrb[0].mxu0 %v5531
        %v5622 = vpop.f32.mrb[0].mxu0
        %v5623 = vadd.f32 0.0, %v5622
        %v5624 = vpop.f32.mrb[0].mxu0
        %v5625 = vpop.f32.mrb[0].mxu0
        %v5626 = vadd.f32 0.0, %v5625
        %v5627 = vpop.f32.mrb[0].mxu0
        %5628 = vmatprep.mubr.bf16.mxu0 0
        %5629 = vmatmul.mubr.bf16.gmra.mrb[0].mxu0 %v5534
        %v5630 = vpop.f32.mrb[0].mxu0
        %v5631 = vadd.f32 0.0, %v5630
        %v5632 = vpop.f32.mrb[0].mxu0
        %v5633 = vpop.f32.mrb[0].mxu0
        %v5634 = vadd.f32 0.0, %v5633
        %v5635 = vpop.f32.mrb[0].mxu0
        %5636 = vmatprep.mubr.bf16.mxu0 0
        %5637 = vmatmul.mubr.bf16.gmra.mrb[0].mxu0 %v5537
        %v5638 = vpop.f32.mrb[0].mxu0
        %v5639 = vadd.f32 0.0, %v5638
        %v5640 = vpop.f32.mrb[0].mxu0
        %v5641 = vpop.f32.mrb[0].mxu0
        %v5642 = vadd.f32 0.0, %v5641
        %v5643 = vpop.f32.mrb[0].mxu0
        %5644 = vmatprep.mubr.bf16.mxu0 0
        %5645 = vmatmul.mubr.bf16.gmra.mrb[0].mxu0 %v5540
        %v5646 = vpop.f32.mrb[0].mxu0
        %v5647 = vadd.f32 0.0, %v5646
        %v5648 = vpop.f32.mrb[0].mxu0
        %v5649 = vpop.f32.mrb[0].mxu0
        %v5650 = vadd.f32 0.0, %v5649
        %v5651 = vpop.f32.mrb[0].mxu0
        %5652 = vmatprep.mubr.bf16.mxu0 0
        %5653 = vmatmul.mubr.bf16.gmra.mrb[0].mxu0 %v5543
        %v5654 = vpop.f32.mrb[0].mxu0
        %v5655 = vadd.f32 0.0, %v5654
        %v5656 = vpop.f32.mrb[0].mxu0
        %v5657 = vpop.f32.mrb[0].mxu0
        %v5658 = vadd.f32 0.0, %v5657
        %v5659 = vpop.f32.mrb[0].mxu0
        %5660 = vmatprep.mubr.bf16.mxu0 0
        %5661 = vmatmul.mubr.bf16.gmra.mrb[0].mxu0 %v5546
        %v5662 = vpop.f32.mrb[0].mxu0
        %v5663 = vadd.f32 0.0, %v5662
        %v5664 = vpop.f32.mrb[0].mxu0
        %v5665 = vpop.f32.mrb[0].mxu0
        %v5666 = vadd.f32 0.0, %v5665
        %v5667 = vpop.f32.mrb[0].mxu0
        %5668 = vmatprep.mubr.bf16.mxu0 0
        %5669 = vmatmul.mubr.bf16.gmra.mrb[0].mxu0 %v5549
        %v5670 = vpop.f32.mrb[0].mxu0
        %v5671 = vadd.f32 0.0, %v5670
        %v5672 = vpop.f32.mrb[0].mxu0
        %v5673 = vpop.f32.mrb[0].mxu0
        %v5674 = vadd.f32 0.0, %v5673
        %v5675 = vpop.f32.mrb[0].mxu0
        %5676 = vmatprep.mubr.bf16.mxu0 0
        %5677 = vmatmul.mubr.bf16.gmra.mrb[0].mxu0 %v5552
        %v5678 = vpop.f32.mrb[0].mxu0
        %v5679 = vadd.f32 0.0, %v5678
        %v5680 = vpop.f32.mrb[0].mxu0
        %v5681 = vpop.f32.mrb[0].mxu0
        %v5682 = vadd.f32 0.0, %v5681
        %v5683 = vpop.f32.mrb[0].mxu0
        %5684 = vmatprep.mubr.bf16.mxu0 0
        %5685 = vmatmul.mubr.bf16.gmra.mrb[0].mxu0 %v5555
        %v5686 = vpop.f32.mrb[0].mxu0
        %v5687 = vadd.f32 0.0, %v5686
        %v5688 = vpop.f32.mrb[0].mxu0
        %v5689 = vpop.f32.mrb[0].mxu0
        %v5690 = vadd.f32 0.0, %v5689
        %v5691 = vpop.f32.mrb[0].mxu0
        %5692 = vmatprep.mubr.bf16.mxu0 0
        %5693 = vmatmul.mubr.bf16.gmra.mrb[0].mxu0 %v5558
        %v5694 = vpop.f32.mrb[0].mxu0
        %v5695 = vadd.f32 0.0, %v5694
        %v5696 = vpop.f32.mrb[0].mxu0
        %v5697 = vpop.f32.mrb[0].mxu0
        %v5698 = vadd.f32 0.0, %v5697
        %v5699 = vpop.f32.mrb[0].mxu0
        %5700 = vmatprep.mubr.bf16.mxu0 0
        %5701 = vmatmul.mubr.bf16.gmra.mrb[0].mxu0 %v5561
        %v5702 = vpop.f32.mrb[0].mxu0
        %v5703 = vadd.f32 0.0, %v5702
        %v5704 = vpop.f32.mrb[0].mxu0
        %v5705 = vpop.f32.mrb[0].mxu0
        %v5706 = vadd.f32 0.0, %v5705
        %v5707 = vpop.f32.mrb[0].mxu0
        %5708 = vmatprep.mubr.bf16.mxu0 0
        %5709 = vmatmul.mubr.bf16.gmra.mrb[0].mxu0 %v5564
        %v5710 = vpop.f32.mrb[0].mxu0
        %v5711 = vadd.f32 0.0, %v5710
        %v5712 = vpop.f32.mrb[0].mxu0
        %v5713 = vpop.f32.mrb[0].mxu0
        %v5714 = vadd.f32 0.0, %v5713
        %v5715 = vpop.f32.mrb[0].mxu0
        %5716 = vmatprep.mubr.bf16.mxu0 0
        %5717 = vmatmul.mubr.bf16.gmra.mrb[0].mxu0 %v5567
        %v5718 = vpop.f32.mrb[0].mxu0
        %v5719 = vadd.f32 0.0, %v5718
        %v5720 = vpop.f32.mrb[0].mxu0
        %v5721 = vpop.f32.mrb[0].mxu0
        %v5722 = vadd.f32 0.0, %v5721
        %v5723 = vpop.f32.mrb[0].mxu0
        %5724 = vmatprep.mubr.bf16.mxu0 0
        %5725 = vmatmul.mubr.bf16.gmra.mrb[0].mxu0 %v5570
        %v5726 = vpop.f32.mrb[0].mxu0
        %v5727 = vadd.f32 0.0, %v5726
        %v5728 = vpop.f32.mrb[0].mxu0
        %v5729 = vpop.f32.mrb[0].mxu0
        %v5730 = vadd.f32 0.0, %v5729
        %v5731 = vpop.f32.mrb[0].mxu0
        %5732 = vdwg.mxu0
        %v5733 = vadd.f32 %v4980, %v5607
        %v5734 = vadd.f32 %v4981, %v5610
        %v5735 = vadd.f32 %v4982, %v5615
        %v5736 = vadd.f32 %v4983, %v5618
        %v5737 = vadd.f32 %v4984, %v5623
        %v5738 = vadd.f32 %v4985, %v5626
        %v5739 = vadd.f32 %v4986, %v5631
        %v5740 = vadd.f32 %v4987, %v5634
        %v5741 = vadd.f32 %v4988, %v5639
        %v5742 = vadd.f32 %v4989, %v5642
        %v5743 = vadd.f32 %v4990, %v5647
        %v5744 = vadd.f32 %v4991, %v5650
        %v5745 = vadd.f32 %v4992, %v5655
        %v5746 = vadd.f32 %v4993, %v5658
        %v5747 = vadd.f32 %v4994, %v5663
        %v5748 = vadd.f32 %v4995, %v5666
        %v5749 = vadd.f32 %v4996, %v5671
        %v5750 = vadd.f32 %v4997, %v5674
        %v5751 = vadd.f32 %v4998, %v5679
        %v5752 = vadd.f32 %v4999, %v5682
        %v5753 = vadd.f32 %v5000, %v5687
        %v5754 = vadd.f32 %v5001, %v5690
        %v5755 = vadd.f32 %v5002, %v5695
        %v5756 = vadd.f32 %v5003, %v5698
        %v5757 = vadd.f32 %v5004, %v5703
        %v5758 = vadd.f32 %v5005, %v5706
        %v5759 = vadd.f32 %v5006, %v5711
        %v5760 = vadd.f32 %v5007, %v5714
        %v5761 = vadd.f32 %v5008, %v5719
        %v5762 = vadd.f32 %v5009, %v5722
        %v5763 = vadd.f32 %v5010, %v5727
        %v5764 = vadd.f32 %v5011, %v5730
        %v5765 = vld [vmem:[%s4626] sm:$0xe]
        %v5766 = vld [vmem:[%s4626 + $0xc] sm:$0xe]
        %v5767 = vld [vmem:[%s4626 + $0x18] sm:$0xe]
        %v5768 = vld [vmem:[%s4626 + $0x24] sm:$0xe]
        %v5769 = vld [vmem:[%s4626 + $0x30] sm:$0xe]
        %v5770 = vld [vmem:[%s4626 + $0x3c] sm:$0xe]
        %v5771 = vld [vmem:[%s4626 + $0x48] sm:$0xe]
        %v5772 = vld [vmem:[%s4626 + $0x54] sm:$0xe]
        %v5773 = vld [vmem:[%s4626 + $0x60] sm:$0xe]
        %v5774 = vld [vmem:[%s4626 + $0x6c] sm:$0xe]
        %v5775 = vld [vmem:[%s4626 + $0x78] sm:$0xe]
        %v5776 = vld [vmem:[%s4626 + $0x84] sm:$0xe]
        %v5777 = vld [vmem:[%s4626 + $0x90] sm:$0xe]
        %v5778 = vld [vmem:[%s4626 + $0x9c] sm:$0xe]
        %v5779 = vld [vmem:[%s4626 + $0xa8] sm:$0xe]
        %v5780 = vld [vmem:[%s4626 + $0xb4] sm:$0xe]
        %v5829 = vrot.slane %v5765, 5
        %v5830 = vrot.slane %v5829, 4
        %v5831 = vrot.slane %v5013, 5
        %v5832 = vsel %vm2557, %v5830, %v5831
        %v5833 = vrot.slane %v5831, 4
        %v5834 = vrot.slane %v5014, 5
        %v5835 = vsel %vm2557, %v5833, %v5834
        %v5836 = vrot.slane %v5766, 5
        %v5837 = vrot.slane %v5836, 4
        %v5838 = vrot.slane %v5016, 5
        %v5839 = vsel %vm2557, %v5837, %v5838
        %v5840 = vrot.slane %v5838, 4
        %v5841 = vrot.slane %v5017, 5
        %v5842 = vsel %vm2557, %v5840, %v5841
        %v5843 = vrot.slane %v5767, 5
        %v5844 = vrot.slane %v5843, 4
        %v5845 = vrot.slane %v5019, 5
        %v5846 = vsel %vm2557, %v5844, %v5845
        %v5847 = vrot.slane %v5845, 4
        %v5848 = vrot.slane %v5020, 5
        %v5849 = vsel %vm2557, %v5847, %v5848
        %v5850 = vrot.slane %v5768, 5
        %v5851 = vrot.slane %v5850, 4
        %v5852 = vrot.slane %v5022, 5
        %v5853 = vsel %vm2557, %v5851, %v5852
        %v5854 = vrot.slane %v5852, 4
        %v5855 = vrot.slane %v5023, 5
        %v5856 = vsel %vm2557, %v5854, %v5855
        %v5857 = vrot.slane %v5769, 5
        %v5858 = vrot.slane %v5857, 4
        %v5859 = vrot.slane %v5025, 5
        %v5860 = vsel %vm2557, %v5858, %v5859
        %v5861 = vrot.slane %v5859, 4
        %v5862 = vrot.slane %v5026, 5
        %v5863 = vsel %vm2557, %v5861, %v5862
        %v5864 = vrot.slane %v5770, 5
        %v5865 = vrot.slane %v5864, 4
        %v5866 = vrot.slane %v5028, 5
        %v5867 = vsel %vm2557, %v5865, %v5866
        %v5868 = vrot.slane %v5866, 4
        %v5869 = vrot.slane %v5029, 5
        %v5870 = vsel %vm2557, %v5868, %v5869
        %v5871 = vrot.slane %v5771, 5
        %v5872 = vrot.slane %v5871, 4
        %v5873 = vrot.slane %v5031, 5
        %v5874 = vsel %vm2557, %v5872, %v5873
        %v5875 = vrot.slane %v5873, 4
        %v5876 = vrot.slane %v5032, 5
        %v5877 = vsel %vm2557, %v5875, %v5876
        %v5878 = vrot.slane %v5772, 5
        %v5879 = vrot.slane %v5878, 4
        %v5880 = vrot.slane %v5034, 5
        %v5881 = vsel %vm2557, %v5879, %v5880
        %v5882 = vrot.slane %v5880, 4
        %v5883 = vrot.slane %v5035, 5
        %v5884 = vsel %vm2557, %v5882, %v5883
        %v5885 = vrot.slane %v5773, 5
        %v5886 = vrot.slane %v5885, 4
        %v5887 = vrot.slane %v5037, 5
        %v5888 = vsel %vm2557, %v5886, %v5887
        %v5889 = vrot.slane %v5887, 4
        %v5890 = vrot.slane %v5038, 5
        %v5891 = vsel %vm2557, %v5889, %v5890
        %v5892 = vrot.slane %v5774, 5
        %v5893 = vrot.slane %v5892, 4
        %v5894 = vrot.slane %v5040, 5
        %v5895 = vsel %vm2557, %v5893, %v5894
        %v5896 = vrot.slane %v5894, 4
        %v5897 = vrot.slane %v5041, 5
        %v5898 = vsel %vm2557, %v5896, %v5897
        %v5899 = vrot.slane %v5775, 5
        %v5900 = vrot.slane %v5899, 4
        %v5901 = vrot.slane %v5043, 5
        %v5902 = vsel %vm2557, %v5900, %v5901
        %v5903 = vrot.slane %v5901, 4
        %v5904 = vrot.slane %v5044, 5
        %v5905 = vsel %vm2557, %v5903, %v5904
        %v5906 = vrot.slane %v5776, 5
        %v5907 = vrot.slane %v5906, 4
        %v5908 = vrot.slane %v5046, 5
        %v5909 = vsel %vm2557, %v5907, %v5908
        %v5910 = vrot.slane %v5908, 4
        %v5911 = vrot.slane %v5047, 5
        %v5912 = vsel %vm2557, %v5910, %v5911
        %v5913 = vrot.slane %v5777, 5
        %v5914 = vrot.slane %v5913, 4
        %v5915 = vrot.slane %v5049, 5
        %v5916 = vsel %vm2557, %v5914, %v5915
        %v5917 = vrot.slane %v5915, 4
        %v5918 = vrot.slane %v5050, 5
        %v5919 = vsel %vm2557, %v5917, %v5918
        %v5920 = vrot.slane %v5778, 5
        %v5921 = vrot.slane %v5920, 4
        %v5922 = vrot.slane %v5052, 5
        %v5923 = vsel %vm2557, %v5921, %v5922
        %v5924 = vrot.slane %v5922, 4
        %v5925 = vrot.slane %v5053, 5
        %v5926 = vsel %vm2557, %v5924, %v5925
        %v5927 = vrot.slane %v5779, 5
        %v5928 = vrot.slane %v5927, 4
        %v5929 = vrot.slane %v5055, 5
        %v5930 = vsel %vm2557, %v5928, %v5929
        %v5931 = vrot.slane %v5929, 4
        %v5932 = vrot.slane %v5056, 5
        %v5933 = vsel %vm2557, %v5931, %v5932
        %v5934 = vrot.slane %v5780, 5
        %v5935 = vrot.slane %v5934, 4
        %v5936 = vrot.slane %v5058, 5
        %v5937 = vsel %vm2557, %v5935, %v5936
        %v5938 = vrot.slane %v5936, 4
        %v5939 = vrot.slane %v5059, 5
        %v5940 = vsel %vm2557, %v5938, %v5939
        %v5941 = vld [vmem:[%s3 + $0x100] sm:$0xf]
        %v5942 = vld [vmem:[%s3 + $0x104] sm:$0xf]
        %v5943 = vld [vmem:[%s3 + $0x108] sm:$0xf]
        %v5944 = vld [vmem:[%s3 + $0x10c] sm:$0xf]
        %v5945 = vld [vmem:[%s3 + $0x110] sm:$0xf]
        %v5946 = vld [vmem:[%s3 + $0x114] sm:$0xf]
        %v5947 = vld [vmem:[%s3 + $0x118] sm:$0xf]
        %v5948 = vld [vmem:[%s3 + $0x11c] sm:$0xf]
        %v5949 = vunpack.c.l.b16 %v5832
        %v5950 = vunpack.c.l.b16 %v5835
        %v5951 = vunpack.c.l.b16 %v5839
        %v5952 = vunpack.c.l.b16 %v5842
        %v5953 = vunpack.c.l.b16 %v5846
        %v5954 = vunpack.c.l.b16 %v5849
        %v5955 = vunpack.c.l.b16 %v5853
        %v5956 = vunpack.c.l.b16 %v5856
        %v5957 = vunpack.c.l.b16 %v5860
        %v5958 = vunpack.c.l.b16 %v5863
        %v5959 = vunpack.c.l.b16 %v5867
        %v5960 = vunpack.c.l.b16 %v5870
        %v5961 = vunpack.c.l.b16 %v5874
        %v5962 = vunpack.c.l.b16 %v5877
        %v5963 = vunpack.c.l.b16 %v5881
        %v5964 = vunpack.c.l.b16 %v5884
        %v5965 = vunpack.c.l.b16 %v5888
        %v5966 = vunpack.c.l.b16 %v5891
        %v5967 = vunpack.c.l.b16 %v5895
        %v5968 = vunpack.c.l.b16 %v5898
        %v5969 = vunpack.c.l.b16 %v5902
        %v5970 = vunpack.c.l.b16 %v5905
        %v5971 = vunpack.c.l.b16 %v5909
        %v5972 = vunpack.c.l.b16 %v5912
        %v5973 = vunpack.c.l.b16 %v5916
        %v5974 = vunpack.c.l.b16 %v5919
        %v5975 = vunpack.c.l.b16 %v5923
        %v5976 = vunpack.c.l.b16 %v5926
        %v5977 = vunpack.c.l.b16 %v5930
        %v5978 = vunpack.c.l.b16 %v5933
        %v5979 = vunpack.c.l.b16 %v5937
        %v5980 = vunpack.c.l.b16 %v5940
        %v5981 = vpack.c.b16 %v5950, %v5949
        %v5982 = vpack.c.b16 %v5952, %v5951
        %v5983 = vpack.c.b16 %v5954, %v5953
        %v5984 = vpack.c.b16 %v5956, %v5955
        %v5985 = vpack.c.b16 %v5958, %v5957
        %v5986 = vpack.c.b16 %v5960, %v5959
        %v5987 = vpack.c.b16 %v5962, %v5961
        %v5988 = vpack.c.b16 %v5964, %v5963
        %v5989 = vpack.c.b16 %v5966, %v5965
        %v5990 = vpack.c.b16 %v5968, %v5967
        %v5991 = vpack.c.b16 %v5970, %v5969
        %v5992 = vpack.c.b16 %v5972, %v5971
        %v5993 = vpack.c.b16 %v5974, %v5973
        %v5994 = vpack.c.b16 %v5976, %v5975
        %v5995 = vpack.c.b16 %v5978, %v5977
        %v5996 = vpack.c.b16 %v5980, %v5979
        %v6005 = vunpack.c.l.b16 %v5941
        %v6006 = vunpack.c.l.b16 %v5942
        %v6007 = vunpack.c.l.b16 %v5943
        %v6008 = vunpack.c.l.b16 %v5944
        %v6009 = vunpack.c.l.b16 %v5945
        %v6010 = vunpack.c.l.b16 %v5946
        %v6011 = vunpack.c.l.b16 %v5947
        %v6012 = vunpack.c.l.b16 %v5948
        %v6013 = vpack.c.b16 %v6006, %v6005
        %v6014 = vpack.c.b16 %v6008, %v6007
        %v6015 = vpack.c.b16 %v6010, %v6009
        %v6016 = vpack.c.b16 %v6012, %v6011
        %v6022 = vsel %vm1984, %v5981, 0
        %v6025 = vsel %vm1984, %v5982, 0
        %v6028 = vsel %vm1984, %v5983, 0
        %v6031 = vsel %vm1984, %v5984, 0
        %v6034 = vsel %vm1984, %v5985, 0
        %v6037 = vsel %vm1984, %v5986, 0
        %v6040 = vsel %vm1984, %v5987, 0
        %v6043 = vsel %vm1984, %v5988, 0
        %v6046 = vsel %vm1984, %v5989, 0
        %v6049 = vsel %vm1984, %v5990, 0
        %v6052 = vsel %vm1984, %v5991, 0
        %v6055 = vsel %vm1984, %v5992, 0
        %v6058 = vsel %vm1984, %v5993, 0
        %v6061 = vsel %vm1984, %v5994, 0
        %v6064 = vsel %vm1984, %v5995, 0
        %v6067 = vsel %vm1984, %v5996, 0
        %6069 = vmatprep.subr.bf16.mxu0 0
        %6070 = vmatpush1.bf16.msra.mxu0 %v6013
        %6071 = vmatprep.subr.bf16.mxu0 0
        %6072 = vmatpush1.bf16.msra.mxu0 %v6014
        %6073 = vmatprep.subr.bf16.mxu0 0
        %6074 = vmatpush1.bf16.msra.mxu0 %v6015
        %6075 = vmatprep.subr.bf16.mxu0 0
        %6076 = vmatpush1.bf16.msra.mxu0 %v6016
        %6077 = vmatprep.subr.bf16.mxu0 0
        %6078 = vmatpush1.bf16.msra.mxu0 0
        %6079 = vmatprep.subr.bf16.mxu0 0
        %6080 = vmatpush1.bf16.msra.mxu0 0
        %6081 = vmatprep.subr.bf16.mxu0 0
        %6082 = vmatpush1.bf16.msra.mxu0 0
        %6083 = vmatprep.subr.bf16.mxu0 0
        %6084 = vmatpush1.bf16.msra.mxu0 0
        %6085 = vmatprep.subr.bf16.mxu0 0
        %6086 = vmatpush1.bf16.msra.mxu0 0
        %6087 = vmatprep.subr.bf16.mxu0 0
        %6088 = vmatpush1.bf16.msra.mxu0 0
        %6089 = vmatprep.subr.bf16.mxu0 0
        %6090 = vmatpush1.bf16.msra.mxu0 0
        %6091 = vmatprep.subr.bf16.mxu0 0
        %6092 = vmatpush1.bf16.msra.mxu0 0
        %6093 = vmatprep.subr.bf16.mxu0 0
        %6094 = vmatpush1.bf16.msra.mxu0 0
        %6095 = vmatprep.subr.bf16.mxu0 0
        %6096 = vmatpush1.bf16.msra.mxu0 0
        %6097 = vmatprep.subr.bf16.mxu0 0
        %6098 = vmatpush1.bf16.msra.mxu0 0
        %6099 = vmatprep.subr.bf16.mxu0 0
        %6100 = vmatpush1.bf16.msra.mxu0 0
        %6101 = vmatprep.mubr.bf16.mxu0 0
        %6102 = vmatmul.mubr.bf16.gmra.mrb[0].mxu0 %v6022
        %v6103 = vpop.f32.mrb[0].mxu0
        %v6104 = vadd.f32 0.0, %v6103
        %v6105 = vpop.f32.mrb[0].mxu0
        %v6106 = vpop.f32.mrb[0].mxu0
        %v6107 = vadd.f32 0.0, %v6106
        %v6108 = vpop.f32.mrb[0].mxu0
        %6109 = vmatprep.mubr.bf16.mxu0 0
        %6110 = vmatmul.mubr.bf16.gmra.mrb[0].mxu0 %v6025
        %v6111 = vpop.f32.mrb[0].mxu0
        %v6112 = vadd.f32 0.0, %v6111
        %v6113 = vpop.f32.mrb[0].mxu0
        %v6114 = vpop.f32.mrb[0].mxu0
        %v6115 = vadd.f32 0.0, %v6114
        %v6116 = vpop.f32.mrb[0].mxu0
        %6117 = vmatprep.mubr.bf16.mxu0 0
        %6118 = vmatmul.mubr.bf16.gmra.mrb[0].mxu0 %v6028
        %v6119 = vpop.f32.mrb[0].mxu0
        %v6120 = vadd.f32 0.0, %v6119
        %v6121 = vpop.f32.mrb[0].mxu0
        %v6122 = vpop.f32.mrb[0].mxu0
        %v6123 = vadd.f32 0.0, %v6122
        %v6124 = vpop.f32.mrb[0].mxu0
        %6125 = vmatprep.mubr.bf16.mxu0 0
        %6126 = vmatmul.mubr.bf16.gmra.mrb[0].mxu0 %v6031
        %v6127 = vpop.f32.mrb[0].mxu0
        %v6128 = vadd.f32 0.0, %v6127
        %v6129 = vpop.f32.mrb[0].mxu0
        %v6130 = vpop.f32.mrb[0].mxu0
        %v6131 = vadd.f32 0.0, %v6130
        %v6132 = vpop.f32.mrb[0].mxu0
        %6133 = vmatprep.mubr.bf16.mxu0 0
        %6134 = vmatmul.mubr.bf16.gmra.mrb[0].mxu0 %v6034
        %v6135 = vpop.f32.mrb[0].mxu0
        %v6136 = vadd.f32 0.0, %v6135
        %v6137 = vpop.f32.mrb[0].mxu0
        %v6138 = vpop.f32.mrb[0].mxu0
        %v6139 = vadd.f32 0.0, %v6138
        %v6140 = vpop.f32.mrb[0].mxu0
        %6141 = vmatprep.mubr.bf16.mxu0 0
        %6142 = vmatmul.mubr.bf16.gmra.mrb[0].mxu0 %v6037
        %v6143 = vpop.f32.mrb[0].mxu0
        %v6144 = vadd.f32 0.0, %v6143
        %v6145 = vpop.f32.mrb[0].mxu0
        %v6146 = vpop.f32.mrb[0].mxu0
        %v6147 = vadd.f32 0.0, %v6146
        %v6148 = vpop.f32.mrb[0].mxu0
        %6149 = vmatprep.mubr.bf16.mxu0 0
        %6150 = vmatmul.mubr.bf16.gmra.mrb[0].mxu0 %v6040
        %v6151 = vpop.f32.mrb[0].mxu0
        %v6152 = vadd.f32 0.0, %v6151
        %v6153 = vpop.f32.mrb[0].mxu0
        %v6154 = vpop.f32.mrb[0].mxu0
        %v6155 = vadd.f32 0.0, %v6154
        %v6156 = vpop.f32.mrb[0].mxu0
        %6157 = vmatprep.mubr.bf16.mxu0 0
        %6158 = vmatmul.mubr.bf16.gmra.mrb[0].mxu0 %v6043
        %v6159 = vpop.f32.mrb[0].mxu0
        %v6160 = vadd.f32 0.0, %v6159
        %v6161 = vpop.f32.mrb[0].mxu0
        %v6162 = vpop.f32.mrb[0].mxu0
        %v6163 = vadd.f32 0.0, %v6162
        %v6164 = vpop.f32.mrb[0].mxu0
        %6165 = vmatprep.mubr.bf16.mxu0 0
        %6166 = vmatmul.mubr.bf16.gmra.mrb[0].mxu0 %v6046
        %v6167 = vpop.f32.mrb[0].mxu0
        %v6168 = vadd.f32 0.0, %v6167
        %v6169 = vpop.f32.mrb[0].mxu0
        %v6170 = vpop.f32.mrb[0].mxu0
        %v6171 = vadd.f32 0.0, %v6170
        %v6172 = vpop.f32.mrb[0].mxu0
        %6173 = vmatprep.mubr.bf16.mxu0 0
        %6174 = vmatmul.mubr.bf16.gmra.mrb[0].mxu0 %v6049
        %v6175 = vpop.f32.mrb[0].mxu0
        %v6176 = vadd.f32 0.0, %v6175
        %v6177 = vpop.f32.mrb[0].mxu0
        %v6178 = vpop.f32.mrb[0].mxu0
        %v6179 = vadd.f32 0.0, %v6178
        %v6180 = vpop.f32.mrb[0].mxu0
        %6181 = vmatprep.mubr.bf16.mxu0 0
        %6182 = vmatmul.mubr.bf16.gmra.mrb[0].mxu0 %v6052
        %v6183 = vpop.f32.mrb[0].mxu0
        %v6184 = vadd.f32 0.0, %v6183
        %v6185 = vpop.f32.mrb[0].mxu0
        %v6186 = vpop.f32.mrb[0].mxu0
        %v6187 = vadd.f32 0.0, %v6186
        %v6188 = vpop.f32.mrb[0].mxu0
        %6189 = vmatprep.mubr.bf16.mxu0 0
        %6190 = vmatmul.mubr.bf16.gmra.mrb[0].mxu0 %v6055
        %v6191 = vpop.f32.mrb[0].mxu0
        %v6192 = vadd.f32 0.0, %v6191
        %v6193 = vpop.f32.mrb[0].mxu0
        %v6194 = vpop.f32.mrb[0].mxu0
        %v6195 = vadd.f32 0.0, %v6194
        %v6196 = vpop.f32.mrb[0].mxu0
        %6197 = vmatprep.mubr.bf16.mxu0 0
        %6198 = vmatmul.mubr.bf16.gmra.mrb[0].mxu0 %v6058
        %v6199 = vpop.f32.mrb[0].mxu0
        %v6200 = vadd.f32 0.0, %v6199
        %v6201 = vpop.f32.mrb[0].mxu0
        %v6202 = vpop.f32.mrb[0].mxu0
        %v6203 = vadd.f32 0.0, %v6202
        %v6204 = vpop.f32.mrb[0].mxu0
        %6205 = vmatprep.mubr.bf16.mxu0 0
        %6206 = vmatmul.mubr.bf16.gmra.mrb[0].mxu0 %v6061
        %v6207 = vpop.f32.mrb[0].mxu0
        %v6208 = vadd.f32 0.0, %v6207
        %v6209 = vpop.f32.mrb[0].mxu0
        %v6210 = vpop.f32.mrb[0].mxu0
        %v6211 = vadd.f32 0.0, %v6210
        %v6212 = vpop.f32.mrb[0].mxu0
        %6213 = vmatprep.mubr.bf16.mxu0 0
        %6214 = vmatmul.mubr.bf16.gmra.mrb[0].mxu0 %v6064
        %v6215 = vpop.f32.mrb[0].mxu0
        %v6216 = vadd.f32 0.0, %v6215
        %v6217 = vpop.f32.mrb[0].mxu0
        %v6218 = vpop.f32.mrb[0].mxu0
        %v6219 = vadd.f32 0.0, %v6218
        %v6220 = vpop.f32.mrb[0].mxu0
        %6221 = vmatprep.mubr.bf16.mxu0 0
        %6222 = vmatmul.mubr.bf16.gmra.mrb[0].mxu0 %v6067
        %v6223 = vpop.f32.mrb[0].mxu0
        %v6224 = vadd.f32 0.0, %v6223
        %v6225 = vpop.f32.mrb[0].mxu0
        %v6226 = vpop.f32.mrb[0].mxu0
        %v6227 = vadd.f32 0.0, %v6226
        %v6228 = vpop.f32.mrb[0].mxu0
        %6229 = vdwg.mxu0
        %v6230 = vadd.f32 %v5733, %v6104
        %v6231 = vadd.f32 %v5734, %v6107
        %v6232 = vadd.f32 %v5735, %v6112
        %v6233 = vadd.f32 %v5736, %v6115
        %v6234 = vadd.f32 %v5737, %v6120
        %v6235 = vadd.f32 %v5738, %v6123
        %v6236 = vadd.f32 %v5739, %v6128
        %v6237 = vadd.f32 %v5740, %v6131
        %v6238 = vadd.f32 %v5741, %v6136
        %v6239 = vadd.f32 %v5742, %v6139
        %v6240 = vadd.f32 %v5743, %v6144
        %v6241 = vadd.f32 %v5744, %v6147
        %v6242 = vadd.f32 %v5745, %v6152
        %v6243 = vadd.f32 %v5746, %v6155
        %v6244 = vadd.f32 %v5747, %v6160
        %v6245 = vadd.f32 %v5748, %v6163
        %v6246 = vadd.f32 %v5749, %v6168
        %v6247 = vadd.f32 %v5750, %v6171
        %v6248 = vadd.f32 %v5751, %v6176
        %v6249 = vadd.f32 %v5752, %v6179
        %v6250 = vadd.f32 %v5753, %v6184
        %v6251 = vadd.f32 %v5754, %v6187
        %v6252 = vadd.f32 %v5755, %v6192
        %v6253 = vadd.f32 %v5756, %v6195
        %v6254 = vadd.f32 %v5757, %v6200
        %v6255 = vadd.f32 %v5758, %v6203
        %v6256 = vadd.f32 %v5759, %v6208
        %v6257 = vadd.f32 %v5760, %v6211
        %v6258 = vadd.f32 %v5761, %v6216
        %v6259 = vadd.f32 %v5762, %v6219
        %v6260 = vadd.f32 %v5763, %v6224
        %v6261 = vadd.f32 %v5764, %v6227
        %v6262 = vld [vmem:[%s4] sm:$0x1]
        %v6264 = vlaneseq
        %v6265 = vshrl.u32 %v6264, 7
        %v6266 = vsub.s32 0, %v6265
        %v6267 = vrot.slane %v6262, %v6266
        %v6269 = vadd.f32 %v6230, %v6267
        %v6270 = vadd.f32 %v6231, %v6267
        %v6271 = vadd.f32 %v6232, %v6267
        %v6272 = vadd.f32 %v6233, %v6267
        %v6273 = vadd.f32 %v6234, %v6267
        %v6274 = vadd.f32 %v6235, %v6267
        %v6275 = vadd.f32 %v6236, %v6267
        %v6276 = vadd.f32 %v6237, %v6267
        %v6277 = vadd.f32 %v6238, %v6267
        %v6278 = vadd.f32 %v6239, %v6267
        %v6279 = vadd.f32 %v6240, %v6267
        %v6280 = vadd.f32 %v6241, %v6267
        %v6281 = vadd.f32 %v6242, %v6267
        %v6282 = vadd.f32 %v6243, %v6267
        %v6283 = vadd.f32 %v6244, %v6267
        %v6284 = vadd.f32 %v6245, %v6267
        %v6285 = vadd.f32 %v6246, %v6267
        %v6286 = vadd.f32 %v6247, %v6267
        %v6287 = vadd.f32 %v6248, %v6267
        %v6288 = vadd.f32 %v6249, %v6267
        %v6289 = vadd.f32 %v6250, %v6267
        %v6290 = vadd.f32 %v6251, %v6267
        %v6291 = vadd.f32 %v6252, %v6267
        %v6292 = vadd.f32 %v6253, %v6267
        %v6293 = vadd.f32 %v6254, %v6267
        %v6294 = vadd.f32 %v6255, %v6267
        %v6295 = vadd.f32 %v6256, %v6267
        %v6296 = vadd.f32 %v6257, %v6267
        %v6297 = vadd.f32 %v6258, %v6267
        %v6298 = vadd.f32 %v6259, %v6267
        %v6299 = vadd.f32 %v6260, %v6267
        %v6300 = vadd.f32 %v6261, %v6267
        %v6301 = vmax.f32 %v6269, 0.0
        %v6302 = vmax.f32 %v6270, 0.0
        %v6303 = vmax.f32 %v6271, 0.0
        %v6304 = vmax.f32 %v6272, 0.0
        %v6305 = vmax.f32 %v6273, 0.0
        %v6306 = vmax.f32 %v6274, 0.0
        %v6307 = vmax.f32 %v6275, 0.0
        %v6308 = vmax.f32 %v6276, 0.0
        %v6309 = vmax.f32 %v6277, 0.0
        %v6310 = vmax.f32 %v6278, 0.0
        %v6311 = vmax.f32 %v6279, 0.0
        %v6312 = vmax.f32 %v6280, 0.0
        %v6313 = vmax.f32 %v6281, 0.0
        %v6314 = vmax.f32 %v6282, 0.0
        %v6315 = vmax.f32 %v6283, 0.0
        %v6316 = vmax.f32 %v6284, 0.0
        %v6317 = vmax.f32 %v6285, 0.0
        %v6318 = vmax.f32 %v6286, 0.0
        %v6319 = vmax.f32 %v6287, 0.0
        %v6320 = vmax.f32 %v6288, 0.0
        %v6321 = vmax.f32 %v6289, 0.0
        %v6322 = vmax.f32 %v6290, 0.0
        %v6323 = vmax.f32 %v6291, 0.0
        %v6324 = vmax.f32 %v6292, 0.0
        %v6325 = vmax.f32 %v6293, 0.0
        %v6326 = vmax.f32 %v6294, 0.0
        %v6327 = vmax.f32 %v6295, 0.0
        %v6328 = vmax.f32 %v6296, 0.0
        %v6329 = vmax.f32 %v6297, 0.0
        %v6330 = vmax.f32 %v6298, 0.0
        %v6331 = vmax.f32 %v6299, 0.0
        %v6332 = vmax.f32 %v6300, 0.0
        %v6333 = vpack.c.bf16 %v6302, %v6301
        %v6334 = vpack.c.bf16 %v6304, %v6303
        %v6335 = vpack.c.bf16 %v6306, %v6305
        %v6336 = vpack.c.bf16 %v6308, %v6307
        %v6337 = vpack.c.bf16 %v6310, %v6309
        %v6338 = vpack.c.bf16 %v6312, %v6311
        %v6339 = vpack.c.bf16 %v6314, %v6313
        %v6340 = vpack.c.bf16 %v6316, %v6315
        %v6341 = vpack.c.bf16 %v6318, %v6317
        %v6342 = vpack.c.bf16 %v6320, %v6319
        %v6343 = vpack.c.bf16 %v6322, %v6321
        %v6344 = vpack.c.bf16 %v6324, %v6323
        %v6345 = vpack.c.bf16 %v6326, %v6325
        %v6346 = vpack.c.bf16 %v6328, %v6327
        %v6347 = vpack.c.bf16 %v6330, %v6329
        %v6348 = vpack.c.bf16 %v6332, %v6331
        %v6349 = vld [vmem:[%s5] sm:$0xff]
        %v6350 = vld [vmem:[%s5 + $0x8] sm:$0xff]
        %v6351 = vld [vmem:[%s5 + $0x10] sm:$0xff]
        %v6352 = vld [vmem:[%s5 + $0x18] sm:$0xff]
        %v6353 = vld [vmem:[%s5 + $0x20] sm:$0xff]
        %v6354 = vld [vmem:[%s5 + $0x28] sm:$0xff]
        %v6355 = vld [vmem:[%s5 + $0x30] sm:$0xff]
        %v6356 = vld [vmem:[%s5 + $0x38] sm:$0xff]
        %v6357 = vld [vmem:[%s6] sm:$0x3]
        %v6359 = vlaneseq
        %v6360 = vshrl.u32 %v6359, 7
        %v6361 = vsub.s32 0, %v6360
        %v6362 = vrot.slane %v6357, %v6361
        %v6363 = vlaneseq
        %v6364 = vshrl.u32 %v6363, 7
        %v6365 = vsub.s32 1, %v6364
        %v6366 = vrot.slane %v6357, %v6365
        %v6377 = vunpack.c.l.b16 %v6349
        %v6378 = vunpack.c.h.b16 %v6349
        %v6379 = vunpack.c.l.b16 %v6350
        %v6380 = vunpack.c.h.b16 %v6350
        %v6381 = vunpack.c.l.b16 %v6351
        %v6382 = vunpack.c.h.b16 %v6351
        %v6383 = vunpack.c.l.b16 %v6352
        %v6384 = vunpack.c.h.b16 %v6352
        %v6385 = vunpack.c.l.b16 %v6353
        %v6386 = vunpack.c.h.b16 %v6353
        %v6387 = vunpack.c.l.b16 %v6354
        %v6388 = vunpack.c.h.b16 %v6354
        %v6389 = vunpack.c.l.b16 %v6355
        %v6390 = vunpack.c.h.b16 %v6355
        %v6391 = vunpack.c.l.b16 %v6356
        %v6392 = vunpack.c.h.b16 %v6356
        %v6393 = vpack.c.b16 %v6379, %v6377
        %v6394 = vpack.c.b16 %v6380, %v6378
        %v6395 = vpack.c.b16 %v6383, %v6381
        %v6396 = vpack.c.b16 %v6384, %v6382
        %v6397 = vpack.c.b16 %v6387, %v6385
        %v6398 = vpack.c.b16 %v6388, %v6386
        %v6399 = vpack.c.b16 %v6391, %v6389
        %v6400 = vpack.c.b16 %v6392, %v6390
        %v6410 = vsel %vm1984, %v6333, 0
        %v6413 = vsel %vm1984, %v6334, 0
        %v6416 = vsel %vm1984, %v6335, 0
        %v6419 = vsel %vm1984, %v6336, 0
        %v6422 = vsel %vm1984, %v6337, 0
        %v6425 = vsel %vm1984, %v6338, 0
        %v6428 = vsel %vm1984, %v6339, 0
        %v6431 = vsel %vm1984, %v6340, 0
        %v6434 = vsel %vm1984, %v6341, 0
        %v6437 = vsel %vm1984, %v6342, 0
        %v6440 = vsel %vm1984, %v6343, 0
        %v6443 = vsel %vm1984, %v6344, 0
        %v6446 = vsel %vm1984, %v6345, 0
        %v6449 = vsel %vm1984, %v6346, 0
        %v6452 = vsel %vm1984, %v6347, 0
        %v6455 = vsel %vm1984, %v6348, 0
        %6457 = vmatprep.subr.bf16.mxu0 %v6394
        %6458 = vmatpush1.bf16.msra.mxu0 %v6393
        %6459 = vmatprep.subr.bf16.mxu0 %v6396
        %6460 = vmatpush1.bf16.msra.mxu0 %v6395
        %6461 = vmatprep.subr.bf16.mxu0 %v6398
        %6462 = vmatpush1.bf16.msra.mxu0 %v6397
        %6463 = vmatprep.subr.bf16.mxu0 %v6400
        %6464 = vmatpush1.bf16.msra.mxu0 %v6399
        %6465 = vmatprep.subr.bf16.mxu0 0
        %6466 = vmatpush1.bf16.msra.mxu0 0
        %6467 = vmatprep.subr.bf16.mxu0 0
        %6468 = vmatpush1.bf16.msra.mxu0 0
        %6469 = vmatprep.subr.bf16.mxu0 0
        %6470 = vmatpush1.bf16.msra.mxu0 0
        %6471 = vmatprep.subr.bf16.mxu0 0
        %6472 = vmatpush1.bf16.msra.mxu0 0
        %6473 = vmatprep.subr.bf16.mxu0 0
        %6474 = vmatpush1.bf16.msra.mxu0 0
        %6475 = vmatprep.subr.bf16.mxu0 0
        %6476 = vmatpush1.bf16.msra.mxu0 0
        %6477 = vmatprep.subr.bf16.mxu0 0
        %6478 = vmatpush1.bf16.msra.mxu0 0
        %6479 = vmatprep.subr.bf16.mxu0 0
        %6480 = vmatpush1.bf16.msra.mxu0 0
        %6481 = vmatprep.subr.bf16.mxu0 0
        %6482 = vmatpush1.bf16.msra.mxu0 0
        %6483 = vmatprep.subr.bf16.mxu0 0
        %6484 = vmatpush1.bf16.msra.mxu0 0
        %6485 = vmatprep.subr.bf16.mxu0 0
        %6486 = vmatpush1.bf16.msra.mxu0 0
        %6487 = vmatprep.subr.bf16.mxu0 0
        %6488 = vmatpush1.bf16.msra.mxu0 0
        %6489 = vmatprep.mubr.bf16.mxu0 0
        %6490 = vmatmul.mubr.bf16.gmra.mrb[0].mxu0 %v6410
        %v6491 = vpop.f32.mrb[0].mxu0
        %v6492 = vadd.f32 %v6362, %v6491
        %v6493 = vpop.f32.mrb[0].mxu0
        %v6494 = vadd.f32 %v6366, %v6493
        %v6495 = vpop.f32.mrb[0].mxu0
        %v6496 = vadd.f32 %v6362, %v6495
        %v6497 = vpop.f32.mrb[0].mxu0
        %v6498 = vadd.f32 %v6366, %v6497
        %6499 = vmatprep.mubr.bf16.mxu0 0
        %6500 = vmatmul.mubr.bf16.gmra.mrb[0].mxu0 %v6413
        %v6501 = vpop.f32.mrb[0].mxu0
        %v6502 = vadd.f32 %v6362, %v6501
        %v6503 = vpop.f32.mrb[0].mxu0
        %v6504 = vadd.f32 %v6366, %v6503
        %v6505 = vpop.f32.mrb[0].mxu0
        %v6506 = vadd.f32 %v6362, %v6505
        %v6507 = vpop.f32.mrb[0].mxu0
        %v6508 = vadd.f32 %v6366, %v6507
        %6509 = vmatprep.mubr.bf16.mxu0 0
        %6510 = vmatmul.mubr.bf16.gmra.mrb[0].mxu0 %v6416
        %v6511 = vpop.f32.mrb[0].mxu0
        %v6512 = vadd.f32 %v6362, %v6511
        %v6513 = vpop.f32.mrb[0].mxu0
        %v6514 = vadd.f32 %v6366, %v6513
        %v6515 = vpop.f32.mrb[0].mxu0
        %v6516 = vadd.f32 %v6362, %v6515
        %v6517 = vpop.f32.mrb[0].mxu0
        %v6518 = vadd.f32 %v6366, %v6517
        %6519 = vmatprep.mubr.bf16.mxu0 0
        %6520 = vmatmul.mubr.bf16.gmra.mrb[0].mxu0 %v6419
        %v6521 = vpop.f32.mrb[0].mxu0
        %v6522 = vadd.f32 %v6362, %v6521
        %v6523 = vpop.f32.mrb[0].mxu0
        %v6524 = vadd.f32 %v6366, %v6523
        %v6525 = vpop.f32.mrb[0].mxu0
        %v6526 = vadd.f32 %v6362, %v6525
        %v6527 = vpop.f32.mrb[0].mxu0
        %v6528 = vadd.f32 %v6366, %v6527
        %6529 = vmatprep.mubr.bf16.mxu0 0
        %6530 = vmatmul.mubr.bf16.gmra.mrb[0].mxu0 %v6422
        %v6531 = vpop.f32.mrb[0].mxu0
        %v6532 = vadd.f32 %v6362, %v6531
        %v6533 = vpop.f32.mrb[0].mxu0
        %v6534 = vadd.f32 %v6366, %v6533
        %v6535 = vpop.f32.mrb[0].mxu0
        %v6536 = vadd.f32 %v6362, %v6535
        %v6537 = vpop.f32.mrb[0].mxu0
        %v6538 = vadd.f32 %v6366, %v6537
        %6539 = vmatprep.mubr.bf16.mxu0 0
        %6540 = vmatmul.mubr.bf16.gmra.mrb[0].mxu0 %v6425
        %v6541 = vpop.f32.mrb[0].mxu0
        %v6542 = vadd.f32 %v6362, %v6541
        %v6543 = vpop.f32.mrb[0].mxu0
        %v6544 = vadd.f32 %v6366, %v6543
        %v6545 = vpop.f32.mrb[0].mxu0
        %v6546 = vadd.f32 %v6362, %v6545
        %v6547 = vpop.f32.mrb[0].mxu0
        %v6548 = vadd.f32 %v6366, %v6547
        %6549 = vmatprep.mubr.bf16.mxu0 0
        %6550 = vmatmul.mubr.bf16.gmra.mrb[0].mxu0 %v6428
        %v6551 = vpop.f32.mrb[0].mxu0
        %v6552 = vadd.f32 %v6362, %v6551
        %v6553 = vpop.f32.mrb[0].mxu0
        %v6554 = vadd.f32 %v6366, %v6553
        %v6555 = vpop.f32.mrb[0].mxu0
        %v6556 = vadd.f32 %v6362, %v6555
        %v6557 = vpop.f32.mrb[0].mxu0
        %v6558 = vadd.f32 %v6366, %v6557
        %6559 = vmatprep.mubr.bf16.mxu0 0
        %6560 = vmatmul.mubr.bf16.gmra.mrb[0].mxu0 %v6431
        %v6561 = vpop.f32.mrb[0].mxu0
        %v6562 = vadd.f32 %v6362, %v6561
        %v6563 = vpop.f32.mrb[0].mxu0
        %v6564 = vadd.f32 %v6366, %v6563
        %v6565 = vpop.f32.mrb[0].mxu0
        %v6566 = vadd.f32 %v6362, %v6565
        %v6567 = vpop.f32.mrb[0].mxu0
        %v6568 = vadd.f32 %v6366, %v6567
        %6569 = vmatprep.mubr.bf16.mxu0 0
        %6570 = vmatmul.mubr.bf16.gmra.mrb[0].mxu0 %v6434
        %v6571 = vpop.f32.mrb[0].mxu0
        %v6572 = vadd.f32 %v6362, %v6571
        %v6573 = vpop.f32.mrb[0].mxu0
        %v6574 = vadd.f32 %v6366, %v6573
        %v6575 = vpop.f32.mrb[0].mxu0
        %v6576 = vadd.f32 %v6362, %v6575
        %v6577 = vpop.f32.mrb[0].mxu0
        %v6578 = vadd.f32 %v6366, %v6577
        %6579 = vmatprep.mubr.bf16.mxu0 0
        %6580 = vmatmul.mubr.bf16.gmra.mrb[0].mxu0 %v6437
        %v6581 = vpop.f32.mrb[0].mxu0
        %v6582 = vadd.f32 %v6362, %v6581
        %v6583 = vpop.f32.mrb[0].mxu0
        %v6584 = vadd.f32 %v6366, %v6583
        %v6585 = vpop.f32.mrb[0].mxu0
        %v6586 = vadd.f32 %v6362, %v6585
        %v6587 = vpop.f32.mrb[0].mxu0
        %v6588 = vadd.f32 %v6366, %v6587
        %6589 = vmatprep.mubr.bf16.mxu0 0
        %6590 = vmatmul.mubr.bf16.gmra.mrb[0].mxu0 %v6440
        %v6591 = vpop.f32.mrb[0].mxu0
        %v6592 = vadd.f32 %v6362, %v6591
        %v6593 = vpop.f32.mrb[0].mxu0
        %v6594 = vadd.f32 %v6366, %v6593
        %v6595 = vpop.f32.mrb[0].mxu0
        %v6596 = vadd.f32 %v6362, %v6595
        %v6597 = vpop.f32.mrb[0].mxu0
        %v6598 = vadd.f32 %v6366, %v6597
        %6599 = vmatprep.mubr.bf16.mxu0 0
        %6600 = vmatmul.mubr.bf16.gmra.mrb[0].mxu0 %v6443
        %v6601 = vpop.f32.mrb[0].mxu0
        %v6602 = vadd.f32 %v6362, %v6601
        %v6603 = vpop.f32.mrb[0].mxu0
        %v6604 = vadd.f32 %v6366, %v6603
        %v6605 = vpop.f32.mrb[0].mxu0
        %v6606 = vadd.f32 %v6362, %v6605
        %v6607 = vpop.f32.mrb[0].mxu0
        %v6608 = vadd.f32 %v6366, %v6607
        %6609 = vmatprep.mubr.bf16.mxu0 0
        %6610 = vmatmul.mubr.bf16.gmra.mrb[0].mxu0 %v6446
        %v6611 = vpop.f32.mrb[0].mxu0
        %v6612 = vadd.f32 %v6362, %v6611
        %v6613 = vpop.f32.mrb[0].mxu0
        %v6614 = vadd.f32 %v6366, %v6613
        %v6615 = vpop.f32.mrb[0].mxu0
        %v6616 = vadd.f32 %v6362, %v6615
        %v6617 = vpop.f32.mrb[0].mxu0
        %v6618 = vadd.f32 %v6366, %v6617
        %6619 = vmatprep.mubr.bf16.mxu0 0
        %6620 = vmatmul.mubr.bf16.gmra.mrb[0].mxu0 %v6449
        %v6621 = vpop.f32.mrb[0].mxu0
        %v6622 = vadd.f32 %v6362, %v6621
        %v6623 = vpop.f32.mrb[0].mxu0
        %v6624 = vadd.f32 %v6366, %v6623
        %v6625 = vpop.f32.mrb[0].mxu0
        %v6626 = vadd.f32 %v6362, %v6625
        %v6627 = vpop.f32.mrb[0].mxu0
        %v6628 = vadd.f32 %v6366, %v6627
        %6629 = vmatprep.mubr.bf16.mxu0 0
        %6630 = vmatmul.mubr.bf16.gmra.mrb[0].mxu0 %v6452
        %v6631 = vpop.f32.mrb[0].mxu0
        %v6632 = vadd.f32 %v6362, %v6631
        %v6633 = vpop.f32.mrb[0].mxu0
        %v6634 = vadd.f32 %v6366, %v6633
        %v6635 = vpop.f32.mrb[0].mxu0
        %v6636 = vadd.f32 %v6362, %v6635
        %v6637 = vpop.f32.mrb[0].mxu0
        %v6638 = vadd.f32 %v6366, %v6637
        %6639 = vmatprep.mubr.bf16.mxu0 0
        %6640 = vmatmul.mubr.bf16.gmra.mrb[0].mxu0 %v6455
        %v6641 = vpop.f32.mrb[0].mxu0
        %v6642 = vadd.f32 %v6362, %v6641
        %v6643 = vpop.f32.mrb[0].mxu0
        %v6644 = vadd.f32 %v6366, %v6643
        %v6645 = vpop.f32.mrb[0].mxu0
        %v6646 = vadd.f32 %v6362, %v6645
        %v6647 = vpop.f32.mrb[0].mxu0
        %v6648 = vadd.f32 %v6366, %v6647
        %6649 = vdwg.mxu0
        %v6650 = vld [vmem:[%s266] sm:$0xff]
        %v6651 = vld [vmem:[%s266 + $0x8] sm:$0xff]
        %v6652 = vld [vmem:[%s266 + $0x10] sm:$0xff]
        %v6653 = vld [vmem:[%s266 + $0x18] sm:$0xff]
        %v6654 = vld [vmem:[%s266 + $0x20] sm:$0xff]
        %v6655 = vld [vmem:[%s266 + $0x28] sm:$0xff]
        %v6656 = vld [vmem:[%s266 + $0x30] sm:$0xff]
        %v6657 = vld [vmem:[%s266 + $0x38] sm:$0xff]
        %v6658 = vld [vmem:[%s266 + $0x40] sm:$0xff]
        %v6659 = vld [vmem:[%s266 + $0x48] sm:$0xff]
        %v6660 = vld [vmem:[%s266 + $0x50] sm:$0xff]
        %v6661 = vld [vmem:[%s266 + $0x58] sm:$0xff]
        %v6662 = vld [vmem:[%s266 + $0x60] sm:$0xff]
        %v6663 = vld [vmem:[%s266 + $0x68] sm:$0xff]
        %v6664 = vld [vmem:[%s266 + $0x70] sm:$0xff]
        %v6665 = vld [vmem:[%s266 + $0x78] sm:$0xff]
        %v6666 = vld [vmem:[%s266 + $0x80] sm:$0xff]
        %v6667 = vld [vmem:[%s266 + $0x88] sm:$0xff]
        %v6668 = vld [vmem:[%s266 + $0x90] sm:$0xff]
        %v6669 = vld [vmem:[%s266 + $0x98] sm:$0xff]
        %v6670 = vld [vmem:[%s266 + $0xa0] sm:$0xff]
        %v6671 = vld [vmem:[%s266 + $0xa8] sm:$0xff]
        %v6672 = vld [vmem:[%s266 + $0xb0] sm:$0xff]
        %v6673 = vld [vmem:[%s266 + $0xb8] sm:$0xff]
        %v6674 = vld [vmem:[%s266 + $0xc0] sm:$0xff]
        %v6675 = vld [vmem:[%s266 + $0xc8] sm:$0xff]
        %v6676 = vld [vmem:[%s266 + $0xd0] sm:$0xff]
        %v6677 = vld [vmem:[%s266 + $0xd8] sm:$0xff]
        %v6678 = vld [vmem:[%s266 + $0xe0] sm:$0xff]
        %v6679 = vld [vmem:[%s266 + $0xe8] sm:$0xff]
        %v6680 = vld [vmem:[%s266 + $0xf0] sm:$0xff]
        %v6681 = vld [vmem:[%s266 + $0xf8] sm:$0xff]
        %v6682 = vunpack.c.l.bf16 %v6650
        %v6683 = vunpack.c.h.bf16 %v6650
        %v6684 = vunpack.c.l.bf16 %v6651
        %v6685 = vunpack.c.h.bf16 %v6651
        %v6686 = vunpack.c.l.bf16 %v6652
        %v6687 = vunpack.c.h.bf16 %v6652
        %v6688 = vunpack.c.l.bf16 %v6653
        %v6689 = vunpack.c.h.bf16 %v6653
        %v6690 = vunpack.c.l.bf16 %v6654
        %v6691 = vunpack.c.h.bf16 %v6654
        %v6692 = vunpack.c.l.bf16 %v6655
        %v6693 = vunpack.c.h.bf16 %v6655
        %v6694 = vunpack.c.l.bf16 %v6656
        %v6695 = vunpack.c.h.bf16 %v6656
        %v6696 = vunpack.c.l.bf16 %v6657
        %v6697 = vunpack.c.h.bf16 %v6657
        %v6698 = vunpack.c.l.bf16 %v6658
        %v6699 = vunpack.c.h.bf16 %v6658
        %v6700 = vunpack.c.l.bf16 %v6659
        %v6701 = vunpack.c.h.bf16 %v6659
        %v6702 = vunpack.c.l.bf16 %v6660
        %v6703 = vunpack.c.h.bf16 %v6660
        %v6704 = vunpack.c.l.bf16 %v6661
        %v6705 = vunpack.c.h.bf16 %v6661
        %v6706 = vunpack.c.l.bf16 %v6662
        %v6707 = vunpack.c.h.bf16 %v6662
        %v6708 = vunpack.c.l.bf16 %v6663
        %v6709 = vunpack.c.h.bf16 %v6663
        %v6710 = vunpack.c.l.bf16 %v6664
        %v6711 = vunpack.c.h.bf16 %v6664
        %v6712 = vunpack.c.l.bf16 %v6665
        %v6713 = vunpack.c.h.bf16 %v6665
        %v6714 = vunpack.c.l.bf16 %v6666
        %v6715 = vunpack.c.h.bf16 %v6666
        %v6716 = vunpack.c.l.bf16 %v6667
        %v6717 = vunpack.c.h.bf16 %v6667
        %v6718 = vunpack.c.l.bf16 %v6668
        %v6719 = vunpack.c.h.bf16 %v6668
        %v6720 = vunpack.c.l.bf16 %v6669
        %v6721 = vunpack.c.h.bf16 %v6669
        %v6722 = vunpack.c.l.bf16 %v6670
        %v6723 = vunpack.c.h.bf16 %v6670
        %v6724 = vunpack.c.l.bf16 %v6671
        %v6725 = vunpack.c.h.bf16 %v6671
        %v6726 = vunpack.c.l.bf16 %v6672
        %v6727 = vunpack.c.h.bf16 %v6672
        %v6728 = vunpack.c.l.bf16 %v6673
        %v6729 = vunpack.c.h.bf16 %v6673
        %v6730 = vunpack.c.l.bf16 %v6674
        %v6731 = vunpack.c.h.bf16 %v6674
        %v6732 = vunpack.c.l.bf16 %v6675
        %v6733 = vunpack.c.h.bf16 %v6675
        %v6734 = vunpack.c.l.bf16 %v6676
        %v6735 = vunpack.c.h.bf16 %v6676
        %v6736 = vunpack.c.l.bf16 %v6677
        %v6737 = vunpack.c.h.bf16 %v6677
        %v6738 = vunpack.c.l.bf16 %v6678
        %v6739 = vunpack.c.h.bf16 %v6678
        %v6740 = vunpack.c.l.bf16 %v6679
        %v6741 = vunpack.c.h.bf16 %v6679
        %v6742 = vunpack.c.l.bf16 %v6680
        %v6743 = vunpack.c.h.bf16 %v6680
        %v6744 = vunpack.c.l.bf16 %v6681
        %v6745 = vunpack.c.h.bf16 %v6681
        %v6746 = vadd.f32 %v6492, %v6682
        %v6747 = vadd.f32 %v6494, %v6683
        %v6748 = vadd.f32 %v6496, %v6684
        %v6749 = vadd.f32 %v6498, %v6685
        %v6750 = vadd.f32 %v6502, %v6686
        %v6751 = vadd.f32 %v6504, %v6687
        %v6752 = vadd.f32 %v6506, %v6688
        %v6753 = vadd.f32 %v6508, %v6689
        %v6754 = vadd.f32 %v6512, %v6690
        %v6755 = vadd.f32 %v6514, %v6691
        %v6756 = vadd.f32 %v6516, %v6692
        %v6757 = vadd.f32 %v6518, %v6693
        %v6758 = vadd.f32 %v6522, %v6694
        %v6759 = vadd.f32 %v6524, %v6695
        %v6760 = vadd.f32 %v6526, %v6696
        %v6761 = vadd.f32 %v6528, %v6697
        %v6762 = vadd.f32 %v6532, %v6698
        %v6763 = vadd.f32 %v6534, %v6699
        %v6764 = vadd.f32 %v6536, %v6700
        %v6765 = vadd.f32 %v6538, %v6701
        %v6766 = vadd.f32 %v6542, %v6702
        %v6767 = vadd.f32 %v6544, %v6703
        %v6768 = vadd.f32 %v6546, %v6704
        %v6769 = vadd.f32 %v6548, %v6705
        %v6770 = vadd.f32 %v6552, %v6706
        %v6771 = vadd.f32 %v6554, %v6707
        %v6772 = vadd.f32 %v6556, %v6708
        %v6773 = vadd.f32 %v6558, %v6709
        %v6774 = vadd.f32 %v6562, %v6710
        %v6775 = vadd.f32 %v6564, %v6711
        %v6776 = vadd.f32 %v6566, %v6712
        %v6777 = vadd.f32 %v6568, %v6713
        %v6778 = vadd.f32 %v6572, %v6714
        %v6779 = vadd.f32 %v6574, %v6715
        %v6780 = vadd.f32 %v6576, %v6716
        %v6781 = vadd.f32 %v6578, %v6717
        %v6782 = vadd.f32 %v6582, %v6718
        %v6783 = vadd.f32 %v6584, %v6719
        %v6784 = vadd.f32 %v6586, %v6720
        %v6785 = vadd.f32 %v6588, %v6721
        %v6786 = vadd.f32 %v6592, %v6722
        %v6787 = vadd.f32 %v6594, %v6723
        %v6788 = vadd.f32 %v6596, %v6724
        %v6789 = vadd.f32 %v6598, %v6725
        %v6790 = vadd.f32 %v6602, %v6726
        %v6791 = vadd.f32 %v6604, %v6727
        %v6792 = vadd.f32 %v6606, %v6728
        %v6793 = vadd.f32 %v6608, %v6729
        %v6794 = vadd.f32 %v6612, %v6730
        %v6795 = vadd.f32 %v6614, %v6731
        %v6796 = vadd.f32 %v6616, %v6732
        %v6797 = vadd.f32 %v6618, %v6733
        %v6798 = vadd.f32 %v6622, %v6734
        %v6799 = vadd.f32 %v6624, %v6735
        %v6800 = vadd.f32 %v6626, %v6736
        %v6801 = vadd.f32 %v6628, %v6737
        %v6802 = vadd.f32 %v6632, %v6738
        %v6803 = vadd.f32 %v6634, %v6739
        %v6804 = vadd.f32 %v6636, %v6740
        %v6805 = vadd.f32 %v6638, %v6741
        %v6806 = vadd.f32 %v6642, %v6742
        %v6807 = vadd.f32 %v6644, %v6743
        %v6808 = vadd.f32 %v6646, %v6744
        %v6809 = vadd.f32 %v6648, %v6745
        %v6810 = vmax.f32 %v6746, 0.0
        %v6811 = vmax.f32 %v6747, 0.0
        %v6812 = vmax.f32 %v6748, 0.0
        %v6813 = vmax.f32 %v6749, 0.0
        %v6814 = vmax.f32 %v6750, 0.0
        %v6815 = vmax.f32 %v6751, 0.0
        %v6816 = vmax.f32 %v6752, 0.0
        %v6817 = vmax.f32 %v6753, 0.0
        %v6818 = vmax.f32 %v6754, 0.0
        %v6819 = vmax.f32 %v6755, 0.0
        %v6820 = vmax.f32 %v6756, 0.0
        %v6821 = vmax.f32 %v6757, 0.0
        %v6822 = vmax.f32 %v6758, 0.0
        %v6823 = vmax.f32 %v6759, 0.0
        %v6824 = vmax.f32 %v6760, 0.0
        %v6825 = vmax.f32 %v6761, 0.0
        %v6826 = vmax.f32 %v6762, 0.0
        %v6827 = vmax.f32 %v6763, 0.0
        %v6828 = vmax.f32 %v6764, 0.0
        %v6829 = vmax.f32 %v6765, 0.0
        %v6830 = vmax.f32 %v6766, 0.0
        %v6831 = vmax.f32 %v6767, 0.0
        %v6832 = vmax.f32 %v6768, 0.0
        %v6833 = vmax.f32 %v6769, 0.0
        %v6834 = vmax.f32 %v6770, 0.0
        %v6835 = vmax.f32 %v6771, 0.0
        %v6836 = vmax.f32 %v6772, 0.0
        %v6837 = vmax.f32 %v6773, 0.0
        %v6838 = vmax.f32 %v6774, 0.0
        %v6839 = vmax.f32 %v6775, 0.0
        %v6840 = vmax.f32 %v6776, 0.0
        %v6841 = vmax.f32 %v6777, 0.0
        %v6842 = vmax.f32 %v6778, 0.0
        %v6843 = vmax.f32 %v6779, 0.0
        %v6844 = vmax.f32 %v6780, 0.0
        %v6845 = vmax.f32 %v6781, 0.0
        %v6846 = vmax.f32 %v6782, 0.0
        %v6847 = vmax.f32 %v6783, 0.0
        %v6848 = vmax.f32 %v6784, 0.0
        %v6849 = vmax.f32 %v6785, 0.0
        %v6850 = vmax.f32 %v6786, 0.0
        %v6851 = vmax.f32 %v6787, 0.0
        %v6852 = vmax.f32 %v6788, 0.0
        %v6853 = vmax.f32 %v6789, 0.0
        %v6854 = vmax.f32 %v6790, 0.0
        %v6855 = vmax.f32 %v6791, 0.0
        %v6856 = vmax.f32 %v6792, 0.0
        %v6857 = vmax.f32 %v6793, 0.0
        %v6858 = vmax.f32 %v6794, 0.0
        %v6859 = vmax.f32 %v6795, 0.0
        %v6860 = vmax.f32 %v6796, 0.0
        %v6861 = vmax.f32 %v6797, 0.0
        %v6862 = vmax.f32 %v6798, 0.0
        %v6863 = vmax.f32 %v6799, 0.0
        %v6864 = vmax.f32 %v6800, 0.0
        %v6865 = vmax.f32 %v6801, 0.0
        %v6866 = vmax.f32 %v6802, 0.0
        %v6867 = vmax.f32 %v6803, 0.0
        %v6868 = vmax.f32 %v6804, 0.0
        %v6869 = vmax.f32 %v6805, 0.0
        %v6870 = vmax.f32 %v6806, 0.0
        %v6871 = vmax.f32 %v6807, 0.0
        %v6872 = vmax.f32 %v6808, 0.0
        %v6873 = vmax.f32 %v6809, 0.0
        %v6874 = vpack.c.bf16 %v6812, %v6810
        %v6875 = vpack.c.bf16 %v6813, %v6811
        %v6876 = vpack.c.bf16 %v6816, %v6814
        %v6877 = vpack.c.bf16 %v6817, %v6815
        %v6878 = vpack.c.bf16 %v6820, %v6818
        %v6879 = vpack.c.bf16 %v6821, %v6819
        %v6880 = vpack.c.bf16 %v6824, %v6822
        %v6881 = vpack.c.bf16 %v6825, %v6823
        %v6882 = vpack.c.bf16 %v6828, %v6826
        %v6883 = vpack.c.bf16 %v6829, %v6827
        %v6884 = vpack.c.bf16 %v6832, %v6830
        %v6885 = vpack.c.bf16 %v6833, %v6831
        %v6886 = vpack.c.bf16 %v6836, %v6834
        %v6887 = vpack.c.bf16 %v6837, %v6835
        %v6888 = vpack.c.bf16 %v6840, %v6838
        %v6889 = vpack.c.bf16 %v6841, %v6839
        %v6890 = vpack.c.bf16 %v6844, %v6842
        %v6891 = vpack.c.bf16 %v6845, %v6843
        %v6892 = vpack.c.bf16 %v6848, %v6846
        %v6893 = vpack.c.bf16 %v6849, %v6847
        %v6894 = vpack.c.bf16 %v6852, %v6850
        %v6895 = vpack.c.bf16 %v6853, %v6851
        %v6896 = vpack.c.bf16 %v6856, %v6854
        %v6897 = vpack.c.bf16 %v6857, %v6855
        %v6898 = vpack.c.bf16 %v6860, %v6858
        %v6899 = vpack.c.bf16 %v6861, %v6859
        %v6900 = vpack.c.bf16 %v6864, %v6862
        %v6901 = vpack.c.bf16 %v6865, %v6863
        %v6902 = vpack.c.bf16 %v6868, %v6866
        %v6903 = vpack.c.bf16 %v6869, %v6867
        %v6904 = vpack.c.bf16 %v6872, %v6870
        %v6905 = vpack.c.bf16 %v6873, %v6871
        %v6938 = vunpack.c.l.b16 %v6874
        %v6939 = vunpack.c.l.b16 %v6875
        %v6940 = vunpack.c.h.b16 %v6874
        %v6941 = vunpack.c.h.b16 %v6875
        %v6942 = vunpack.c.l.b16 %v6876
        %v6943 = vunpack.c.l.b16 %v6877
        %v6944 = vunpack.c.h.b16 %v6876
        %v6945 = vunpack.c.h.b16 %v6877
        %v6946 = vunpack.c.l.b16 %v6878
        %v6947 = vunpack.c.l.b16 %v6879
        %v6948 = vunpack.c.h.b16 %v6878
        %v6949 = vunpack.c.h.b16 %v6879
        %v6950 = vunpack.c.l.b16 %v6880
        %v6951 = vunpack.c.l.b16 %v6881
        %v6952 = vunpack.c.h.b16 %v6880
        %v6953 = vunpack.c.h.b16 %v6881
        %v6954 = vunpack.c.l.b16 %v6882
        %v6955 = vunpack.c.l.b16 %v6883
        %v6956 = vunpack.c.h.b16 %v6882
        %v6957 = vunpack.c.h.b16 %v6883
        %v6958 = vunpack.c.l.b16 %v6884
        %v6959 = vunpack.c.l.b16 %v6885
        %v6960 = vunpack.c.h.b16 %v6884
        %v6961 = vunpack.c.h.b16 %v6885
        %v6962 = vunpack.c.l.b16 %v6886
        %v6963 = vunpack.c.l.b16 %v6887
        %v6964 = vunpack.c.h.b16 %v6886
        %v6965 = vunpack.c.h.b16 %v6887
        %v6966 = vunpack.c.l.b16 %v6888
        %v6967 = vunpack.c.l.b16 %v6889
        %v6968 = vunpack.c.h.b16 %v6888
        %v6969 = vunpack.c.h.b16 %v6889
        %v6970 = vunpack.c.l.b16 %v6890
        %v6971 = vunpack.c.l.b16 %v6891
        %v6972 = vunpack.c.h.b16 %v6890
        %v6973 = vunpack.c.h.b16 %v6891
        %v6974 = vunpack.c.l.b16 %v6892
        %v6975 = vunpack.c.l.b16 %v6893
        %v6976 = vunpack.c.h.b16 %v6892
        %v6977 = vunpack.c.h.b16 %v6893
        %v6978 = vunpack.c.l.b16 %v6894
        %v6979 = vunpack.c.l.b16 %v6895
        %v6980 = vunpack.c.h.b16 %v6894
        %v6981 = vunpack.c.h.b16 %v6895
        %v6982 = vunpack.c.l.b16 %v6896
        %v6983 = vunpack.c.l.b16 %v6897
        %v6984 = vunpack.c.h.b16 %v6896
        %v6985 = vunpack.c.h.b16 %v6897
        %v6986 = vunpack.c.l.b16 %v6898
        %v6987 = vunpack.c.l.b16 %v6899
        %v6988 = vunpack.c.h.b16 %v6898
        %v6989 = vunpack.c.h.b16 %v6899
        %v6990 = vunpack.c.l.b16 %v6900
        %v6991 = vunpack.c.l.b16 %v6901
        %v6992 = vunpack.c.h.b16 %v6900
        %v6993 = vunpack.c.h.b16 %v6901
        %v6994 = vunpack.c.l.b16 %v6902
        %v6995 = vunpack.c.l.b16 %v6903
        %v6996 = vunpack.c.h.b16 %v6902
        %v6997 = vunpack.c.h.b16 %v6903
        %v6998 = vunpack.c.l.b16 %v6904
        %v6999 = vunpack.c.l.b16 %v6905
        %v7000 = vunpack.c.h.b16 %v6904
        %v7001 = vunpack.c.h.b16 %v6905
        %v7002 = vpack.c.b16 %v6939, %v6938
        %v7003 = vpack.c.b16 %v6941, %v6940
        %v7004 = vpack.c.b16 %v6943, %v6942
        %v7005 = vpack.c.b16 %v6945, %v6944
        %v7006 = vpack.c.b16 %v6947, %v6946
        %v7007 = vpack.c.b16 %v6949, %v6948
        %v7008 = vpack.c.b16 %v6951, %v6950
        %v7009 = vpack.c.b16 %v6953, %v6952
        %v7010 = vpack.c.b16 %v6955, %v6954
        %v7011 = vpack.c.b16 %v6957, %v6956
        %v7012 = vpack.c.b16 %v6959, %v6958
        %v7013 = vpack.c.b16 %v6961, %v6960
        %v7014 = vpack.c.b16 %v6963, %v6962
        %v7015 = vpack.c.b16 %v6965, %v6964
        %v7016 = vpack.c.b16 %v6967, %v6966
        %v7017 = vpack.c.b16 %v6969, %v6968
        %v7018 = vpack.c.b16 %v6971, %v6970
        %v7019 = vpack.c.b16 %v6973, %v6972
        %v7020 = vpack.c.b16 %v6975, %v6974
        %v7021 = vpack.c.b16 %v6977, %v6976
        %v7022 = vpack.c.b16 %v6979, %v6978
        %v7023 = vpack.c.b16 %v6981, %v6980
        %v7024 = vpack.c.b16 %v6983, %v6982
        %v7025 = vpack.c.b16 %v6985, %v6984
        %v7026 = vpack.c.b16 %v6987, %v6986
        %v7027 = vpack.c.b16 %v6989, %v6988
        %v7028 = vpack.c.b16 %v6991, %v6990
        %v7029 = vpack.c.b16 %v6993, %v6992
        %v7030 = vpack.c.b16 %v6995, %v6994
        %v7031 = vpack.c.b16 %v6997, %v6996
        %v7032 = vpack.c.b16 %v6999, %v6998
        %v7033 = vpack.c.b16 %v7001, %v7000
        %7066 = vst [vmem:[%s296] sm:$0xff] %v7002
        %7067 = vst [vmem:[%s296 + $0x8] sm:$0xff] %v7003
        %7068 = vst [vmem:[%s296 + $0x10] sm:$0xff] %v7004
        %7069 = vst [vmem:[%s296 + $0x18] sm:$0xff] %v7005
        %7070 = vst [vmem:[%s296 + $0x20] sm:$0xff] %v7006
        %7071 = vst [vmem:[%s296 + $0x28] sm:$0xff] %v7007
        %7072 = vst [vmem:[%s296 + $0x30] sm:$0xff] %v7008
        %7073 = vst [vmem:[%s296 + $0x38] sm:$0xff] %v7009
        %7074 = vst [vmem:[%s296 + $0x40] sm:$0xff] %v7010
        %7075 = vst [vmem:[%s296 + $0x48] sm:$0xff] %v7011
        %7076 = vst [vmem:[%s296 + $0x50] sm:$0xff] %v7012
        %7077 = vst [vmem:[%s296 + $0x58] sm:$0xff] %v7013
        %7078 = vst [vmem:[%s296 + $0x60] sm:$0xff] %v7014
        %7079 = vst [vmem:[%s296 + $0x68] sm:$0xff] %v7015
        %7080 = vst [vmem:[%s296 + $0x70] sm:$0xff] %v7016
        %7081 = vst [vmem:[%s296 + $0x78] sm:$0xff] %v7017
        %7082 = vst [vmem:[%s296 + $0x80] sm:$0xff] %v7018
        %7083 = vst [vmem:[%s296 + $0x88] sm:$0xff] %v7019
        %7084 = vst [vmem:[%s296 + $0x90] sm:$0xff] %v7020
        %7085 = vst [vmem:[%s296 + $0x98] sm:$0xff] %v7021
        %7086 = vst [vmem:[%s296 + $0xa0] sm:$0xff] %v7022
        %7087 = vst [vmem:[%s296 + $0xa8] sm:$0xff] %v7023
        %7088 = vst [vmem:[%s296 + $0xb0] sm:$0xff] %v7024
        %7089 = vst [vmem:[%s296 + $0xb8] sm:$0xff] %v7025
        %7090 = vst [vmem:[%s296 + $0xc0] sm:$0xff] %v7026
        %7091 = vst [vmem:[%s296 + $0xc8] sm:$0xff] %v7027
        %7092 = vst [vmem:[%s296 + $0xd0] sm:$0xff] %v7028
        %7093 = vst [vmem:[%s296 + $0xd8] sm:$0xff] %v7029
        %7094 = vst [vmem:[%s296 + $0xe0] sm:$0xff] %v7030
        %7095 = vst [vmem:[%s296 + $0xe8] sm:$0xff] %v7031
        %7096 = vst [vmem:[%s296 + $0xf0] sm:$0xff] %v7032
        %7097 = vst [vmem:[%s296 + $0xf8] sm:$0xff] %v7033
        %s7098 = sand.u32 %s184, 1
        %s7099 = scalar_lea.sflag [#allocation5], %s7098
        %s7100 = sand.u32 %s184, 1
        %s7101 = smul.addr %s7100, 256
        %s7102 = scalar_lea.vmem [#allocation6], %s7101
        // Predicated region
        $region53: #{tpu_custom_call.1} parent=47 // pred_check
          %p7103 = pneg %p194
        $region54: #{tpu_custom_call.1} parent=47 // pred_check_branch
          %7105 = sbr.rel (%p7103) target = $region56
        $region55: #{tpu_custom_call.1} parent=47 // pred_region
          %s7107 = ssub.s32 4096, 4096
          %7108 = vsyncadd %s7099, %s7107
          %s7109 = smul.addr %s24, 64
          %s7110 = smul.addr %s7109, 64
          %s7111 = scalar_lea.hbm %s7, %s7110
          %s7112 = sshll.u32 %s7102, 4
          %s7113 = int_to_ptr.vmem [resolvable:$true] %s7112
          %7118 = dma.vmem_to_hbm [thread:$0]  %s7113, 4096, %s7111, %s7099, 128, 128, 8
        $region56: #{tpu_custom_call.1} parent=47 // pred_fallthru
          _
      $region48: #{tpu_custom_call.1} parent=5 // pred_fallthru
        _
      %p7119 = scmp.le.s32.totalorder 2, %s19
      // Predicated region
      $region57: #{tpu_custom_call.1} parent=5 // pred_check
        %p7120 = pneg %p7119
      $region58: #{tpu_custom_call.1} parent=5 // pred_check_branch
        %7122 = sbr.rel (%p7120) target = $region60
      $region59: #{tpu_custom_call.1} parent=5 // pred_region
        %s7123 = ssub.s32 %s19, 2
        // Predicated region
        $region61: #{tpu_custom_call.1} parent=59 // pred_check
          %p7124 = pneg %p200
        $region62: #{tpu_custom_call.1} parent=59 // pred_check_branch
          %7126 = sbr.rel (%p7124) target = $region64
        $region63: #{tpu_custom_call.1} parent=59 // pred_region
          %s7127 = sand.u32 %s185, 1
          %s7128 = scalar_lea.sflag [#allocation5], %s7127
          %s7129 = sand.u32 %s185, 1
          %s7130 = smul.addr %s7129, 256
          %s7131 = scalar_lea.vmem [#allocation6], %s7130
          %7132 = dma.done %s7128, 4096
        $region64: #{tpu_custom_call.1} parent=59 // pred_fallthru
          _
      $region60: #{tpu_custom_call.1} parent=5 // pred_fallthru
        _
    $region6: #{tpu_custom_call.1} parent=1 // loop_footer
      %s23 = sadd.s32 1, %s19
    $region7: #{tpu_custom_call.1} parent=1 // loop_footer_branch
      %18 = sbr.rel target = $region3
    $region8: #{tpu_custom_call.1} parent=1 // loop_exit
      _
    %7133 = vsyncpa [#allocation4], 1
    %s7134 = scalar_lea.sflag [#allocation4], 1
    %7135 = vsyncpa %s7134, 1
    %7136 = vsyncpa [#allocation5], 1
    %s7137 = scalar_lea.sflag [#allocation5], 1
    %7138 = vsyncpa %s7137, 1

</llo_original>
